<compile_context>
chip_gen: v7x
topology: tpu7x:2x2x1
jax: 0.10.0
libtpu: 0.0.40
codegen_flags: <defaults>
</compile_context>

<pallas_src>
import jax
import jax.numpy as jnp
from jax import lax
from jax.experimental import pallas as pl
from jax.experimental.pallas import tpu as pltpu

# Model / problem sizes (small, consistent with the module's forward).
B, T, D_IN = 2, 8, 32          # batch, sequence length, input_size
H = 64                         # LSTM hidden size (fixed by the module)
H2, H4, H8 = 2 * H, 4 * H, 8 * H
OUT = 4                        # output_size (number of classes)


def _attention_classifier_kernel(
    x_ref,        # (T*B, 2*D_IN)  rows = [x[t,b] | x[T-1-t,b]]
    w_in_ref,     # (2*D_IN, 8H)   fused+reordered input weights (both directions)
    b_in_ref,     # (1, 8H)        fused+reordered biases (b_ih + b_hh, both directions)
    w_h_ref,      # (2H, 8H)       block-diagonal hidden weights (both directions)
    wattn_f_ref,  # (H, 2H)        attention weight rows for the forward half
    wattn_b_ref,  # (H, 2H)        attention weight rows for the backward half
    wcls_ref,     # (2H, OUT)
    bcls_ref,     # (1, OUT)
    out_ref,      # (B, OUT)
    # VMEM scratch
    xp_s,         # (T*B, 8H) precomputed input projections (fwd cols from t, bwd from T-1-t)
    outf,         # (T*B, H)  forward hidden states, time-major flat
    outb,         # (T*B, H)  backward hidden states, time-major flat (original time order)
):
    # --- fused input projection: one dense MXU matmul, bias added once ---
    xp_s[...] = jnp.dot(x_ref[...], w_in_ref[...],
                        preferred_element_type=jnp.float32) + b_in_ref[...]

    # --- fused fwd+bwd recurrence, fully unrolled; state stays in vregs ---
    # Lane layout of h_cat / c_cat: [fwd (0:H) | bwd (H:2H)]
    h_cat = jnp.zeros((B, H2), jnp.float32)
    c_cat = jnp.zeros((B, H2), jnp.float32)
    for t in range(T):
        xp_t = xp_s[t * B:(t + 1) * B, :]                               # (B, 8H)
        gates = xp_t + jnp.dot(h_cat, w_h_ref[...],
                               preferred_element_type=jnp.float32)      # (B, 8H)
        # gate columns: [i_f i_b | f_f f_b | o_f o_b | g_f g_b] -> 128-aligned slices
        sig = jax.nn.sigmoid(gates[:, 0:3 * H2])                        # i | f | o
        g_g = jnp.tanh(gates[:, 3 * H2:])                               # g
        i_g = sig[:, 0:H2]
        f_g = sig[:, H2:2 * H2]
        o_g = sig[:, 2 * H2:3 * H2]
        c_cat = f_g * c_cat + i_g * g_g
        h_cat = o_g * jnp.tanh(c_cat)
        # store fwd output at time t, bwd output at original time T-1-t
        outf[t * B:(t + 1) * B, :] = h_cat[:, :H]
        outb[(T - 1 - t) * B:(T - t) * B, :] = h_cat[:, H:]

    # final hidden state h_n concat [fwd_last | bwd_last] is exactly the last h_cat
    hidden = h_cat                                                      # (B, 2H)

    # --- attention layer (flat MXU matmuls, no concatenates) ---
    a_flat = (jnp.dot(outf[...], wattn_f_ref[...], preferred_element_type=jnp.float32)
              + jnp.dot(outb[...], wattn_b_ref[...], preferred_element_type=jnp.float32))
    # a_flat: (T*B, 2H), row r = attention-projected lstm_out[t=r//B, b=r%B]

    # scores with TIME on the lane axis: sc[b, r] = hidden[b] . a_flat[r]; only rows with
    # r % B == b are real (cross-batch entries are masked out before the softmax).
    sc = jnp.dot(hidden, a_flat.T, preferred_element_type=jnp.float32)  # (B, T*B)
    r_idx = lax.broadcasted_iota(jnp.int32, (B, T * B), 0)
    c_idx = lax.broadcasted_iota(jnp.int32, (B, T * B), 1)
    c_batch = jnp.bitwise_and(c_idx, B - 1) if (B & (B - 1)) == 0 else c_idx % B
    valid = c_batch == r_idx
    sc = jnp.where(valid, sc, jnp.float32(-1e30))
    sc = sc - jnp.max(sc, axis=-1, keepdims=True)
    e = jnp.exp(sc)                                                     # masked entries -> 0
    attn = e / jnp.sum(e, axis=-1, keepdims=True)                       # softmax over time
    ctx = jnp.dot(attn, a_flat, preferred_element_type=jnp.float32)     # (B, 2H)

    # dropout(p=0.6) is identity at inference time
    logits = jnp.dot(ctx, wcls_ref[...],
                     preferred_element_type=jnp.float32) + bcls_ref[...]
    out_ref[...] = logits.astype(out_ref.dtype)


# ------------------------- wrapper-side weight packing -------------------------

def _pack_bidir_weights(wf, wb):
    """wf: (R1, 4H), wb: (R2, 4H), both with PyTorch gate order [i, f, g, o].

    Returns a block-diagonal (R1 + R2, 8H) matrix with column layout
    [i_f i_b | f_f f_b | o_f o_b | g_f g_b] so a single matmul against
    [fwd_operand | bwd_operand] produces both directions' gates, 128-lane aligned.
    """
    r1, r2 = wf.shape[0], wb.shape[0]
    zf = jnp.zeros((r1, H), jnp.float32)
    zb = jnp.zeros((r2, H), jnp.float32)
    blocks = []
    for k in (0, 1, 3, 2):                      # i, f, o, g
        top = jnp.concatenate([wf[:, k * H:(k + 1) * H], zf], axis=1)
        bot = jnp.concatenate([zb, wb[:, k * H:(k + 1) * H]], axis=1)
        blocks.append(jnp.concatenate([top, bot], axis=0))
    return jnp.concatenate(blocks, axis=1)      # (R1+R2, 8H)


def _pack_bidir_bias(bf, bb):
    """bf, bb: (1, 4H) in [i, f, g, o] order -> (1, 8H) in the re-ordered layout."""
    parts = []
    for k in (0, 1, 3, 2):                      # i, f, o, g
        parts.append(bf[:, k * H:(k + 1) * H])
        parts.append(bb[:, k * H:(k + 1) * H])
    return jnp.concatenate(parts, axis=1)


def attention_classifier_forward(x, params):
    """x: (B, T, D_IN) batch-first, like the PyTorch module."""
    x = x.astype(jnp.float32)
    x_tm = jnp.transpose(x, (1, 0, 2))                          # (T, B, D_IN)
    # schedule-aligned input: row (t, b) = [x[t, b] | x[T-1-t, b]]
    x_sched = jnp.concatenate([x_tm, x_tm[::-1]], axis=-1)      # (T, B, 2*D_IN)
    x_flat = x_sched.reshape(T * B, 2 * D_IN)

    # NOTE: weight packing is cheap XLA work; in a real model it would be done once.
    w_in = _pack_bidir_weights(params["wif"], params["wib"])    # (2*D_IN, 8H)
    b_in = _pack_bidir_bias(params["bf"], params["bb"])         # (1, 8H)
    w_h = _pack_bidir_weights(params["whf"], params["whb"])     # (2H, 8H) block-diagonal
    wattn_f = params["wattn"][:H, :]                            # (H, 2H)
    wattn_b = params["wattn"][H:, :]                            # (H, 2H)

    vmem = pl.BlockSpec(memory_space=pltpu.MemorySpace.VMEM)
    out = pl.pallas_call(
        _attention_classifier_kernel,
        out_shape=jax.ShapeDtypeStruct((B, OUT), jnp.float32),
        in_specs=[vmem] * 8,
        out_specs=vmem,
        scratch_shapes=[
            pltpu.VMEM((T * B, H8), jnp.float32),   # xp_s
            pltpu.VMEM((T * B, H), jnp.float32),    # outf
            pltpu.VMEM((T * B, H), jnp.float32),    # outb
        ],
    )(x_flat, w_in, b_in, w_h, wattn_f, wattn_b, params["wcls"], params["bcls"])

    # torch's .squeeze(1): only squeezes when output_size == 1
    return out[:, 0] if OUT == 1 else out


# ------------------------------ params & reference ------------------------------

def init_params(key):
    ks = jax.random.split(key, 10)
    k_lstm = 1.0 / jnp.sqrt(jnp.float32(H))
    k_lin = 1.0 / jnp.sqrt(jnp.float32(H2))

    def u(k, shape, bound):
        return jax.random.uniform(k, shape, jnp.float32, -bound, bound)

    return {
        # LSTM weights stored transposed: (in_features, 4H); combined bias = b_ih + b_hh
        "wif": u(ks[0], (D_IN, H4), k_lstm),
        "whf": u(ks[1], (H, H4), k_lstm),
        "bf":  u(ks[2], (1, H4), k_lstm) + u(ks[3], (1, H4), k_lstm),
        "wib": u(ks[4], (D_IN, H4), k_lstm),
        "whb": u(ks[5], (H, H4), k_lstm),
        "bb":  u(ks[6], (1, H4), k_lstm) + u(ks[7], (1, H4), k_lstm),
        # attention Linear(2H, 2H, bias=False), stored transposed (in, out)
        "wattn": u(ks[8], (H2, H2), k_lin),
        # classifier Linear(2H, OUT), stored transposed (in, out)
        "wcls": u(ks[9], (H2, OUT), k_lin),
        "bcls": jnp.zeros((1, OUT), jnp.float32),
    }


def reference_forward(x, p):
    """Pure-JAX reference mirroring the PyTorch forward (for a sanity check)."""
    def run_dir(xs, wih, whh, b):
        h = jnp.zeros((B, H), jnp.float32)
        c = jnp.zeros((B, H), jnp.float32)
        outs = []
        for t in range(T):
            gates = xs[:, t, :] @ wih + h @ whh + b
            i = jax.nn.sigmoid(gates[:, :H])
            f = jax.nn.sigmoid(gates[:, H:2 * H])
            g = jnp.tanh(gates[:, 2 * H:3 * H])
            o = jax.nn.sigmoid(gates[:, 3 * H:])
            c = f * c + i * g
            h = o * jnp.tanh(c)
            outs.append(h)
        return jnp.stack(outs, axis=1), h

    of, hf_last = run_dir(x, p["wif"], p["whf"], p["bf"])
    ob_rev, hb_last = run_dir(x[:, ::-1, :], p["wib"], p["whb"], p["bb"])
    ob = ob_rev[:, ::-1, :]
    lstm_out = jnp.concatenate([of, ob], axis=-1)                 # (B, T, 2H)
    hidden = jnp.concatenate([hf_last, hb_last], axis=-1)         # (B, 2H)
    a = lstm_out @ p["wattn"]                                     # (B, T, 2H)
    scores = jnp.einsum("btd,bd->bt", a, hidden)
    attn = jax.nn.softmax(scores, axis=1)
    ctx = jnp.einsum("btd,bt->bd", a, attn)
    logits = ctx @ p["wcls"] + p["bcls"]
    return logits[:, 0] if OUT == 1 else logits


if __name__ == "__main__":
    key = jax.random.PRNGKey(0)
    kx, kp = jax.random.split(key)
    x = jax.random.normal(kx, (B, T, D_IN), jnp.float32)
    params = init_params(kp)

    y = attention_classifier_forward(x, params)
    y = jax.block_until_ready(y)

    y_ref = jax.block_until_ready(reference_forward(x, params))
    assert y.shape == y_ref.shape, (y.shape, y_ref.shape)
    assert jnp.allclose(y, y_ref, atol=2e-3, rtol=2e-3), (y, y_ref)

    print("KERNEL_OK")
</pallas_src>

<mosaic_0001>
module attributes {stable_mosaic.version = 11 : i64} {
  func.func @_attention_classifier_kernel(%arg0: memref<16x64xf32, #tpu.memory_space<vmem>>, %arg1: memref<64x512xf32, #tpu.memory_space<vmem>>, %arg2: memref<1x512xf32, #tpu.memory_space<vmem>>, %arg3: memref<128x512xf32, #tpu.memory_space<vmem>>, %arg4: memref<64x128xf32, #tpu.memory_space<vmem>>, %arg5: memref<64x128xf32, #tpu.memory_space<vmem>>, %arg6: memref<128x4xf32, #tpu.memory_space<vmem>>, %arg7: memref<1x4xf32, #tpu.memory_space<vmem>>, %arg8: memref<2x4xf32, #tpu.memory_space<vmem>>, %arg9: memref<16x512xf32, #tpu.memory_space<vmem>>, %arg10: memref<16x64xf32, #tpu.memory_space<vmem>>, %arg11: memref<16x64xf32, #tpu.memory_space<vmem>>) attributes {dimension_semantics = [], scalar_prefetch = 0 : i64, scratch_operands = 3 : i64, tpu.core_type = #tpu.core_type<tc>} {
    %c0 = arith.constant 0 : index
    %c0_0 = arith.constant 0 : index
    %0 = vector.load %arg0[%c0, %c0_0] : memref<16x64xf32, #tpu.memory_space<vmem>>, vector<16x64xf32>
    %c0_1 = arith.constant 0 : index
    %c0_2 = arith.constant 0 : index
    %1 = vector.load %arg1[%c0_1, %c0_2] : memref<64x512xf32, #tpu.memory_space<vmem>>, vector<64x512xf32>
    %cst = arith.constant dense<0.000000e+00> : vector<16x512xf32>
    %2 = tpu.matmul %0, %1, %cst {dimension_numbers = #tpu.dot_dimension_numbers<[1], [0], [0], [1], [0, 0, 1, 1], [], []>} : vector<16x64xf32>, vector<64x512xf32>, vector<16x512xf32> -> vector<16x512xf32>
    %c0_3 = arith.constant 0 : index
    %c0_4 = arith.constant 0 : index
    %3 = vector.load %arg2[%c0_3, %c0_4] : memref<1x512xf32, #tpu.memory_space<vmem>>, vector<1x512xf32>
    %4 = vector.broadcast %3 : vector<1x512xf32> to vector<16x512xf32>
    %5 = arith.addf %2, %4 : vector<16x512xf32>
    %c0_5 = arith.constant 0 : index
    %c0_6 = arith.constant 0 : index
    %6 = vector.load %arg9[%c0_5, %c0_6] : memref<16x512xf32, #tpu.memory_space<vmem>>, vector<16x512xf32>
    tpu.vector_store %arg9[%c0_5, %c0_6], %5 {strides = array<i32>} : memref<16x512xf32, #tpu.memory_space<vmem>>, vector<16x512xf32>,
    %cst_7 = arith.constant 0.000000e+00 : f32
    %7 = vector.broadcast %cst_7 : f32 to vector<2x128xf32>
    %cst_8 = arith.constant 0.000000e+00 : f32
    %8 = vector.broadcast %cst_8 : f32 to vector<2x128xf32>
    %c0_9 = arith.constant 0 : index
    %c0_10 = arith.constant 0 : index
    %9 = vector.load %arg9[%c0_9, %c0_10] : memref<16x512xf32, #tpu.memory_space<vmem>>, vector<2x512xf32>
    %c0_11 = arith.constant 0 : index
    %c0_12 = arith.constant 0 : index
    %10 = vector.load %arg3[%c0_11, %c0_12] : memref<128x512xf32, #tpu.memory_space<vmem>>, vector<128x512xf32>
    %cst_13 = arith.constant dense<0.000000e+00> : vector<2x512xf32>
    %11 = tpu.matmul %7, %10, %cst_13 {dimension_numbers = #tpu.dot_dimension_numbers<[1], [0], [0], [1], [0, 0, 1, 1], [], []>} : vector<2x128xf32>, vector<128x512xf32>, vector<2x512xf32> -> vector<2x512xf32>
    %12 = arith.addf %9, %11 : vector<2x512xf32>
    %13 = vector.extract_strided_slice %12 {offsets = [0, 0], sizes = [2, 384], strides = [1, 1]} : vector<2x512xf32> to vector<2x384xf32>
    %14 = arith.negf %13 : vector<2x384xf32>
    %15 = math.exp %14 : vector<2x384xf32>
    %cst_14 = arith.constant 1.000000e+00 : f32
    %16 = vector.broadcast %cst_14 : f32 to vector<2x384xf32>
    %17 = arith.addf %16, %15 : vector<2x384xf32>
    %18 = arith.divf %16, %17 : vector<2x384xf32>
    %19 = vector.extract_strided_slice %12 {offsets = [0, 384], sizes = [2, 128], strides = [1, 1]} : vector<2x512xf32> to vector<2x128xf32>
    %20 = math.tanh %19 : vector<2x128xf32>
    %21 = vector.extract_strided_slice %18 {offsets = [0, 0], sizes = [2, 128], strides = [1, 1]} : vector<2x384xf32> to vector<2x128xf32>
    %22 = vector.extract_strided_slice %18 {offsets = [0, 128], sizes = [2, 128], strides = [1, 1]} : vector<2x384xf32> to vector<2x128xf32>
    %23 = vector.extract_strided_slice %18 {offsets = [0, 256], sizes = [2, 128], strides = [1, 1]} : vector<2x384xf32> to vector<2x128xf32>
    %24 = arith.mulf %22, %8 : vector<2x128xf32>
    %25 = arith.mulf %21, %20 : vector<2x128xf32>
    %26 = arith.addf %24, %25 : vector<2x128xf32>
    %27 = math.tanh %26 : vector<2x128xf32>
    %28 = arith.mulf %23, %27 : vector<2x128xf32>
    %29 = vector.extract_strided_slice %28 {offsets = [0, 0], sizes = [2, 64], strides = [1, 1]} : vector<2x128xf32> to vector<2x64xf32>
    %c0_15 = arith.constant 0 : index
    %c0_16 = arith.constant 0 : index
    %30 = vector.load %arg10[%c0_15, %c0_16] : memref<16x64xf32, #tpu.memory_space<vmem>>, vector<2x64xf32>
    tpu.vector_store %arg10[%c0_15, %c0_16], %29 {strides = array<i32>} : memref<16x64xf32, #tpu.memory_space<vmem>>, vector<2x64xf32>,
    %31 = vector.extract_strided_slice %28 {offsets = [0, 64], sizes = [2, 64], strides = [1, 1]} : vector<2x128xf32> to vector<2x64xf32>
    %c14 = arith.constant 14 : index
    %c0_17 = arith.constant 0 : index
    %32 = vector.load %arg11[%c14, %c0_17] : memref<16x64xf32, #tpu.memory_space<vmem>>, vector<2x64xf32>
    tpu.vector_store %arg11[%c14, %c0_17], %31 {strides = array<i32>} : memref<16x64xf32, #tpu.memory_space<vmem>>, vector<2x64xf32>,
    %c2 = arith.constant 2 : index
    %c0_18 = arith.constant 0 : index
    %33 = vector.load %arg9[%c2, %c0_18] : memref<16x512xf32, #tpu.memory_space<vmem>>, vector<2x512xf32>
    %c0_19 = arith.constant 0 : index
    %c0_20 = arith.constant 0 : index
    %34 = vector.load %arg3[%c0_19, %c0_20] : memref<128x512xf32, #tpu.memory_space<vmem>>, vector<128x512xf32>
    %cst_21 = arith.constant dense<0.000000e+00> : vector<2x512xf32>
    %35 = tpu.matmul %28, %34, %cst_21 {dimension_numbers = #tpu.dot_dimension_numbers<[1], [0], [0], [1], [0, 0, 1, 1], [], []>} : vector<2x128xf32>, vector<128x512xf32>, vector<2x512xf32> -> vector<2x512xf32>
    %36 = arith.addf %33, %35 : vector<2x512xf32>
    %37 = vector.extract_strided_slice %36 {offsets = [0, 0], sizes = [2, 384], strides = [1, 1]} : vector<2x512xf32> to vector<2x384xf32>
    %38 = arith.negf %37 : vector<2x384xf32>
    %39 = math.exp %38 : vector<2x384xf32>
    %cst_22 = arith.constant 1.000000e+00 : f32
    %40 = vector.broadcast %cst_22 : f32 to vector<2x384xf32>
    %41 = arith.addf %40, %39 : vector<2x384xf32>
    %42 = arith.divf %40, %41 : vector<2x384xf32>
    %43 = vector.extract_strided_slice %36 {offsets = [0, 384], sizes = [2, 128], strides = [1, 1]} : vector<2x512xf32> to vector<2x128xf32>
    %44 = math.tanh %43 : vector<2x128xf32>
    %45 = vector.extract_strided_slice %42 {offsets = [0, 0], sizes = [2, 128], strides = [1, 1]} : vector<2x384xf32> to vector<2x128xf32>
    %46 = vector.extract_strided_slice %42 {offsets = [0, 128], sizes = [2, 128], strides = [1, 1]} : vector<2x384xf32> to vector<2x128xf32>
    %47 = vector.extract_strided_slice %42 {offsets = [0, 256], sizes = [2, 128], strides = [1, 1]} : vector<2x384xf32> to vector<2x128xf32>
    %48 = arith.mulf %46, %26 : vector<2x128xf32>
    %49 = arith.mulf %45, %44 : vector<2x128xf32>
    %50 = arith.addf %48, %49 : vector<2x128xf32>
    %51 = math.tanh %50 : vector<2x128xf32>
    %52 = arith.mulf %47, %51 : vector<2x128xf32>
    %53 = vector.extract_strided_slice %52 {offsets = [0, 0], sizes = [2, 64], strides = [1, 1]} : vector<2x128xf32> to vector<2x64xf32>
    %c2_23 = arith.constant 2 : index
    %c0_24 = arith.constant 0 : index
    %54 = vector.load %arg10[%c2_23, %c0_24] : memref<16x64xf32, #tpu.memory_space<vmem>>, vector<2x64xf32>
    tpu.vector_store %arg10[%c2_23, %c0_24], %53 {strides = array<i32>} : memref<16x64xf32, #tpu.memory_space<vmem>>, vector<2x64xf32>,
    %55 = vector.extract_strided_slice %52 {offsets = [0, 64], sizes = [2, 64], strides = [1, 1]} : vector<2x128xf32> to vector<2x64xf32>
    %c12 = arith.constant 12 : index
    %c0_25 = arith.constant 0 : index
    %56 = vector.load %arg11[%c12, %c0_25] : memref<16x64xf32, #tpu.memory_space<vmem>>, vector<2x64xf32>
    tpu.vector_store %arg11[%c12, %c0_25], %55 {strides = array<i32>} : memref<16x64xf32, #tpu.memory_space<vmem>>, vector<2x64xf32>,
    %c4 = arith.constant 4 : index
    %c0_26 = arith.constant 0 : index
    %57 = vector.load %arg9[%c4, %c0_26] : memref<16x512xf32, #tpu.memory_space<vmem>>, vector<2x512xf32>
    %c0_27 = arith.constant 0 : index
    %c0_28 = arith.constant 0 : index
    %58 = vector.load %arg3[%c0_27, %c0_28] : memref<128x512xf32, #tpu.memory_space<vmem>>, vector<128x512xf32>
    %cst_29 = arith.constant dense<0.000000e+00> : vector<2x512xf32>
    %59 = tpu.matmul %52, %58, %cst_29 {dimension_numbers = #tpu.dot_dimension_numbers<[1], [0], [0], [1], [0, 0, 1, 1], [], []>} : vector<2x128xf32>, vector<128x512xf32>, vector<2x512xf32> -> vector<2x512xf32>
    %60 = arith.addf %57, %59 : vector<2x512xf32>
    %61 = vector.extract_strided_slice %60 {offsets = [0, 0], sizes = [2, 384], strides = [1, 1]} : vector<2x512xf32> to vector<2x384xf32>
    %62 = arith.negf %61 : vector<2x384xf32>
    %63 = math.exp %62 : vector<2x384xf32>
    %cst_30 = arith.constant 1.000000e+00 : f32
    %64 = vector.broadcast %cst_30 : f32 to vector<2x384xf32>
    %65 = arith.addf %64, %63 : vector<2x384xf32>
    %66 = arith.divf %64, %65 : vector<2x384xf32>
    %67 = vector.extract_strided_slice %60 {offsets = [0, 384], sizes = [2, 128], strides = [1, 1]} : vector<2x512xf32> to vector<2x128xf32>
    %68 = math.tanh %67 : vector<2x128xf32>
    %69 = vector.extract_strided_slice %66 {offsets = [0, 0], sizes = [2, 128], strides = [1, 1]} : vector<2x384xf32> to vector<2x128xf32>
    %70 = vector.extract_strided_slice %66 {offsets = [0, 128], sizes = [2, 128], strides = [1, 1]} : vector<2x384xf32> to vector<2x128xf32>
    %71 = vector.extract_strided_slice %66 {offsets = [0, 256], sizes = [2, 128], strides = [1, 1]} : vector<2x384xf32> to vector<2x128xf32>
    %72 = arith.mulf %70, %50 : vector<2x128xf32>
    %73 = arith.mulf %69, %68 : vector<2x128xf32>
    %74 = arith.addf %72, %73 : vector<2x128xf32>
    %75 = math.tanh %74 : vector<2x128xf32>
    %76 = arith.mulf %71, %75 : vector<2x128xf32>
    %77 = vector.extract_strided_slice %76 {offsets = [0, 0], sizes = [2, 64], strides = [1, 1]} : vector<2x128xf32> to vector<2x64xf32>
    %c4_31 = arith.constant 4 : index
    %c0_32 = arith.constant 0 : index
    %78 = vector.load %arg10[%c4_31, %c0_32] : memref<16x64xf32, #tpu.memory_space<vmem>>, vector<2x64xf32>
    tpu.vector_store %arg10[%c4_31, %c0_32], %77 {strides = array<i32>} : memref<16x64xf32, #tpu.memory_space<vmem>>, vector<2x64xf32>,
    %79 = vector.extract_strided_slice %76 {offsets = [0, 64], sizes = [2, 64], strides = [1, 1]} : vector<2x128xf32> to vector<2x64xf32>
    %c10 = arith.constant 10 : index
    %c0_33 = arith.constant 0 : index
    %80 = vector.load %arg11[%c10, %c0_33] : memref<16x64xf32, #tpu.memory_space<vmem>>, vector<2x64xf32>
    tpu.vector_store %arg11[%c10, %c0_33], %79 {strides = array<i32>} : memref<16x64xf32, #tpu.memory_space<vmem>>, vector<2x64xf32>,
    %c6 = arith.constant 6 : index
    %c0_34 = arith.constant 0 : index
    %81 = vector.load %arg9[%c6, %c0_34] : memref<16x512xf32, #tpu.memory_space<vmem>>, vector<2x512xf32>
    %c0_35 = arith.constant 0 : index
    %c0_36 = arith.constant 0 : index
    %82 = vector.load %arg3[%c0_35, %c0_36] : memref<128x512xf32, #tpu.memory_space<vmem>>, vector<128x512xf32>
    %cst_37 = arith.constant dense<0.000000e+00> : vector<2x512xf32>
    %83 = tpu.matmul %76, %82, %cst_37 {dimension_numbers = #tpu.dot_dimension_numbers<[1], [0], [0], [1], [0, 0, 1, 1], [], []>} : vector<2x128xf32>, vector<128x512xf32>, vector<2x512xf32> -> vector<2x512xf32>
    %84 = arith.addf %81, %83 : vector<2x512xf32>
    %85 = vector.extract_strided_slice %84 {offsets = [0, 0], sizes = [2, 384], strides = [1, 1]} : vector<2x512xf32> to vector<2x384xf32>
    %86 = arith.negf %85 : vector<2x384xf32>
    %87 = math.exp %86 : vector<2x384xf32>
    %cst_38 = arith.constant 1.000000e+00 : f32
    %88 = vector.broadcast %cst_38 : f32 to vector<2x384xf32>
    %89 = arith.addf %88, %87 : vector<2x384xf32>
    %90 = arith.divf %88, %89 : vector<2x384xf32>
    %91 = vector.extract_strided_slice %84 {offsets = [0, 384], sizes = [2, 128], strides = [1, 1]} : vector<2x512xf32> to vector<2x128xf32>
    %92 = math.tanh %91 : vector<2x128xf32>
    %93 = vector.extract_strided_slice %90 {offsets = [0, 0], sizes = [2, 128], strides = [1, 1]} : vector<2x384xf32> to vector<2x128xf32>
    %94 = vector.extract_strided_slice %90 {offsets = [0, 128], sizes = [2, 128], strides = [1, 1]} : vector<2x384xf32> to vector<2x128xf32>
    %95 = vector.extract_strided_slice %90 {offsets = [0, 256], sizes = [2, 128], strides = [1, 1]} : vector<2x384xf32> to vector<2x128xf32>
    %96 = arith.mulf %94, %74 : vector<2x128xf32>
    %97 = arith.mulf %93, %92 : vector<2x128xf32>
    %98 = arith.addf %96, %97 : vector<2x128xf32>
    %99 = math.tanh %98 : vector<2x128xf32>
    %100 = arith.mulf %95, %99 : vector<2x128xf32>
    %101 = vector.extract_strided_slice %100 {offsets = [0, 0], sizes = [2, 64], strides = [1, 1]} : vector<2x128xf32> to vector<2x64xf32>
    %c6_39 = arith.constant 6 : index
    %c0_40 = arith.constant 0 : index
    %102 = vector.load %arg10[%c6_39, %c0_40] : memref<16x64xf32, #tpu.memory_space<vmem>>, vector<2x64xf32>
    tpu.vector_store %arg10[%c6_39, %c0_40], %101 {strides = array<i32>} : memref<16x64xf32, #tpu.memory_space<vmem>>, vector<2x64xf32>,
    %103 = vector.extract_strided_slice %100 {offsets = [0, 64], sizes = [2, 64], strides = [1, 1]} : vector<2x128xf32> to vector<2x64xf32>
    %c8 = arith.constant 8 : index
    %c0_41 = arith.constant 0 : index
    %104 = vector.load %arg11[%c8, %c0_41] : memref<16x64xf32, #tpu.memory_space<vmem>>, vector<2x64xf32>
    tpu.vector_store %arg11[%c8, %c0_41], %103 {strides = array<i32>} : memref<16x64xf32, #tpu.memory_space<vmem>>, vector<2x64xf32>,
    %c8_42 = arith.constant 8 : index
    %c0_43 = arith.constant 0 : index
    %105 = vector.load %arg9[%c8_42, %c0_43] : memref<16x512xf32, #tpu.memory_space<vmem>>, vector<2x512xf32>
    %c0_44 = arith.constant 0 : index
    %c0_45 = arith.constant 0 : index
    %106 = vector.load %arg3[%c0_44, %c0_45] : memref<128x512xf32, #tpu.memory_space<vmem>>, vector<128x512xf32>
    %cst_46 = arith.constant dense<0.000000e+00> : vector<2x512xf32>
    %107 = tpu.matmul %100, %106, %cst_46 {dimension_numbers = #tpu.dot_dimension_numbers<[1], [0], [0], [1], [0, 0, 1, 1], [], []>} : vector<2x128xf32>, vector<128x512xf32>, vector<2x512xf32> -> vector<2x512xf32>
    %108 = arith.addf %105, %107 : vector<2x512xf32>
    %109 = vector.extract_strided_slice %108 {offsets = [0, 0], sizes = [2, 384], strides = [1, 1]} : vector<2x512xf32> to vector<2x384xf32>
    %110 = arith.negf %109 : vector<2x384xf32>
    %111 = math.exp %110 : vector<2x384xf32>
    %cst_47 = arith.constant 1.000000e+00 : f32
    %112 = vector.broadcast %cst_47 : f32 to vector<2x384xf32>
    %113 = arith.addf %112, %111 : vector<2x384xf32>
    %114 = arith.divf %112, %113 : vector<2x384xf32>
    %115 = vector.extract_strided_slice %108 {offsets = [0, 384], sizes = [2, 128], strides = [1, 1]} : vector<2x512xf32> to vector<2x128xf32>
    %116 = math.tanh %115 : vector<2x128xf32>
    %117 = vector.extract_strided_slice %114 {offsets = [0, 0], sizes = [2, 128], strides = [1, 1]} : vector<2x384xf32> to vector<2x128xf32>
    %118 = vector.extract_strided_slice %114 {offsets = [0, 128], sizes = [2, 128], strides = [1, 1]} : vector<2x384xf32> to vector<2x128xf32>
    %119 = vector.extract_strided_slice %114 {offsets = [0, 256], sizes = [2, 128], strides = [1, 1]} : vector<2x384xf32> to vector<2x128xf32>
    %120 = arith.mulf %118, %98 : vector<2x128xf32>
    %121 = arith.mulf %117, %116 : vector<2x128xf32>
    %122 = arith.addf %120, %121 : vector<2x128xf32>
    %123 = math.tanh %122 : vector<2x128xf32>
    %124 = arith.mulf %119, %123 : vector<2x128xf32>
    %125 = vector.extract_strided_slice %124 {offsets = [0, 0], sizes = [2, 64], strides = [1, 1]} : vector<2x128xf32> to vector<2x64xf32>
    %c8_48 = arith.constant 8 : index
    %c0_49 = arith.constant 0 : index
    %126 = vector.load %arg10[%c8_48, %c0_49] : memref<16x64xf32, #tpu.memory_space<vmem>>, vector<2x64xf32>
    tpu.vector_store %arg10[%c8_48, %c0_49], %125 {strides = array<i32>} : memref<16x64xf32, #tpu.memory_space<vmem>>, vector<2x64xf32>,
    %127 = vector.extract_strided_slice %124 {offsets = [0, 64], sizes = [2, 64], strides = [1, 1]} : vector<2x128xf32> to vector<2x64xf32>
    %c6_50 = arith.constant 6 : index
    %c0_51 = arith.constant 0 : index
    %128 = vector.load %arg11[%c6_50, %c0_51] : memref<16x64xf32, #tpu.memory_space<vmem>>, vector<2x64xf32>
    tpu.vector_store %arg11[%c6_50, %c0_51], %127 {strides = array<i32>} : memref<16x64xf32, #tpu.memory_space<vmem>>, vector<2x64xf32>,
    %c10_52 = arith.constant 10 : index
    %c0_53 = arith.constant 0 : index
    %129 = vector.load %arg9[%c10_52, %c0_53] : memref<16x512xf32, #tpu.memory_space<vmem>>, vector<2x512xf32>
    %c0_54 = arith.constant 0 : index
    %c0_55 = arith.constant 0 : index
    %130 = vector.load %arg3[%c0_54, %c0_55] : memref<128x512xf32, #tpu.memory_space<vmem>>, vector<128x512xf32>
    %cst_56 = arith.constant dense<0.000000e+00> : vector<2x512xf32>
    %131 = tpu.matmul %124, %130, %cst_56 {dimension_numbers = #tpu.dot_dimension_numbers<[1], [0], [0], [1], [0, 0, 1, 1], [], []>} : vector<2x128xf32>, vector<128x512xf32>, vector<2x512xf32> -> vector<2x512xf32>
    %132 = arith.addf %129, %131 : vector<2x512xf32>
    %133 = vector.extract_strided_slice %132 {offsets = [0, 0], sizes = [2, 384], strides = [1, 1]} : vector<2x512xf32> to vector<2x384xf32>
    %134 = arith.negf %133 : vector<2x384xf32>
    %135 = math.exp %134 : vector<2x384xf32>
    %cst_57 = arith.constant 1.000000e+00 : f32
    %136 = vector.broadcast %cst_57 : f32 to vector<2x384xf32>
    %137 = arith.addf %136, %135 : vector<2x384xf32>
    %138 = arith.divf %136, %137 : vector<2x384xf32>
    %139 = vector.extract_strided_slice %132 {offsets = [0, 384], sizes = [2, 128], strides = [1, 1]} : vector<2x512xf32> to vector<2x128xf32>
    %140 = math.tanh %139 : vector<2x128xf32>
    %141 = vector.extract_strided_slice %138 {offsets = [0, 0], sizes = [2, 128], strides = [1, 1]} : vector<2x384xf32> to vector<2x128xf32>
    %142 = vector.extract_strided_slice %138 {offsets = [0, 128], sizes = [2, 128], strides = [1, 1]} : vector<2x384xf32> to vector<2x128xf32>
    %143 = vector.extract_strided_slice %138 {offsets = [0, 256], sizes = [2, 128], strides = [1, 1]} : vector<2x384xf32> to vector<2x128xf32>
    %144 = arith.mulf %142, %122 : vector<2x128xf32>
    %145 = arith.mulf %141, %140 : vector<2x128xf32>
    %146 = arith.addf %144, %145 : vector<2x128xf32>
    %147 = math.tanh %146 : vector<2x128xf32>
    %148 = arith.mulf %143, %147 : vector<2x128xf32>
    %149 = vector.extract_strided_slice %148 {offsets = [0, 0], sizes = [2, 64], strides = [1, 1]} : vector<2x128xf32> to vector<2x64xf32>
    %c10_58 = arith.constant 10 : index
    %c0_59 = arith.constant 0 : index
    %150 = vector.load %arg10[%c10_58, %c0_59] : memref<16x64xf32, #tpu.memory_space<vmem>>, vector<2x64xf32>
    tpu.vector_store %arg10[%c10_58, %c0_59], %149 {strides = array<i32>} : memref<16x64xf32, #tpu.memory_space<vmem>>, vector<2x64xf32>,
    %151 = vector.extract_strided_slice %148 {offsets = [0, 64], sizes = [2, 64], strides = [1, 1]} : vector<2x128xf32> to vector<2x64xf32>
    %c4_60 = arith.constant 4 : index
    %c0_61 = arith.constant 0 : index
    %152 = vector.load %arg11[%c4_60, %c0_61] : memref<16x64xf32, #tpu.memory_space<vmem>>, vector<2x64xf32>
    tpu.vector_store %arg11[%c4_60, %c0_61], %151 {strides = array<i32>} : memref<16x64xf32, #tpu.memory_space<vmem>>, vector<2x64xf32>,
    %c12_62 = arith.constant 12 : index
    %c0_63 = arith.constant 0 : index
    %153 = vector.load %arg9[%c12_62, %c0_63] : memref<16x512xf32, #tpu.memory_space<vmem>>, vector<2x512xf32>
    %c0_64 = arith.constant 0 : index
    %c0_65 = arith.constant 0 : index
    %154 = vector.load %arg3[%c0_64, %c0_65] : memref<128x512xf32, #tpu.memory_space<vmem>>, vector<128x512xf32>
    %cst_66 = arith.constant dense<0.000000e+00> : vector<2x512xf32>
    %155 = tpu.matmul %148, %154, %cst_66 {dimension_numbers = #tpu.dot_dimension_numbers<[1], [0], [0], [1], [0, 0, 1, 1], [], []>} : vector<2x128xf32>, vector<128x512xf32>, vector<2x512xf32> -> vector<2x512xf32>
    %156 = arith.addf %153, %155 : vector<2x512xf32>
    %157 = vector.extract_strided_slice %156 {offsets = [0, 0], sizes = [2, 384], strides = [1, 1]} : vector<2x512xf32> to vector<2x384xf32>
    %158 = arith.negf %157 : vector<2x384xf32>
    %159 = math.exp %158 : vector<2x384xf32>
    %cst_67 = arith.constant 1.000000e+00 : f32
    %160 = vector.broadcast %cst_67 : f32 to vector<2x384xf32>
    %161 = arith.addf %160, %159 : vector<2x384xf32>
    %162 = arith.divf %160, %161 : vector<2x384xf32>
    %163 = vector.extract_strided_slice %156 {offsets = [0, 384], sizes = [2, 128], strides = [1, 1]} : vector<2x512xf32> to vector<2x128xf32>
    %164 = math.tanh %163 : vector<2x128xf32>
    %165 = vector.extract_strided_slice %162 {offsets = [0, 0], sizes = [2, 128], strides = [1, 1]} : vector<2x384xf32> to vector<2x128xf32>
    %166 = vector.extract_strided_slice %162 {offsets = [0, 128], sizes = [2, 128], strides = [1, 1]} : vector<2x384xf32> to vector<2x128xf32>
    %167 = vector.extract_strided_slice %162 {offsets = [0, 256], sizes = [2, 128], strides = [1, 1]} : vector<2x384xf32> to vector<2x128xf32>
    %168 = arith.mulf %166, %146 : vector<2x128xf32>
    %169 = arith.mulf %165, %164 : vector<2x128xf32>
    %170 = arith.addf %168, %169 : vector<2x128xf32>
    %171 = math.tanh %170 : vector<2x128xf32>
    %172 = arith.mulf %167, %171 : vector<2x128xf32>
    %173 = vector.extract_strided_slice %172 {offsets = [0, 0], sizes = [2, 64], strides = [1, 1]} : vector<2x128xf32> to vector<2x64xf32>
    %c12_68 = arith.constant 12 : index
    %c0_69 = arith.constant 0 : index
    %174 = vector.load %arg10[%c12_68, %c0_69] : memref<16x64xf32, #tpu.memory_space<vmem>>, vector<2x64xf32>
    tpu.vector_store %arg10[%c12_68, %c0_69], %173 {strides = array<i32>} : memref<16x64xf32, #tpu.memory_space<vmem>>, vector<2x64xf32>,
    %175 = vector.extract_strided_slice %172 {offsets = [0, 64], sizes = [2, 64], strides = [1, 1]} : vector<2x128xf32> to vector<2x64xf32>
    %c2_70 = arith.constant 2 : index
    %c0_71 = arith.constant 0 : index
    %176 = vector.load %arg11[%c2_70, %c0_71] : memref<16x64xf32, #tpu.memory_space<vmem>>, vector<2x64xf32>
    tpu.vector_store %arg11[%c2_70, %c0_71], %175 {strides = array<i32>} : memref<16x64xf32, #tpu.memory_space<vmem>>, vector<2x64xf32>,
    %c14_72 = arith.constant 14 : index
    %c0_73 = arith.constant 0 : index
    %177 = vector.load %arg9[%c14_72, %c0_73] : memref<16x512xf32, #tpu.memory_space<vmem>>, vector<2x512xf32>
    %c0_74 = arith.constant 0 : index
    %c0_75 = arith.constant 0 : index
    %178 = vector.load %arg3[%c0_74, %c0_75] : memref<128x512xf32, #tpu.memory_space<vmem>>, vector<128x512xf32>
    %cst_76 = arith.constant dense<0.000000e+00> : vector<2x512xf32>
    %179 = tpu.matmul %172, %178, %cst_76 {dimension_numbers = #tpu.dot_dimension_numbers<[1], [0], [0], [1], [0, 0, 1, 1], [], []>} : vector<2x128xf32>, vector<128x512xf32>, vector<2x512xf32> -> vector<2x512xf32>
    %180 = arith.addf %177, %179 : vector<2x512xf32>
    %181 = vector.extract_strided_slice %180 {offsets = [0, 0], sizes = [2, 384], strides = [1, 1]} : vector<2x512xf32> to vector<2x384xf32>
    %182 = arith.negf %181 : vector<2x384xf32>
    %183 = math.exp %182 : vector<2x384xf32>
    %cst_77 = arith.constant 1.000000e+00 : f32
    %184 = vector.broadcast %cst_77 : f32 to vector<2x384xf32>
    %185 = arith.addf %184, %183 : vector<2x384xf32>
    %186 = arith.divf %184, %185 : vector<2x384xf32>
    %187 = vector.extract_strided_slice %180 {offsets = [0, 384], sizes = [2, 128], strides = [1, 1]} : vector<2x512xf32> to vector<2x128xf32>
    %188 = math.tanh %187 : vector<2x128xf32>
    %189 = vector.extract_strided_slice %186 {offsets = [0, 0], sizes = [2, 128], strides = [1, 1]} : vector<2x384xf32> to vector<2x128xf32>
    %190 = vector.extract_strided_slice %186 {offsets = [0, 128], sizes = [2, 128], strides = [1, 1]} : vector<2x384xf32> to vector<2x128xf32>
    %191 = vector.extract_strided_slice %186 {offsets = [0, 256], sizes = [2, 128], strides = [1, 1]} : vector<2x384xf32> to vector<2x128xf32>
    %192 = arith.mulf %190, %170 : vector<2x128xf32>
    %193 = arith.mulf %189, %188 : vector<2x128xf32>
    %194 = arith.addf %192, %193 : vector<2x128xf32>
    %195 = math.tanh %194 : vector<2x128xf32>
    %196 = arith.mulf %191, %195 : vector<2x128xf32>
    %197 = vector.extract_strided_slice %196 {offsets = [0, 0], sizes = [2, 64], strides = [1, 1]} : vector<2x128xf32> to vector<2x64xf32>
    %c14_78 = arith.constant 14 : index
    %c0_79 = arith.constant 0 : index
    %198 = vector.load %arg10[%c14_78, %c0_79] : memref<16x64xf32, #tpu.memory_space<vmem>>, vector<2x64xf32>
    tpu.vector_store %arg10[%c14_78, %c0_79], %197 {strides = array<i32>} : memref<16x64xf32, #tpu.memory_space<vmem>>, vector<2x64xf32>,
    %199 = vector.extract_strided_slice %196 {offsets = [0, 64], sizes = [2, 64], strides = [1, 1]} : vector<2x128xf32> to vector<2x64xf32>
    %c0_80 = arith.constant 0 : index
    %c0_81 = arith.constant 0 : index
    %200 = vector.load %arg11[%c0_80, %c0_81] : memref<16x64xf32, #tpu.memory_space<vmem>>, vector<2x64xf32>
    tpu.vector_store %arg11[%c0_80, %c0_81], %199 {strides = array<i32>} : memref<16x64xf32, #tpu.memory_space<vmem>>, vector<2x64xf32>,
    %c0_82 = arith.constant 0 : index
    %c0_83 = arith.constant 0 : index
    %201 = vector.load %arg10[%c0_82, %c0_83] : memref<16x64xf32, #tpu.memory_space<vmem>>, vector<16x64xf32>
    %c0_84 = arith.constant 0 : index
    %c0_85 = arith.constant 0 : index
    %202 = vector.load %arg4[%c0_84, %c0_85] : memref<64x128xf32, #tpu.memory_space<vmem>>, vector<64x128xf32>
    %cst_86 = arith.constant dense<0.000000e+00> : vector<16x128xf32>
    %203 = tpu.matmul %201, %202, %cst_86 {dimension_numbers = #tpu.dot_dimension_numbers<[1], [0], [0], [1], [0, 0, 1, 1], [], []>} : vector<16x64xf32>, vector<64x128xf32>, vector<16x128xf32> -> vector<16x128xf32>
    %c0_87 = arith.constant 0 : index
    %c0_88 = arith.constant 0 : index
    %204 = vector.load %arg11[%c0_87, %c0_88] : memref<16x64xf32, #tpu.memory_space<vmem>>, vector<16x64xf32>
    %c0_89 = arith.constant 0 : index
    %c0_90 = arith.constant 0 : index
    %205 = vector.load %arg5[%c0_89, %c0_90] : memref<64x128xf32, #tpu.memory_space<vmem>>, vector<64x128xf32>
    %cst_91 = arith.constant dense<0.000000e+00> : vector<16x128xf32>
    %206 = tpu.matmul %204, %205, %cst_91 {dimension_numbers = #tpu.dot_dimension_numbers<[1], [0], [0], [1], [0, 0, 1, 1], [], []>} : vector<16x64xf32>, vector<64x128xf32>, vector<16x128xf32> -> vector<16x128xf32>
    %207 = arith.addf %203, %206 : vector<16x128xf32>
    %208 = tpu.transpose %207, [1, 0] : vector<16x128xf32> -> vector<128x16xf32>
    %cst_92 = arith.constant dense<0.000000e+00> : vector<2x16xf32>
    %209 = tpu.matmul %196, %208, %cst_92 {dimension_numbers = #tpu.dot_dimension_numbers<[1], [0], [0], [1], [0, 0, 1, 1], [], []>} : vector<2x128xf32>, vector<128x16xf32>, vector<2x16xf32> -> vector<2x16xf32>
    %210 = tpu.iota {dimensions = array<i32: 0>} : vector<2x16xi32>
    %211 = tpu.iota {dimensions = array<i32: 1>} : vector<2x16xi32>
    %c1_i32 = arith.constant 1 : i32
    %212 = vector.broadcast %c1_i32 : i32 to vector<2x16xi32>
    %213 = arith.andi %211, %212 : vector<2x16xi32>
    %214 = arith.cmpi eq, %213, %210 : vector<2x16xi32>
    %cst_93 = arith.constant -1.000000e+30 : f32
    %215 = vector.broadcast %cst_93 : f32 to vector<2x16xf32>
    %216 = arith.select %214, %209, %215 : vector<2x16xi1>, vector<2x16xf32>
    %cst_94 = arith.constant dense<0xFF800000> : vector<2xf32>
    %217 = vector.multi_reduction <maximumf>, %216, %cst_94 [1] : vector<2x16xf32> to vector<2xf32>
    %218 = vector.shape_cast %217 : vector<2xf32> to vector<2x1xf32>
    %219 = vector.broadcast %218 : vector<2x1xf32> to vector<2x16xf32>
    %220 = arith.subf %216, %219 : vector<2x16xf32>
    %221 = math.exp %220 : vector<2x16xf32>
    %cst_95 = arith.constant dense<0.000000e+00> : vector<2xf32>
    %222 = vector.multi_reduction <add>, %221, %cst_95 [1] : vector<2x16xf32> to vector<2xf32>
    %223 = vector.shape_cast %222 : vector<2xf32> to vector<2x1xf32>
    %224 = vector.broadcast %223 : vector<2x1xf32> to vector<2x16xf32>
    %225 = arith.divf %221, %224 : vector<2x16xf32>
    %cst_96 = arith.constant dense<0.000000e+00> : vector<2x128xf32>
    %226 = tpu.matmul %225, %207, %cst_96 {dimension_numbers = #tpu.dot_dimension_numbers<[1], [0], [0], [1], [0, 0, 1, 1], [], []>} : vector<2x16xf32>, vector<16x128xf32>, vector<2x128xf32> -> vector<2x128xf32>
    %c0_97 = arith.constant 0 : index
    %c0_98 = arith.constant 0 : index
    %227 = vector.load %arg6[%c0_97, %c0_98] : memref<128x4xf32, #tpu.memory_space<vmem>>, vector<128x4xf32>
    %cst_99 = arith.constant dense<0.000000e+00> : vector<2x4xf32>
    %228 = tpu.matmul %226, %227, %cst_99 {dimension_numbers = #tpu.dot_dimension_numbers<[1], [0], [0], [1], [0, 0, 1, 1], [], []>} : vector<2x128xf32>, vector<128x4xf32>, vector<2x4xf32> -> vector<2x4xf32>
    %c0_100 = arith.constant 0 : index
    %c0_101 = arith.constant 0 : index
    %229 = vector.load %arg7[%c0_100, %c0_101] : memref<1x4xf32, #tpu.memory_space<vmem>>, vector<1x4xf32>
    %230 = vector.broadcast %229 : vector<1x4xf32> to vector<2x4xf32>
    %231 = arith.addf %228, %230 : vector<2x4xf32>
    %c0_102 = arith.constant 0 : index
    %c0_103 = arith.constant 0 : index
    %232 = vector.load %arg8[%c0_102, %c0_103] : memref<2x4xf32, #tpu.memory_space<vmem>>, vector<2x4xf32>
    tpu.vector_store %arg8[%c0_102, %c0_103], %231 {strides = array<i32>} : memref<2x4xf32, #tpu.memory_space<vmem>>, vector<2x4xf32>,
    return
  }
}

</mosaic_0001>

<llo_original>
// kernel: tpu_custom_call.1
$region0: #{tpu_custom_call.1}
  #allocation0 [shape = 'u32[]', space=smem, size = 0x4, offset = 0x4, fixed_abs, tag = 'smem constant byte address 0x4 - core index']
  #allocation1 [shape = 'u32[144,128]{1,0:T(1,128)}', space=vmem, size = 0x12000, scoped, tag = 'internal scratch']
  #allocation2 [shape = 'f32[16,512]{1,0:T(8,128)}', space=vmem, size = 0x8000, scoped, tag = 'scratch operand']
  #allocation3 [shape = 'f32[16,64]{1,0:T(8,128)}', space=vmem, size = 0x2000, scoped, tag = 'scratch operand']
  #allocation4 [shape = 'f32[16,64]{1,0:T(8,128)}', space=vmem, size = 0x2000, scoped, tag = 'scratch operand']
  %s0 = inlined_call_operand.hbm [shape: f32[16,64], index: 0, kind: input, shape index: {}]
  %s1 = inlined_call_operand.hbm [shape: f32[64,512], index: 1, kind: input, shape index: {}]
  %s2 = inlined_call_operand.vmem [shape: f32[1,512], index: 2, kind: input, shape index: {}]
  %s3 = inlined_call_operand.hbm [shape: f32[128,512], index: 3, kind: input, shape index: {}]
  %s4 = inlined_call_operand.vmem [shape: f32[64,128], index: 4, kind: input, shape index: {}]
  %s5 = inlined_call_operand.vmem [shape: f32[64,128], index: 5, kind: input, shape index: {}]
  %s6 = inlined_call_operand.vmem [shape: f32[128,4], index: 6, kind: input, shape index: {}]
  %s7 = inlined_call_operand.vmem [shape: f32[1,4], index: 7, kind: input, shape index: {}]
  %s8 = inlined_call_operand.hbm [shape: f32[2,4], index: 8, kind: output, shape index: {}]
  %s9 = sld [smem:[#allocation0]]
  $region54: #{tpu_custom_call.1} parent=0
    _
  %s11 = ssub.s32 1, %s9
  %s12 = scalar_select 0, %s11, %s9
  $region1: #{tpu_custom_call.1} parent=0
    #allocation5 [shape = 'u8[8192]{0}', space=vmem, size = 0x2000, scoped, tag = 'input window, operand 0, single buffered']
    #allocation6 [shape = 's32[1]{0}', space=sflag, size = 0x4, scoped, tag = 'scoped memory for tpu_custom_call.1']
    #allocation7 [shape = 's32[1]{0}', space=sflag, size = 0x4, scoped, tag = 'scoped memory for tpu_custom_call.1']
    #allocation8 [shape = 'u8[131072]{0}', space=vmem, size = 0x20000, scoped, tag = 'input window, operand 1, single buffered']
    #allocation9 [shape = 's32[1]{0}', space=sflag, size = 0x4, scoped, tag = 'scoped memory for tpu_custom_call.1']
    #allocation10 [shape = 'u8[262144]{0}', space=vmem, size = 0x40000, scoped, tag = 'input window, operand 3, single buffered']
    #allocation11 [shape = 'u8[1024]{0}', space=vmem, size = 0x400, scoped, tag = 'output window, operand 0, single buffered']
    %13 = vsyncpa [#allocation6], 0
    %14 = vsyncpa [#allocation9], 0
    %15 = vsyncpa [#allocation7], 0
    // Predicated region
    $region2: #{tpu_custom_call.1} parent=1 // pred_check
      _
    $region3: #{tpu_custom_call.1} parent=1 // pred_check_branch
      %17 = sbr.rel (0) target = $region5
    $region4: #{tpu_custom_call.1} parent=1 // pred_region
      %s19 = ssub.s32 256, 256
      %20 = vsyncadd [#allocation6], %s19
      %s21 = sshll.u32 [#allocation5], 4
      %s22 = int_to_ptr.vmem [resolvable:$true] %s21
      %27 = dma.hbm_to_vmem [thread:$0]  %s0, 256, %s22, [#allocation6], 128, 128, 8
    $region5: #{tpu_custom_call.1} parent=1 // pred_fallthru
      _
    // Predicated region
    $region6: #{tpu_custom_call.1} parent=1 // pred_check
      _
    $region7: #{tpu_custom_call.1} parent=1 // pred_check_branch
      %29 = sbr.rel (0) target = $region9
    $region8: #{tpu_custom_call.1} parent=1 // pred_region
      %s31 = ssub.s32 4096, 4096
      %32 = vsyncadd [#allocation9], %s31
      %s33 = sshll.u32 [#allocation8], 4
      %s34 = int_to_ptr.vmem [resolvable:$true] %s33
      %39 = dma.hbm_to_vmem [thread:$0]  %s1, 4096, %s34, [#allocation9], 512, 512, 32
    $region9: #{tpu_custom_call.1} parent=1 // pred_fallthru
      _
    // Predicated region
    $region10: #{tpu_custom_call.1} parent=1 // pred_check
      _
    $region11: #{tpu_custom_call.1} parent=1 // pred_check_branch
      %41 = sbr.rel (0) target = $region13
    $region12: #{tpu_custom_call.1} parent=1 // pred_region
      _
    $region13: #{tpu_custom_call.1} parent=1 // pred_fallthru
      _
    // Predicated region
    $region14: #{tpu_custom_call.1} parent=1 // pred_check
      _
    $region15: #{tpu_custom_call.1} parent=1 // pred_check_branch
      %43 = sbr.rel (0) target = $region17
    $region16: #{tpu_custom_call.1} parent=1 // pred_region
      %s45 = ssub.s32 8192, 8192
      %46 = vsyncadd [#allocation9], %s45
      %s47 = sshll.u32 [#allocation10], 4
      %s48 = int_to_ptr.vmem [resolvable:$true] %s47
      %53 = dma.hbm_to_vmem [thread:$0]  %s3, 8192, %s48, [#allocation9], 512, 512, 32
    $region17: #{tpu_custom_call.1} parent=1 // pred_fallthru
      _
    // Predicated region
    $region18: #{tpu_custom_call.1} parent=1 // pred_check
      _
    $region19: #{tpu_custom_call.1} parent=1 // pred_check_branch
      %55 = sbr.rel (0) target = $region21
    $region20: #{tpu_custom_call.1} parent=1 // pred_region
      _
    $region21: #{tpu_custom_call.1} parent=1 // pred_fallthru
      _
    // Predicated region
    $region22: #{tpu_custom_call.1} parent=1 // pred_check
      _
    $region23: #{tpu_custom_call.1} parent=1 // pred_check_branch
      %57 = sbr.rel (0) target = $region25
    $region24: #{tpu_custom_call.1} parent=1 // pred_region
      _
    $region25: #{tpu_custom_call.1} parent=1 // pred_fallthru
      _
    // Predicated region
    $region26: #{tpu_custom_call.1} parent=1 // pred_check
      _
    $region27: #{tpu_custom_call.1} parent=1 // pred_check_branch
      %59 = sbr.rel (0) target = $region29
    $region28: #{tpu_custom_call.1} parent=1 // pred_region
      _
    $region29: #{tpu_custom_call.1} parent=1 // pred_fallthru
      _
    // Predicated region
    $region30: #{tpu_custom_call.1} parent=1 // pred_check
      _
    $region31: #{tpu_custom_call.1} parent=1 // pred_check_branch
      %61 = sbr.rel (0) target = $region33
    $region32: #{tpu_custom_call.1} parent=1 // pred_region
      _
    $region33: #{tpu_custom_call.1} parent=1 // pred_fallthru
      _
    // Predicated region
    $region34: #{tpu_custom_call.1} parent=1 // pred_check
      _
    $region35: #{tpu_custom_call.1} parent=1 // pred_check_branch
      %63 = sbr.rel (0) target = $region37
    $region36: #{tpu_custom_call.1} parent=1 // pred_region
      %64 = dma.done [#allocation6], 256
    $region37: #{tpu_custom_call.1} parent=1 // pred_fallthru
      _
    // Predicated region
    $region38: #{tpu_custom_call.1} parent=1 // pred_check
      _
    $region39: #{tpu_custom_call.1} parent=1 // pred_check_branch
      %66 = sbr.rel (0) target = $region41
    $region40: #{tpu_custom_call.1} parent=1 // pred_region
      %67 = dma.done [#allocation9], 4096
    $region41: #{tpu_custom_call.1} parent=1 // pred_fallthru
      _
    // Predicated region
    $region42: #{tpu_custom_call.1} parent=1 // pred_check
      _
    $region43: #{tpu_custom_call.1} parent=1 // pred_check_branch
      %69 = sbr.rel (0) target = $region45
    $region44: #{tpu_custom_call.1} parent=1 // pred_region
      %70 = dma.done [#allocation9], 8192
    $region45: #{tpu_custom_call.1} parent=1 // pred_fallthru
      _
    %v71 = vld [vmem:[#allocation5] sm:$0xff]
    %v72 = vld [vmem:[#allocation5 + $0x8] sm:$0xff]
    %v73 = vld [vmem:[#allocation8] sm:$0xff]
    %v74 = vld [vmem:[#allocation8 + $0x8] sm:$0xff]
    %v75 = vld [vmem:[#allocation8 + $0x10] sm:$0xff]
    %v76 = vld [vmem:[#allocation8 + $0x18] sm:$0xff]
    %v77 = vld [vmem:[#allocation8 + $0x20] sm:$0xff]
    %v78 = vld [vmem:[#allocation8 + $0x28] sm:$0xff]
    %v79 = vld [vmem:[#allocation8 + $0x30] sm:$0xff]
    %v80 = vld [vmem:[#allocation8 + $0x38] sm:$0xff]
    %v81 = vld [vmem:[#allocation8 + $0x40] sm:$0xff]
    %v82 = vld [vmem:[#allocation8 + $0x48] sm:$0xff]
    %v83 = vld [vmem:[#allocation8 + $0x50] sm:$0xff]
    %v84 = vld [vmem:[#allocation8 + $0x58] sm:$0xff]
    %v85 = vld [vmem:[#allocation8 + $0x60] sm:$0xff]
    %v86 = vld [vmem:[#allocation8 + $0x68] sm:$0xff]
    %v87 = vld [vmem:[#allocation8 + $0x70] sm:$0xff]
    %v88 = vld [vmem:[#allocation8 + $0x78] sm:$0xff]
    %v89 = vld [vmem:[#allocation8 + $0x80] sm:$0xff]
    %v90 = vld [vmem:[#allocation8 + $0x88] sm:$0xff]
    %v91 = vld [vmem:[#allocation8 + $0x90] sm:$0xff]
    %v92 = vld [vmem:[#allocation8 + $0x98] sm:$0xff]
    %v93 = vld [vmem:[#allocation8 + $0xa0] sm:$0xff]
    %v94 = vld [vmem:[#allocation8 + $0xa8] sm:$0xff]
    %v95 = vld [vmem:[#allocation8 + $0xb0] sm:$0xff]
    %v96 = vld [vmem:[#allocation8 + $0xb8] sm:$0xff]
    %v97 = vld [vmem:[#allocation8 + $0xc0] sm:$0xff]
    %v98 = vld [vmem:[#allocation8 + $0xc8] sm:$0xff]
    %v99 = vld [vmem:[#allocation8 + $0xd0] sm:$0xff]
    %v100 = vld [vmem:[#allocation8 + $0xd8] sm:$0xff]
    %v101 = vld [vmem:[#allocation8 + $0xe0] sm:$0xff]
    %v102 = vld [vmem:[#allocation8 + $0xe8] sm:$0xff]
    %v103 = vld [vmem:[#allocation8 + $0xf0] sm:$0xff]
    %v104 = vld [vmem:[#allocation8 + $0xf8] sm:$0xff]
    %v105 = vld [vmem:[%s2] sm:$0xf]
    %v107 = vlaneseq
    %v108 = vshrl.u32 %v107, 7
    %v109 = vsub.s32 0, %v108
    %v110 = vrot.slane %v105, %v109
    %v111 = vlaneseq
    %v112 = vshrl.u32 %v111, 7
    %v113 = vsub.s32 1, %v112
    %v114 = vrot.slane %v105, %v113
    %v115 = vlaneseq
    %v116 = vshrl.u32 %v115, 7
    %v117 = vsub.s32 2, %v116
    %v118 = vrot.slane %v105, %v117
    %v119 = vlaneseq
    %v120 = vshrl.u32 %v119, 7
    %v121 = vsub.s32 3, %v120
    %v122 = vrot.slane %v105, %v121
    %vm127 = vcmask 523264
    %v129 = vsel %vm127, %v71, 0
    %v132 = vsel %vm127, %v72, 0
    %134 = vmatprep.subr.mxu0 %v74
    %135 = vmatpush1.msra.mxu0 %v73
    %136 = vmatprep.subr.mxu0 %v78
    %137 = vmatpush1.msra.mxu0 %v77
    %138 = vmatprep.subr.mxu0 %v82
    %139 = vmatpush1.msra.mxu0 %v81
    %140 = vmatprep.subr.mxu0 %v86
    %141 = vmatpush1.msra.mxu0 %v85
    %142 = vmatprep.subr.mxu0 %v90
    %143 = vmatpush1.msra.mxu0 %v89
    %144 = vmatprep.subr.mxu0 %v94
    %145 = vmatpush1.msra.mxu0 %v93
    %146 = vmatprep.subr.mxu0 %v98
    %147 = vmatpush1.msra.mxu0 %v97
    %148 = vmatprep.subr.mxu0 %v102
    %149 = vmatpush1.msra.mxu0 %v101
    %150 = vmatprep.subr.mxu0 0.0
    %151 = vmatpush1.msra.mxu0 0.0
    %152 = vmatprep.subr.mxu0 0.0
    %153 = vmatpush1.msra.mxu0 0.0
    %154 = vmatprep.subr.mxu0 0.0
    %155 = vmatpush1.msra.mxu0 0.0
    %156 = vmatprep.subr.mxu0 0.0
    %157 = vmatpush1.msra.mxu0 0.0
    %158 = vmatprep.subr.mxu0 0.0
    %159 = vmatpush1.msra.mxu0 0.0
    %160 = vmatprep.subr.mxu0 0.0
    %161 = vmatpush1.msra.mxu0 0.0
    %162 = vmatprep.subr.mxu0 0.0
    %163 = vmatpush1.msra.mxu0 0.0
    %164 = vmatprep.subr.mxu0 0.0
    %165 = vmatpush1.msra.mxu0 0.0
    %166 = vmatprep.subr.mxu0 0.0
    %167 = vmatpush1.msra.mxu0 0.0
    %168 = vmatprep.subr.mxu0 0.0
    %169 = vmatpush1.msra.mxu0 0.0
    %170 = vmatprep.subr.mxu0 0.0
    %171 = vmatpush1.msra.mxu0 0.0
    %172 = vmatprep.subr.mxu0 0.0
    %173 = vmatpush1.msra.mxu0 0.0
    %174 = vmatprep.subr.mxu0 0.0
    %175 = vmatpush1.msra.mxu0 0.0
    %176 = vmatprep.subr.mxu0 0.0
    %177 = vmatpush1.msra.mxu0 0.0
    %178 = vmatprep.subr.mxu0 0.0
    %179 = vmatpush1.msra.mxu0 0.0
    %180 = vmatprep.subr.mxu0 0.0
    %181 = vmatpush1.msra.mxu0 0.0
    %182 = vmatprep.subr.mxu0 0.0
    %183 = vmatpush1.msra.mxu0 0.0
    %184 = vmatprep.subr.mxu0 0.0
    %185 = vmatpush1.msra.mxu0 0.0
    %186 = vmatprep.subr.mxu0 0.0
    %187 = vmatpush1.msra.mxu0 0.0
    %188 = vmatprep.subr.mxu0 0.0
    %189 = vmatpush1.msra.mxu0 0.0
    %190 = vmatprep.subr.mxu0 0.0
    %191 = vmatpush1.msra.mxu0 0.0
    %192 = vmatprep.subr.mxu0 0.0
    %193 = vmatpush1.msra.mxu0 0.0
    %194 = vmatprep.subr.mxu0 0.0
    %195 = vmatpush1.msra.mxu0 0.0
    %196 = vmatprep.subr.mxu0 0.0
    %197 = vmatpush1.msra.mxu0 0.0
    %198 = vmatprep.mubr.f32.mxu0 0.0
    %199 = vmatmul.mubr.f32.gmra.mrb[0].mxu0 %v129
    %v200 = vpop.f32.mrb[0].mxu0
    %v201 = vadd.f32 %v110, %v200
    %v202 = vpop.f32.mrb[0].mxu0
    %v203 = vadd.f32 %v114, %v202
    %204 = vmatprep.mubr.f32.mxu0 0.0
    %205 = vmatmul.mubr.f32.gmra.mrb[0].mxu0 %v132
    %v206 = vpop.f32.mrb[0].mxu0
    %v207 = vadd.f32 %v110, %v206
    %v208 = vpop.f32.mrb[0].mxu0
    %v209 = vadd.f32 %v114, %v208
    %210 = vdwg.mxu0
    %211 = vmatprep.subr.mxu0 %v76
    %212 = vmatpush1.msra.mxu0 %v75
    %213 = vmatprep.subr.mxu0 %v80
    %214 = vmatpush1.msra.mxu0 %v79
    %215 = vmatprep.subr.mxu0 %v84
    %216 = vmatpush1.msra.mxu0 %v83
    %217 = vmatprep.subr.mxu0 %v88
    %218 = vmatpush1.msra.mxu0 %v87
    %219 = vmatprep.subr.mxu0 %v92
    %220 = vmatpush1.msra.mxu0 %v91
    %221 = vmatprep.subr.mxu0 %v96
    %222 = vmatpush1.msra.mxu0 %v95
    %223 = vmatprep.subr.mxu0 %v100
    %224 = vmatpush1.msra.mxu0 %v99
    %225 = vmatprep.subr.mxu0 %v104
    %226 = vmatpush1.msra.mxu0 %v103
    %227 = vmatprep.subr.mxu0 0.0
    %228 = vmatpush1.msra.mxu0 0.0
    %229 = vmatprep.subr.mxu0 0.0
    %230 = vmatpush1.msra.mxu0 0.0
    %231 = vmatprep.subr.mxu0 0.0
    %232 = vmatpush1.msra.mxu0 0.0
    %233 = vmatprep.subr.mxu0 0.0
    %234 = vmatpush1.msra.mxu0 0.0
    %235 = vmatprep.subr.mxu0 0.0
    %236 = vmatpush1.msra.mxu0 0.0
    %237 = vmatprep.subr.mxu0 0.0
    %238 = vmatpush1.msra.mxu0 0.0
    %239 = vmatprep.subr.mxu0 0.0
    %240 = vmatpush1.msra.mxu0 0.0
    %241 = vmatprep.subr.mxu0 0.0
    %242 = vmatpush1.msra.mxu0 0.0
    %243 = vmatprep.subr.mxu0 0.0
    %244 = vmatpush1.msra.mxu0 0.0
    %245 = vmatprep.subr.mxu0 0.0
    %246 = vmatpush1.msra.mxu0 0.0
    %247 = vmatprep.subr.mxu0 0.0
    %248 = vmatpush1.msra.mxu0 0.0
    %249 = vmatprep.subr.mxu0 0.0
    %250 = vmatpush1.msra.mxu0 0.0
    %251 = vmatprep.subr.mxu0 0.0
    %252 = vmatpush1.msra.mxu0 0.0
    %253 = vmatprep.subr.mxu0 0.0
    %254 = vmatpush1.msra.mxu0 0.0
    %255 = vmatprep.subr.mxu0 0.0
    %256 = vmatpush1.msra.mxu0 0.0
    %257 = vmatprep.subr.mxu0 0.0
    %258 = vmatpush1.msra.mxu0 0.0
    %259 = vmatprep.subr.mxu0 0.0
    %260 = vmatpush1.msra.mxu0 0.0
    %261 = vmatprep.subr.mxu0 0.0
    %262 = vmatpush1.msra.mxu0 0.0
    %263 = vmatprep.subr.mxu0 0.0
    %264 = vmatpush1.msra.mxu0 0.0
    %265 = vmatprep.subr.mxu0 0.0
    %266 = vmatpush1.msra.mxu0 0.0
    %267 = vmatprep.subr.mxu0 0.0
    %268 = vmatpush1.msra.mxu0 0.0
    %269 = vmatprep.subr.mxu0 0.0
    %270 = vmatpush1.msra.mxu0 0.0
    %271 = vmatprep.subr.mxu0 0.0
    %272 = vmatpush1.msra.mxu0 0.0
    %273 = vmatprep.subr.mxu0 0.0
    %274 = vmatpush1.msra.mxu0 0.0
    %275 = vmatprep.mubr.f32.mxu0 0.0
    %276 = vmatmul.mubr.f32.gmra.mrb[0].mxu0 %v129
    %v277 = vpop.f32.mrb[0].mxu0
    %v278 = vadd.f32 %v118, %v277
    %v279 = vpop.f32.mrb[0].mxu0
    %v280 = vadd.f32 %v122, %v279
    %281 = vmatprep.mubr.f32.mxu0 0.0
    %282 = vmatmul.mubr.f32.gmra.mrb[0].mxu0 %v132
    %v283 = vpop.f32.mrb[0].mxu0
    %v284 = vadd.f32 %v118, %v283
    %v285 = vpop.f32.mrb[0].mxu0
    %v286 = vadd.f32 %v122, %v285
    %287 = vdwg.mxu0
    %288 = vst [vmem:[#allocation2] sm:$0xff] %v201
    %289 = vst [vmem:[#allocation2 + $0x8] sm:$0xff] %v203
    %290 = vst [vmem:[#allocation2 + $0x10] sm:$0xff] %v278
    %291 = vst [vmem:[#allocation2 + $0x18] sm:$0xff] %v280
    %292 = vst [vmem:[#allocation2 + $0x20] sm:$0xff] %v207
    %293 = vst [vmem:[#allocation2 + $0x28] sm:$0xff] %v209
    %294 = vst [vmem:[#allocation2 + $0x30] sm:$0xff] %v284
    %295 = vst [vmem:[#allocation2 + $0x38] sm:$0xff] %v286
    %v296 = vld [vmem:[#allocation2] sm:$0x3]
    %v297 = vld [vmem:[#allocation2 + $0x8] sm:$0x3]
    %v298 = vld [vmem:[#allocation2 + $0x10] sm:$0x3]
    %v299 = vld [vmem:[#allocation2 + $0x18] sm:$0x3]
    %v300 = vld [vmem:[#allocation10] sm:$0xff]
    %v301 = vld [vmem:[#allocation10 + $0x8] sm:$0xff]
    %v302 = vld [vmem:[#allocation10 + $0x10] sm:$0xff]
    %v303 = vld [vmem:[#allocation10 + $0x18] sm:$0xff]
    %v304 = vld [vmem:[#allocation10 + $0x20] sm:$0xff]
    %v305 = vld [vmem:[#allocation10 + $0x28] sm:$0xff]
    %v306 = vld [vmem:[#allocation10 + $0x30] sm:$0xff]
    %v307 = vld [vmem:[#allocation10 + $0x38] sm:$0xff]
    %v308 = vld [vmem:[#allocation10 + $0x40] sm:$0xff]
    %v309 = vld [vmem:[#allocation10 + $0x48] sm:$0xff]
    %v310 = vld [vmem:[#allocation10 + $0x50] sm:$0xff]
    %v311 = vld [vmem:[#allocation10 + $0x58] sm:$0xff]
    %v312 = vld [vmem:[#allocation10 + $0x60] sm:$0xff]
    %v313 = vld [vmem:[#allocation10 + $0x68] sm:$0xff]
    %v314 = vld [vmem:[#allocation10 + $0x70] sm:$0xff]
    %v315 = vld [vmem:[#allocation10 + $0x78] sm:$0xff]
    %v316 = vld [vmem:[#allocation10 + $0x80] sm:$0xff]
    %v317 = vld [vmem:[#allocation10 + $0x88] sm:$0xff]
    %v318 = vld [vmem:[#allocation10 + $0x90] sm:$0xff]
    %v319 = vld [vmem:[#allocation10 + $0x98] sm:$0xff]
    %v320 = vld [vmem:[#allocation10 + $0xa0] sm:$0xff]
    %v321 = vld [vmem:[#allocation10 + $0xa8] sm:$0xff]
    %v322 = vld [vmem:[#allocation10 + $0xb0] sm:$0xff]
    %v323 = vld [vmem:[#allocation10 + $0xb8] sm:$0xff]
    %v324 = vld [vmem:[#allocation10 + $0xc0] sm:$0xff]
    %v325 = vld [vmem:[#allocation10 + $0xc8] sm:$0xff]
    %v326 = vld [vmem:[#allocation10 + $0xd0] sm:$0xff]
    %v327 = vld [vmem:[#allocation10 + $0xd8] sm:$0xff]
    %v328 = vld [vmem:[#allocation10 + $0xe0] sm:$0xff]
    %v329 = vld [vmem:[#allocation10 + $0xe8] sm:$0xff]
    %v330 = vld [vmem:[#allocation10 + $0xf0] sm:$0xff]
    %v331 = vld [vmem:[#allocation10 + $0xf8] sm:$0xff]
    %v332 = vld [vmem:[#allocation10 + $0x100] sm:$0xff]
    %v333 = vld [vmem:[#allocation10 + $0x108] sm:$0xff]
    %v334 = vld [vmem:[#allocation10 + $0x110] sm:$0xff]
    %v335 = vld [vmem:[#allocation10 + $0x118] sm:$0xff]
    %v336 = vld [vmem:[#allocation10 + $0x120] sm:$0xff]
    %v337 = vld [vmem:[#allocation10 + $0x128] sm:$0xff]
    %v338 = vld [vmem:[#allocation10 + $0x130] sm:$0xff]
    %v339 = vld [vmem:[#allocation10 + $0x138] sm:$0xff]
    %v340 = vld [vmem:[#allocation10 + $0x140] sm:$0xff]
    %v341 = vld [vmem:[#allocation10 + $0x148] sm:$0xff]
    %v342 = vld [vmem:[#allocation10 + $0x150] sm:$0xff]
    %v343 = vld [vmem:[#allocation10 + $0x158] sm:$0xff]
    %v344 = vld [vmem:[#allocation10 + $0x160] sm:$0xff]
    %v345 = vld [vmem:[#allocation10 + $0x168] sm:$0xff]
    %v346 = vld [vmem:[#allocation10 + $0x170] sm:$0xff]
    %v347 = vld [vmem:[#allocation10 + $0x178] sm:$0xff]
    %v348 = vld [vmem:[#allocation10 + $0x180] sm:$0xff]
    %v349 = vld [vmem:[#allocation10 + $0x188] sm:$0xff]
    %v350 = vld [vmem:[#allocation10 + $0x190] sm:$0xff]
    %v351 = vld [vmem:[#allocation10 + $0x198] sm:$0xff]
    %v352 = vld [vmem:[#allocation10 + $0x1a0] sm:$0xff]
    %v353 = vld [vmem:[#allocation10 + $0x1a8] sm:$0xff]
    %v354 = vld [vmem:[#allocation10 + $0x1b0] sm:$0xff]
    %v355 = vld [vmem:[#allocation10 + $0x1b8] sm:$0xff]
    %v356 = vld [vmem:[#allocation10 + $0x1c0] sm:$0xff]
    %v357 = vld [vmem:[#allocation10 + $0x1c8] sm:$0xff]
    %v358 = vld [vmem:[#allocation10 + $0x1d0] sm:$0xff]
    %v359 = vld [vmem:[#allocation10 + $0x1d8] sm:$0xff]
    %v360 = vld [vmem:[#allocation10 + $0x1e0] sm:$0xff]
    %v361 = vld [vmem:[#allocation10 + $0x1e8] sm:$0xff]
    %v362 = vld [vmem:[#allocation10 + $0x1f0] sm:$0xff]
    %v363 = vld [vmem:[#allocation10 + $0x1f8] sm:$0xff]
    %364 = vmatprep.subr.mxu0 %v301
    %365 = vmatpush1.msra.mxu0 %v300
    %366 = vmatprep.subr.mxu0 %v305
    %367 = vmatpush1.msra.mxu0 %v304
    %368 = vmatprep.subr.mxu0 %v309
    %369 = vmatpush1.msra.mxu0 %v308
    %370 = vmatprep.subr.mxu0 %v313
    %371 = vmatpush1.msra.mxu0 %v312
    %372 = vmatprep.subr.mxu0 %v317
    %373 = vmatpush1.msra.mxu0 %v316
    %374 = vmatprep.subr.mxu0 %v321
    %375 = vmatpush1.msra.mxu0 %v320
    %376 = vmatprep.subr.mxu0 %v325
    %377 = vmatpush1.msra.mxu0 %v324
    %378 = vmatprep.subr.mxu0 %v329
    %379 = vmatpush1.msra.mxu0 %v328
    %380 = vmatprep.subr.mxu0 %v333
    %381 = vmatpush1.msra.mxu0 %v332
    %382 = vmatprep.subr.mxu0 %v337
    %383 = vmatpush1.msra.mxu0 %v336
    %384 = vmatprep.subr.mxu0 %v341
    %385 = vmatpush1.msra.mxu0 %v340
    %386 = vmatprep.subr.mxu0 %v345
    %387 = vmatpush1.msra.mxu0 %v344
    %388 = vmatprep.subr.mxu0 %v349
    %389 = vmatpush1.msra.mxu0 %v348
    %390 = vmatprep.subr.mxu0 %v353
    %391 = vmatpush1.msra.mxu0 %v352
    %392 = vmatprep.subr.mxu0 %v357
    %393 = vmatpush1.msra.mxu0 %v356
    %394 = vmatprep.subr.mxu0 %v361
    %395 = vmatpush1.msra.mxu0 %v360
    %396 = vmatprep.subr.mxu0 0.0
    %397 = vmatpush1.msra.mxu0 0.0
    %398 = vmatprep.subr.mxu0 0.0
    %399 = vmatpush1.msra.mxu0 0.0
    %400 = vmatprep.subr.mxu0 0.0
    %401 = vmatpush1.msra.mxu0 0.0
    %402 = vmatprep.subr.mxu0 0.0
    %403 = vmatpush1.msra.mxu0 0.0
    %404 = vmatprep.subr.mxu0 0.0
    %405 = vmatpush1.msra.mxu0 0.0
    %406 = vmatprep.subr.mxu0 0.0
    %407 = vmatpush1.msra.mxu0 0.0
    %408 = vmatprep.subr.mxu0 0.0
    %409 = vmatpush1.msra.mxu0 0.0
    %410 = vmatprep.subr.mxu0 0.0
    %411 = vmatpush1.msra.mxu0 0.0
    %412 = vmatprep.subr.mxu0 0.0
    %413 = vmatpush1.msra.mxu0 0.0
    %414 = vmatprep.subr.mxu0 0.0
    %415 = vmatpush1.msra.mxu0 0.0
    %416 = vmatprep.subr.mxu0 0.0
    %417 = vmatpush1.msra.mxu0 0.0
    %418 = vmatprep.subr.mxu0 0.0
    %419 = vmatpush1.msra.mxu0 0.0
    %420 = vmatprep.subr.mxu0 0.0
    %421 = vmatpush1.msra.mxu0 0.0
    %422 = vmatprep.subr.mxu0 0.0
    %423 = vmatpush1.msra.mxu0 0.0
    %424 = vmatprep.subr.mxu0 0.0
    %425 = vmatpush1.msra.mxu0 0.0
    %426 = vmatprep.subr.mxu0 0.0
    %427 = vmatpush1.msra.mxu0 0.0
    %428 = vmatprep.mubr.f32.mxu0 0.0
    %429 = vmatmul.mubr.f32.gmra.mrb[0].mxu0 0.0
    %v430 = vpop.f32.mrb[0].mxu0
    %v431 = vadd.f32 0.0, %v430
    %v432 = vpop.f32.mrb[0].mxu0
    %v433 = vadd.f32 0.0, %v432
    %434 = vdwg.mxu0
    %435 = vmatprep.subr.mxu0 %v303
    %436 = vmatpush1.msra.mxu0 %v302
    %437 = vmatprep.subr.mxu0 %v307
    %438 = vmatpush1.msra.mxu0 %v306
    %439 = vmatprep.subr.mxu0 %v311
    %440 = vmatpush1.msra.mxu0 %v310
    %441 = vmatprep.subr.mxu0 %v315
    %442 = vmatpush1.msra.mxu0 %v314
    %443 = vmatprep.subr.mxu0 %v319
    %444 = vmatpush1.msra.mxu0 %v318
    %445 = vmatprep.subr.mxu0 %v323
    %446 = vmatpush1.msra.mxu0 %v322
    %447 = vmatprep.subr.mxu0 %v327
    %448 = vmatpush1.msra.mxu0 %v326
    %449 = vmatprep.subr.mxu0 %v331
    %450 = vmatpush1.msra.mxu0 %v330
    %451 = vmatprep.subr.mxu0 %v335
    %452 = vmatpush1.msra.mxu0 %v334
    %453 = vmatprep.subr.mxu0 %v339
    %454 = vmatpush1.msra.mxu0 %v338
    %455 = vmatprep.subr.mxu0 %v343
    %456 = vmatpush1.msra.mxu0 %v342
    %457 = vmatprep.subr.mxu0 %v347
    %458 = vmatpush1.msra.mxu0 %v346
    %459 = vmatprep.subr.mxu0 %v351
    %460 = vmatpush1.msra.mxu0 %v350
    %461 = vmatprep.subr.mxu0 %v355
    %462 = vmatpush1.msra.mxu0 %v354
    %463 = vmatprep.subr.mxu0 %v359
    %464 = vmatpush1.msra.mxu0 %v358
    %465 = vmatprep.subr.mxu0 %v363
    %466 = vmatpush1.msra.mxu0 %v362
    %467 = vmatprep.subr.mxu0 0.0
    %468 = vmatpush1.msra.mxu0 0.0
    %469 = vmatprep.subr.mxu0 0.0
    %470 = vmatpush1.msra.mxu0 0.0
    %471 = vmatprep.subr.mxu0 0.0
    %472 = vmatpush1.msra.mxu0 0.0
    %473 = vmatprep.subr.mxu0 0.0
    %474 = vmatpush1.msra.mxu0 0.0
    %475 = vmatprep.subr.mxu0 0.0
    %476 = vmatpush1.msra.mxu0 0.0
    %477 = vmatprep.subr.mxu0 0.0
    %478 = vmatpush1.msra.mxu0 0.0
    %479 = vmatprep.subr.mxu0 0.0
    %480 = vmatpush1.msra.mxu0 0.0
    %481 = vmatprep.subr.mxu0 0.0
    %482 = vmatpush1.msra.mxu0 0.0
    %483 = vmatprep.subr.mxu0 0.0
    %484 = vmatpush1.msra.mxu0 0.0
    %485 = vmatprep.subr.mxu0 0.0
    %486 = vmatpush1.msra.mxu0 0.0
    %487 = vmatprep.subr.mxu0 0.0
    %488 = vmatpush1.msra.mxu0 0.0
    %489 = vmatprep.subr.mxu0 0.0
    %490 = vmatpush1.msra.mxu0 0.0
    %491 = vmatprep.subr.mxu0 0.0
    %492 = vmatpush1.msra.mxu0 0.0
    %493 = vmatprep.subr.mxu0 0.0
    %494 = vmatpush1.msra.mxu0 0.0
    %495 = vmatprep.subr.mxu0 0.0
    %496 = vmatpush1.msra.mxu0 0.0
    %497 = vmatprep.subr.mxu0 0.0
    %498 = vmatpush1.msra.mxu0 0.0
    %499 = vmatprep.mubr.f32.mxu0 0.0
    %500 = vmatmul.mubr.f32.gmra.mrb[0].mxu0 0.0
    %v501 = vpop.f32.mrb[0].mxu0
    %v502 = vadd.f32 0.0, %v501
    %v503 = vpop.f32.mrb[0].mxu0
    %v504 = vadd.f32 0.0, %v503
    %505 = vdwg.mxu0
    %v506 = vadd.f32 %v296, %v431
    %v507 = vadd.f32 %v297, %v433
    %v508 = vadd.f32 %v298, %v502
    %v509 = vadd.f32 %v299, %v504
    %v510 = vxor.u32 %v506, 2147483648
    %v511 = vxor.u32 %v507, 2147483648
    %v512 = vxor.u32 %v508, 2147483648
    %v513 = vmul.f32 %v510, 1.442695
    %v514 = vpow.pop %v513
    %v515 = vmul.f32 %v511, 1.442695
    %v516 = vpow.pop %v515
    %v517 = vmul.f32 %v512, 1.442695
    %v518 = vpow.pop %v517
    %v519 = vadd.f32 %v514, 1.0
    %v520 = vadd.f32 %v516, 1.0
    %v521 = vadd.f32 %v518, 1.0
    %v522 = vrcp.pop %v519
    %v523 = vmul.f32 1.0, %v522
    %v524 = vrcp.pop %v520
    %v525 = vmul.f32 1.0, %v524
    %v526 = vrcp.pop %v521
    %v527 = vmul.f32 1.0, %v526
    %v528 = vtanh.pop %v509
    %v529 = vmul.f32 %v525, 0.0
    %v530 = vmul.f32 %v523, %v528
    %v531 = vadd.f32 %v529, %v530
    %v532 = vtanh.pop %v531
    %v533 = vmul.f32 %v527, %v532
    %vm534 = vcmask 517120
    %535 = vst.msk [vmem:[#allocation3] sm:$0x3] %vm534, %v533
    %537 = vrot.lane.b32.xlu0 %v533, 64
    %v538 = vpop.permute.xlu0 %537
    %540 = vst.msk [vmem:[#allocation4 + $0xe] sm:$0x3] %vm534, %v538
    %v541 = vld [vmem:[#allocation2] sm:$0xc]
    %v542 = vld [vmem:[#allocation2 + $0x8] sm:$0xc]
    %v543 = vld [vmem:[#allocation2 + $0x10] sm:$0xc]
    %v544 = vld [vmem:[#allocation2 + $0x18] sm:$0xc]
    %v545 = vld [vmem:[#allocation10] sm:$0xff]
    %v546 = vld [vmem:[#allocation10 + $0x8] sm:$0xff]
    %v547 = vld [vmem:[#allocation10 + $0x10] sm:$0xff]
    %v548 = vld [vmem:[#allocation10 + $0x18] sm:$0xff]
    %v549 = vld [vmem:[#allocation10 + $0x20] sm:$0xff]
    %v550 = vld [vmem:[#allocation10 + $0x28] sm:$0xff]
    %v551 = vld [vmem:[#allocation10 + $0x30] sm:$0xff]
    %v552 = vld [vmem:[#allocation10 + $0x38] sm:$0xff]
    %v553 = vld [vmem:[#allocation10 + $0x40] sm:$0xff]
    %v554 = vld [vmem:[#allocation10 + $0x48] sm:$0xff]
    %v555 = vld [vmem:[#allocation10 + $0x50] sm:$0xff]
    %v556 = vld [vmem:[#allocation10 + $0x58] sm:$0xff]
    %v557 = vld [vmem:[#allocation10 + $0x60] sm:$0xff]
    %v558 = vld [vmem:[#allocation10 + $0x68] sm:$0xff]
    %v559 = vld [vmem:[#allocation10 + $0x70] sm:$0xff]
    %v560 = vld [vmem:[#allocation10 + $0x78] sm:$0xff]
    %v561 = vld [vmem:[#allocation10 + $0x80] sm:$0xff]
    %v562 = vld [vmem:[#allocation10 + $0x88] sm:$0xff]
    %v563 = vld [vmem:[#allocation10 + $0x90] sm:$0xff]
    %v564 = vld [vmem:[#allocation10 + $0x98] sm:$0xff]
    %v565 = vld [vmem:[#allocation10 + $0xa0] sm:$0xff]
    %v566 = vld [vmem:[#allocation10 + $0xa8] sm:$0xff]
    %v567 = vld [vmem:[#allocation10 + $0xb0] sm:$0xff]
    %v568 = vld [vmem:[#allocation10 + $0xb8] sm:$0xff]
    %v569 = vld [vmem:[#allocation10 + $0xc0] sm:$0xff]
    %v570 = vld [vmem:[#allocation10 + $0xc8] sm:$0xff]
    %v571 = vld [vmem:[#allocation10 + $0xd0] sm:$0xff]
    %v572 = vld [vmem:[#allocation10 + $0xd8] sm:$0xff]
    %v573 = vld [vmem:[#allocation10 + $0xe0] sm:$0xff]
    %v574 = vld [vmem:[#allocation10 + $0xe8] sm:$0xff]
    %v575 = vld [vmem:[#allocation10 + $0xf0] sm:$0xff]
    %v576 = vld [vmem:[#allocation10 + $0xf8] sm:$0xff]
    %v577 = vld [vmem:[#allocation10 + $0x100] sm:$0xff]
    %v578 = vld [vmem:[#allocation10 + $0x108] sm:$0xff]
    %v579 = vld [vmem:[#allocation10 + $0x110] sm:$0xff]
    %v580 = vld [vmem:[#allocation10 + $0x118] sm:$0xff]
    %v581 = vld [vmem:[#allocation10 + $0x120] sm:$0xff]
    %v582 = vld [vmem:[#allocation10 + $0x128] sm:$0xff]
    %v583 = vld [vmem:[#allocation10 + $0x130] sm:$0xff]
    %v584 = vld [vmem:[#allocation10 + $0x138] sm:$0xff]
    %v585 = vld [vmem:[#allocation10 + $0x140] sm:$0xff]
    %v586 = vld [vmem:[#allocation10 + $0x148] sm:$0xff]
    %v587 = vld [vmem:[#allocation10 + $0x150] sm:$0xff]
    %v588 = vld [vmem:[#allocation10 + $0x158] sm:$0xff]
    %v589 = vld [vmem:[#allocation10 + $0x160] sm:$0xff]
    %v590 = vld [vmem:[#allocation10 + $0x168] sm:$0xff]
    %v591 = vld [vmem:[#allocation10 + $0x170] sm:$0xff]
    %v592 = vld [vmem:[#allocation10 + $0x178] sm:$0xff]
    %v593 = vld [vmem:[#allocation10 + $0x180] sm:$0xff]
    %v594 = vld [vmem:[#allocation10 + $0x188] sm:$0xff]
    %v595 = vld [vmem:[#allocation10 + $0x190] sm:$0xff]
    %v596 = vld [vmem:[#allocation10 + $0x198] sm:$0xff]
    %v597 = vld [vmem:[#allocation10 + $0x1a0] sm:$0xff]
    %v598 = vld [vmem:[#allocation10 + $0x1a8] sm:$0xff]
    %v599 = vld [vmem:[#allocation10 + $0x1b0] sm:$0xff]
    %v600 = vld [vmem:[#allocation10 + $0x1b8] sm:$0xff]
    %v601 = vld [vmem:[#allocation10 + $0x1c0] sm:$0xff]
    %v602 = vld [vmem:[#allocation10 + $0x1c8] sm:$0xff]
    %v603 = vld [vmem:[#allocation10 + $0x1d0] sm:$0xff]
    %v604 = vld [vmem:[#allocation10 + $0x1d8] sm:$0xff]
    %v605 = vld [vmem:[#allocation10 + $0x1e0] sm:$0xff]
    %v606 = vld [vmem:[#allocation10 + $0x1e8] sm:$0xff]
    %v607 = vld [vmem:[#allocation10 + $0x1f0] sm:$0xff]
    %v608 = vld [vmem:[#allocation10 + $0x1f8] sm:$0xff]
    %609 = vmatprep.subr.mxu0 %v546
    %610 = vmatpush1.msra.mxu0 %v545
    %611 = vmatprep.subr.mxu0 %v550
    %612 = vmatpush1.msra.mxu0 %v549
    %613 = vmatprep.subr.mxu0 %v554
    %614 = vmatpush1.msra.mxu0 %v553
    %615 = vmatprep.subr.mxu0 %v558
    %616 = vmatpush1.msra.mxu0 %v557
    %617 = vmatprep.subr.mxu0 %v562
    %618 = vmatpush1.msra.mxu0 %v561
    %619 = vmatprep.subr.mxu0 %v566
    %620 = vmatpush1.msra.mxu0 %v565
    %621 = vmatprep.subr.mxu0 %v570
    %622 = vmatpush1.msra.mxu0 %v569
    %623 = vmatprep.subr.mxu0 %v574
    %624 = vmatpush1.msra.mxu0 %v573
    %625 = vmatprep.subr.mxu0 %v578
    %626 = vmatpush1.msra.mxu0 %v577
    %627 = vmatprep.subr.mxu0 %v582
    %628 = vmatpush1.msra.mxu0 %v581
    %629 = vmatprep.subr.mxu0 %v586
    %630 = vmatpush1.msra.mxu0 %v585
    %631 = vmatprep.subr.mxu0 %v590
    %632 = vmatpush1.msra.mxu0 %v589
    %633 = vmatprep.subr.mxu0 %v594
    %634 = vmatpush1.msra.mxu0 %v593
    %635 = vmatprep.subr.mxu0 %v598
    %636 = vmatpush1.msra.mxu0 %v597
    %637 = vmatprep.subr.mxu0 %v602
    %638 = vmatpush1.msra.mxu0 %v601
    %639 = vmatprep.subr.mxu0 %v606
    %640 = vmatpush1.msra.mxu0 %v605
    %641 = vmatprep.subr.mxu0 0.0
    %642 = vmatpush1.msra.mxu0 0.0
    %643 = vmatprep.subr.mxu0 0.0
    %644 = vmatpush1.msra.mxu0 0.0
    %645 = vmatprep.subr.mxu0 0.0
    %646 = vmatpush1.msra.mxu0 0.0
    %647 = vmatprep.subr.mxu0 0.0
    %648 = vmatpush1.msra.mxu0 0.0
    %649 = vmatprep.subr.mxu0 0.0
    %650 = vmatpush1.msra.mxu0 0.0
    %651 = vmatprep.subr.mxu0 0.0
    %652 = vmatpush1.msra.mxu0 0.0
    %653 = vmatprep.subr.mxu0 0.0
    %654 = vmatpush1.msra.mxu0 0.0
    %655 = vmatprep.subr.mxu0 0.0
    %656 = vmatpush1.msra.mxu0 0.0
    %657 = vmatprep.subr.mxu0 0.0
    %658 = vmatpush1.msra.mxu0 0.0
    %659 = vmatprep.subr.mxu0 0.0
    %660 = vmatpush1.msra.mxu0 0.0
    %661 = vmatprep.subr.mxu0 0.0
    %662 = vmatpush1.msra.mxu0 0.0
    %663 = vmatprep.subr.mxu0 0.0
    %664 = vmatpush1.msra.mxu0 0.0
    %665 = vmatprep.subr.mxu0 0.0
    %666 = vmatpush1.msra.mxu0 0.0
    %667 = vmatprep.subr.mxu0 0.0
    %668 = vmatpush1.msra.mxu0 0.0
    %669 = vmatprep.subr.mxu0 0.0
    %670 = vmatpush1.msra.mxu0 0.0
    %671 = vmatprep.subr.mxu0 0.0
    %672 = vmatpush1.msra.mxu0 0.0
    %673 = vmatprep.mubr.f32.mxu0 0.0
    %674 = vmatmul.mubr.f32.gmra.mrb[0].mxu0 %v533
    %v675 = vpop.f32.mrb[0].mxu0
    %v676 = vadd.f32 0.0, %v675
    %v677 = vpop.f32.mrb[0].mxu0
    %v678 = vadd.f32 0.0, %v677
    %679 = vdwg.mxu0
    %680 = vmatprep.subr.mxu0 %v548
    %681 = vmatpush1.msra.mxu0 %v547
    %682 = vmatprep.subr.mxu0 %v552
    %683 = vmatpush1.msra.mxu0 %v551
    %684 = vmatprep.subr.mxu0 %v556
    %685 = vmatpush1.msra.mxu0 %v555
    %686 = vmatprep.subr.mxu0 %v560
    %687 = vmatpush1.msra.mxu0 %v559
    %688 = vmatprep.subr.mxu0 %v564
    %689 = vmatpush1.msra.mxu0 %v563
    %690 = vmatprep.subr.mxu0 %v568
    %691 = vmatpush1.msra.mxu0 %v567
    %692 = vmatprep.subr.mxu0 %v572
    %693 = vmatpush1.msra.mxu0 %v571
    %694 = vmatprep.subr.mxu0 %v576
    %695 = vmatpush1.msra.mxu0 %v575
    %696 = vmatprep.subr.mxu0 %v580
    %697 = vmatpush1.msra.mxu0 %v579
    %698 = vmatprep.subr.mxu0 %v584
    %699 = vmatpush1.msra.mxu0 %v583
    %700 = vmatprep.subr.mxu0 %v588
    %701 = vmatpush1.msra.mxu0 %v587
    %702 = vmatprep.subr.mxu0 %v592
    %703 = vmatpush1.msra.mxu0 %v591
    %704 = vmatprep.subr.mxu0 %v596
    %705 = vmatpush1.msra.mxu0 %v595
    %706 = vmatprep.subr.mxu0 %v600
    %707 = vmatpush1.msra.mxu0 %v599
    %708 = vmatprep.subr.mxu0 %v604
    %709 = vmatpush1.msra.mxu0 %v603
    %710 = vmatprep.subr.mxu0 %v608
    %711 = vmatpush1.msra.mxu0 %v607
    %712 = vmatprep.subr.mxu0 0.0
    %713 = vmatpush1.msra.mxu0 0.0
    %714 = vmatprep.subr.mxu0 0.0
    %715 = vmatpush1.msra.mxu0 0.0
    %716 = vmatprep.subr.mxu0 0.0
    %717 = vmatpush1.msra.mxu0 0.0
    %718 = vmatprep.subr.mxu0 0.0
    %719 = vmatpush1.msra.mxu0 0.0
    %720 = vmatprep.subr.mxu0 0.0
    %721 = vmatpush1.msra.mxu0 0.0
    %722 = vmatprep.subr.mxu0 0.0
    %723 = vmatpush1.msra.mxu0 0.0
    %724 = vmatprep.subr.mxu0 0.0
    %725 = vmatpush1.msra.mxu0 0.0
    %726 = vmatprep.subr.mxu0 0.0
    %727 = vmatpush1.msra.mxu0 0.0
    %728 = vmatprep.subr.mxu0 0.0
    %729 = vmatpush1.msra.mxu0 0.0
    %730 = vmatprep.subr.mxu0 0.0
    %731 = vmatpush1.msra.mxu0 0.0
    %732 = vmatprep.subr.mxu0 0.0
    %733 = vmatpush1.msra.mxu0 0.0
    %734 = vmatprep.subr.mxu0 0.0
    %735 = vmatpush1.msra.mxu0 0.0
    %736 = vmatprep.subr.mxu0 0.0
    %737 = vmatpush1.msra.mxu0 0.0
    %738 = vmatprep.subr.mxu0 0.0
    %739 = vmatpush1.msra.mxu0 0.0
    %740 = vmatprep.subr.mxu0 0.0
    %741 = vmatpush1.msra.mxu0 0.0
    %742 = vmatprep.subr.mxu0 0.0
    %743 = vmatpush1.msra.mxu0 0.0
    %744 = vmatprep.mubr.f32.mxu0 0.0
    %745 = vmatmul.mubr.f32.gmra.mrb[0].mxu0 %v533
    %v746 = vpop.f32.mrb[0].mxu0
    %v747 = vadd.f32 0.0, %v746
    %v748 = vpop.f32.mrb[0].mxu0
    %v749 = vadd.f32 0.0, %v748
    %750 = vdwg.mxu0
    %v755 = vrot.slane %v676, 6
    %v756 = vrot.slane %v678, 6
    %v757 = vrot.slane %v747, 6
    %v758 = vrot.slane %v749, 6
    %v763 = vadd.f32 %v541, %v755
    %v764 = vadd.f32 %v542, %v756
    %v765 = vadd.f32 %v543, %v757
    %v766 = vadd.f32 %v544, %v758
    %v767 = vxor.u32 %v763, 2147483648
    %v768 = vxor.u32 %v764, 2147483648
    %v769 = vxor.u32 %v765, 2147483648
    %v770 = vmul.f32 %v767, 1.442695
    %v771 = vpow.pop %v770
    %v772 = vmul.f32 %v768, 1.442695
    %v773 = vpow.pop %v772
    %v774 = vmul.f32 %v769, 1.442695
    %v775 = vpow.pop %v774
    %v776 = vadd.f32 %v771, 1.0
    %v777 = vadd.f32 %v773, 1.0
    %v778 = vadd.f32 %v775, 1.0
    %v779 = vrcp.pop %v776
    %v780 = vmul.f32 1.0, %v779
    %v781 = vrcp.pop %v777
    %v782 = vmul.f32 1.0, %v781
    %v783 = vrcp.pop %v778
    %v784 = vmul.f32 1.0, %v783
    %v785 = vtanh.pop %v766
    %v787 = vrot.slane %v531, 6
    %v789 = vmul.f32 %v782, %v787
    %v790 = vmul.f32 %v780, %v785
    %v791 = vadd.f32 %v789, %v790
    %v792 = vtanh.pop %v791
    %v793 = vmul.f32 %v784, %v792
    %vm794 = vcmask 519170
    %795 = vst.msk [vmem:[#allocation3] sm:$0xc] %vm794, %v793
    %797 = vrot.lane.b32.xlu0 %v793, 64
    %v798 = vpop.permute.xlu0 %797
    %800 = vst.msk [vmem:[#allocation4 + $0xa] sm:$0xc] %vm794, %v798
    %v801 = vld [vmem:[#allocation2] sm:$0x30]
    %v802 = vld [vmem:[#allocation2 + $0x8] sm:$0x30]
    %v803 = vld [vmem:[#allocation2 + $0x10] sm:$0x30]
    %v804 = vld [vmem:[#allocation2 + $0x18] sm:$0x30]
    %v805 = vld [vmem:[#allocation10] sm:$0xff]
    %v806 = vld [vmem:[#allocation10 + $0x8] sm:$0xff]
    %v807 = vld [vmem:[#allocation10 + $0x10] sm:$0xff]
    %v808 = vld [vmem:[#allocation10 + $0x18] sm:$0xff]
    %v809 = vld [vmem:[#allocation10 + $0x20] sm:$0xff]
    %v810 = vld [vmem:[#allocation10 + $0x28] sm:$0xff]
    %v811 = vld [vmem:[#allocation10 + $0x30] sm:$0xff]
    %v812 = vld [vmem:[#allocation10 + $0x38] sm:$0xff]
    %v813 = vld [vmem:[#allocation10 + $0x40] sm:$0xff]
    %v814 = vld [vmem:[#allocation10 + $0x48] sm:$0xff]
    %v815 = vld [vmem:[#allocation10 + $0x50] sm:$0xff]
    %v816 = vld [vmem:[#allocation10 + $0x58] sm:$0xff]
    %v817 = vld [vmem:[#allocation10 + $0x60] sm:$0xff]
    %v818 = vld [vmem:[#allocation10 + $0x68] sm:$0xff]
    %v819 = vld [vmem:[#allocation10 + $0x70] sm:$0xff]
    %v820 = vld [vmem:[#allocation10 + $0x78] sm:$0xff]
    %v821 = vld [vmem:[#allocation10 + $0x80] sm:$0xff]
    %v822 = vld [vmem:[#allocation10 + $0x88] sm:$0xff]
    %v823 = vld [vmem:[#allocation10 + $0x90] sm:$0xff]
    %v824 = vld [vmem:[#allocation10 + $0x98] sm:$0xff]
    %v825 = vld [vmem:[#allocation10 + $0xa0] sm:$0xff]
    %v826 = vld [vmem:[#allocation10 + $0xa8] sm:$0xff]
    %v827 = vld [vmem:[#allocation10 + $0xb0] sm:$0xff]
    %v828 = vld [vmem:[#allocation10 + $0xb8] sm:$0xff]
    %v829 = vld [vmem:[#allocation10 + $0xc0] sm:$0xff]
    %v830 = vld [vmem:[#allocation10 + $0xc8] sm:$0xff]
    %v831 = vld [vmem:[#allocation10 + $0xd0] sm:$0xff]
    %v832 = vld [vmem:[#allocation10 + $0xd8] sm:$0xff]
    %v833 = vld [vmem:[#allocation10 + $0xe0] sm:$0xff]
    %v834 = vld [vmem:[#allocation10 + $0xe8] sm:$0xff]
    %v835 = vld [vmem:[#allocation10 + $0xf0] sm:$0xff]
    %v836 = vld [vmem:[#allocation10 + $0xf8] sm:$0xff]
    %v837 = vld [vmem:[#allocation10 + $0x100] sm:$0xff]
    %v838 = vld [vmem:[#allocation10 + $0x108] sm:$0xff]
    %v839 = vld [vmem:[#allocation10 + $0x110] sm:$0xff]
    %v840 = vld [vmem:[#allocation10 + $0x118] sm:$0xff]
    %v841 = vld [vmem:[#allocation10 + $0x120] sm:$0xff]
    %v842 = vld [vmem:[#allocation10 + $0x128] sm:$0xff]
    %v843 = vld [vmem:[#allocation10 + $0x130] sm:$0xff]
    %v844 = vld [vmem:[#allocation10 + $0x138] sm:$0xff]
    %v845 = vld [vmem:[#allocation10 + $0x140] sm:$0xff]
    %v846 = vld [vmem:[#allocation10 + $0x148] sm:$0xff]
    %v847 = vld [vmem:[#allocation10 + $0x150] sm:$0xff]
    %v848 = vld [vmem:[#allocation10 + $0x158] sm:$0xff]
    %v849 = vld [vmem:[#allocation10 + $0x160] sm:$0xff]
    %v850 = vld [vmem:[#allocation10 + $0x168] sm:$0xff]
    %v851 = vld [vmem:[#allocation10 + $0x170] sm:$0xff]
    %v852 = vld [vmem:[#allocation10 + $0x178] sm:$0xff]
    %v853 = vld [vmem:[#allocation10 + $0x180] sm:$0xff]
    %v854 = vld [vmem:[#allocation10 + $0x188] sm:$0xff]
    %v855 = vld [vmem:[#allocation10 + $0x190] sm:$0xff]
    %v856 = vld [vmem:[#allocation10 + $0x198] sm:$0xff]
    %v857 = vld [vmem:[#allocation10 + $0x1a0] sm:$0xff]
    %v858 = vld [vmem:[#allocation10 + $0x1a8] sm:$0xff]
    %v859 = vld [vmem:[#allocation10 + $0x1b0] sm:$0xff]
    %v860 = vld [vmem:[#allocation10 + $0x1b8] sm:$0xff]
    %v861 = vld [vmem:[#allocation10 + $0x1c0] sm:$0xff]
    %v862 = vld [vmem:[#allocation10 + $0x1c8] sm:$0xff]
    %v863 = vld [vmem:[#allocation10 + $0x1d0] sm:$0xff]
    %v864 = vld [vmem:[#allocation10 + $0x1d8] sm:$0xff]
    %v865 = vld [vmem:[#allocation10 + $0x1e0] sm:$0xff]
    %v866 = vld [vmem:[#allocation10 + $0x1e8] sm:$0xff]
    %v867 = vld [vmem:[#allocation10 + $0x1f0] sm:$0xff]
    %v868 = vld [vmem:[#allocation10 + $0x1f8] sm:$0xff]
    %v869 = vrot.slane %v793, 2
    %871 = vmatprep.subr.mxu0 %v806
    %872 = vmatpush1.msra.mxu0 %v805
    %873 = vmatprep.subr.mxu0 %v810
    %874 = vmatpush1.msra.mxu0 %v809
    %875 = vmatprep.subr.mxu0 %v814
    %876 = vmatpush1.msra.mxu0 %v813
    %877 = vmatprep.subr.mxu0 %v818
    %878 = vmatpush1.msra.mxu0 %v817
    %879 = vmatprep.subr.mxu0 %v822
    %880 = vmatpush1.msra.mxu0 %v821
    %881 = vmatprep.subr.mxu0 %v826
    %882 = vmatpush1.msra.mxu0 %v825
    %883 = vmatprep.subr.mxu0 %v830
    %884 = vmatpush1.msra.mxu0 %v829
    %885 = vmatprep.subr.mxu0 %v834
    %886 = vmatpush1.msra.mxu0 %v833
    %887 = vmatprep.subr.mxu0 %v838
    %888 = vmatpush1.msra.mxu0 %v837
    %889 = vmatprep.subr.mxu0 %v842
    %890 = vmatpush1.msra.mxu0 %v841
    %891 = vmatprep.subr.mxu0 %v846
    %892 = vmatpush1.msra.mxu0 %v845
    %893 = vmatprep.subr.mxu0 %v850
    %894 = vmatpush1.msra.mxu0 %v849
    %895 = vmatprep.subr.mxu0 %v854
    %896 = vmatpush1.msra.mxu0 %v853
    %897 = vmatprep.subr.mxu0 %v858
    %898 = vmatpush1.msra.mxu0 %v857
    %899 = vmatprep.subr.mxu0 %v862
    %900 = vmatpush1.msra.mxu0 %v861
    %901 = vmatprep.subr.mxu0 %v866
    %902 = vmatpush1.msra.mxu0 %v865
    %903 = vmatprep.subr.mxu0 0.0
    %904 = vmatpush1.msra.mxu0 0.0
    %905 = vmatprep.subr.mxu0 0.0
    %906 = vmatpush1.msra.mxu0 0.0
    %907 = vmatprep.subr.mxu0 0.0
    %908 = vmatpush1.msra.mxu0 0.0
    %909 = vmatprep.subr.mxu0 0.0
    %910 = vmatpush1.msra.mxu0 0.0
    %911 = vmatprep.subr.mxu0 0.0
    %912 = vmatpush1.msra.mxu0 0.0
    %913 = vmatprep.subr.mxu0 0.0
    %914 = vmatpush1.msra.mxu0 0.0
    %915 = vmatprep.subr.mxu0 0.0
    %916 = vmatpush1.msra.mxu0 0.0
    %917 = vmatprep.subr.mxu0 0.0
    %918 = vmatpush1.msra.mxu0 0.0
    %919 = vmatprep.subr.mxu0 0.0
    %920 = vmatpush1.msra.mxu0 0.0
    %921 = vmatprep.subr.mxu0 0.0
    %922 = vmatpush1.msra.mxu0 0.0
    %923 = vmatprep.subr.mxu0 0.0
    %924 = vmatpush1.msra.mxu0 0.0
    %925 = vmatprep.subr.mxu0 0.0
    %926 = vmatpush1.msra.mxu0 0.0
    %927 = vmatprep.subr.mxu0 0.0
    %928 = vmatpush1.msra.mxu0 0.0
    %929 = vmatprep.subr.mxu0 0.0
    %930 = vmatpush1.msra.mxu0 0.0
    %931 = vmatprep.subr.mxu0 0.0
    %932 = vmatpush1.msra.mxu0 0.0
    %933 = vmatprep.subr.mxu0 0.0
    %934 = vmatpush1.msra.mxu0 0.0
    %935 = vmatprep.mubr.f32.mxu0 0.0
    %936 = vmatmul.mubr.f32.gmra.mrb[0].mxu0 %v869
    %v937 = vpop.f32.mrb[0].mxu0
    %v938 = vadd.f32 0.0, %v937
    %v939 = vpop.f32.mrb[0].mxu0
    %v940 = vadd.f32 0.0, %v939
    %941 = vdwg.mxu0
    %942 = vmatprep.subr.mxu0 %v808
    %943 = vmatpush1.msra.mxu0 %v807
    %944 = vmatprep.subr.mxu0 %v812
    %945 = vmatpush1.msra.mxu0 %v811
    %946 = vmatprep.subr.mxu0 %v816
    %947 = vmatpush1.msra.mxu0 %v815
    %948 = vmatprep.subr.mxu0 %v820
    %949 = vmatpush1.msra.mxu0 %v819
    %950 = vmatprep.subr.mxu0 %v824
    %951 = vmatpush1.msra.mxu0 %v823
    %952 = vmatprep.subr.mxu0 %v828
    %953 = vmatpush1.msra.mxu0 %v827
    %954 = vmatprep.subr.mxu0 %v832
    %955 = vmatpush1.msra.mxu0 %v831
    %956 = vmatprep.subr.mxu0 %v836
    %957 = vmatpush1.msra.mxu0 %v835
    %958 = vmatprep.subr.mxu0 %v840
    %959 = vmatpush1.msra.mxu0 %v839
    %960 = vmatprep.subr.mxu0 %v844
    %961 = vmatpush1.msra.mxu0 %v843
    %962 = vmatprep.subr.mxu0 %v848
    %963 = vmatpush1.msra.mxu0 %v847
    %964 = vmatprep.subr.mxu0 %v852
    %965 = vmatpush1.msra.mxu0 %v851
    %966 = vmatprep.subr.mxu0 %v856
    %967 = vmatpush1.msra.mxu0 %v855
    %968 = vmatprep.subr.mxu0 %v860
    %969 = vmatpush1.msra.mxu0 %v859
    %970 = vmatprep.subr.mxu0 %v864
    %971 = vmatpush1.msra.mxu0 %v863
    %972 = vmatprep.subr.mxu0 %v868
    %973 = vmatpush1.msra.mxu0 %v867
    %974 = vmatprep.subr.mxu0 0.0
    %975 = vmatpush1.msra.mxu0 0.0
    %976 = vmatprep.subr.mxu0 0.0
    %977 = vmatpush1.msra.mxu0 0.0
    %978 = vmatprep.subr.mxu0 0.0
    %979 = vmatpush1.msra.mxu0 0.0
    %980 = vmatprep.subr.mxu0 0.0
    %981 = vmatpush1.msra.mxu0 0.0
    %982 = vmatprep.subr.mxu0 0.0
    %983 = vmatpush1.msra.mxu0 0.0
    %984 = vmatprep.subr.mxu0 0.0
    %985 = vmatpush1.msra.mxu0 0.0
    %986 = vmatprep.subr.mxu0 0.0
    %987 = vmatpush1.msra.mxu0 0.0
    %988 = vmatprep.subr.mxu0 0.0
    %989 = vmatpush1.msra.mxu0 0.0
    %990 = vmatprep.subr.mxu0 0.0
    %991 = vmatpush1.msra.mxu0 0.0
    %992 = vmatprep.subr.mxu0 0.0
    %993 = vmatpush1.msra.mxu0 0.0
    %994 = vmatprep.subr.mxu0 0.0
    %995 = vmatpush1.msra.mxu0 0.0
    %996 = vmatprep.subr.mxu0 0.0
    %997 = vmatpush1.msra.mxu0 0.0
    %998 = vmatprep.subr.mxu0 0.0
    %999 = vmatpush1.msra.mxu0 0.0
    %1000 = vmatprep.subr.mxu0 0.0
    %1001 = vmatpush1.msra.mxu0 0.0
    %1002 = vmatprep.subr.mxu0 0.0
    %1003 = vmatpush1.msra.mxu0 0.0
    %1004 = vmatprep.subr.mxu0 0.0
    %1005 = vmatpush1.msra.mxu0 0.0
    %1006 = vmatprep.mubr.f32.mxu0 0.0
    %1007 = vmatmul.mubr.f32.gmra.mrb[0].mxu0 %v869
    %v1008 = vpop.f32.mrb[0].mxu0
    %v1009 = vadd.f32 0.0, %v1008
    %v1010 = vpop.f32.mrb[0].mxu0
    %v1011 = vadd.f32 0.0, %v1010
    %1012 = vdwg.mxu0
    %v1017 = vrot.slane %v938, 4
    %v1018 = vrot.slane %v940, 4
    %v1019 = vrot.slane %v1009, 4
    %v1020 = vrot.slane %v1011, 4
    %v1025 = vadd.f32 %v801, %v1017
    %v1026 = vadd.f32 %v802, %v1018
    %v1027 = vadd.f32 %v803, %v1019
    %v1028 = vadd.f32 %v804, %v1020
    %v1029 = vxor.u32 %v1025, 2147483648
    %v1030 = vxor.u32 %v1026, 2147483648
    %v1031 = vxor.u32 %v1027, 2147483648
    %v1032 = vmul.f32 %v1029, 1.442695
    %v1033 = vpow.pop %v1032
    %v1034 = vmul.f32 %v1030, 1.442695
    %v1035 = vpow.pop %v1034
    %v1036 = vmul.f32 %v1031, 1.442695
    %v1037 = vpow.pop %v1036
    %v1038 = vadd.f32 %v1033, 1.0
    %v1039 = vadd.f32 %v1035, 1.0
    %v1040 = vadd.f32 %v1037, 1.0
    %v1041 = vrcp.pop %v1038
    %v1042 = vmul.f32 1.0, %v1041
    %v1043 = vrcp.pop %v1039
    %v1044 = vmul.f32 1.0, %v1043
    %v1045 = vrcp.pop %v1040
    %v1046 = vmul.f32 1.0, %v1045
    %v1047 = vtanh.pop %v1028
    %v1049 = vrot.slane %v791, 6
    %v1051 = vmul.f32 %v1044, %v1049
    %v1052 = vmul.f32 %v1042, %v1047
    %v1053 = vadd.f32 %v1051, %v1052
    %v1054 = vtanh.pop %v1053
    %v1055 = vmul.f32 %v1046, %v1054
    %vm1056 = vcmask 521220
    %1057 = vst.msk [vmem:[#allocation3] sm:$0x30] %vm1056, %v1055
    %1059 = vrot.lane.b32.xlu0 %v1055, 64
    %v1060 = vpop.permute.xlu0 %1059
    %1062 = vst.msk [vmem:[#allocation4 + $0x6] sm:$0x30] %vm1056, %v1060
    %v1063 = vld [vmem:[#allocation2] sm:$0xc0]
    %v1064 = vld [vmem:[#allocation2 + $0x8] sm:$0xc0]
    %v1065 = vld [vmem:[#allocation2 + $0x10] sm:$0xc0]
    %v1066 = vld [vmem:[#allocation2 + $0x18] sm:$0xc0]
    %v1067 = vld [vmem:[#allocation10] sm:$0xff]
    %v1068 = vld [vmem:[#allocation10 + $0x8] sm:$0xff]
    %v1069 = vld [vmem:[#allocation10 + $0x10] sm:$0xff]
    %v1070 = vld [vmem:[#allocation10 + $0x18] sm:$0xff]
    %v1071 = vld [vmem:[#allocation10 + $0x20] sm:$0xff]
    %v1072 = vld [vmem:[#allocation10 + $0x28] sm:$0xff]
    %v1073 = vld [vmem:[#allocation10 + $0x30] sm:$0xff]
    %v1074 = vld [vmem:[#allocation10 + $0x38] sm:$0xff]
    %v1075 = vld [vmem:[#allocation10 + $0x40] sm:$0xff]
    %v1076 = vld [vmem:[#allocation10 + $0x48] sm:$0xff]
    %v1077 = vld [vmem:[#allocation10 + $0x50] sm:$0xff]
    %v1078 = vld [vmem:[#allocation10 + $0x58] sm:$0xff]
    %v1079 = vld [vmem:[#allocation10 + $0x60] sm:$0xff]
    %v1080 = vld [vmem:[#allocation10 + $0x68] sm:$0xff]
    %v1081 = vld [vmem:[#allocation10 + $0x70] sm:$0xff]
    %v1082 = vld [vmem:[#allocation10 + $0x78] sm:$0xff]
    %v1083 = vld [vmem:[#allocation10 + $0x80] sm:$0xff]
    %v1084 = vld [vmem:[#allocation10 + $0x88] sm:$0xff]
    %v1085 = vld [vmem:[#allocation10 + $0x90] sm:$0xff]
    %v1086 = vld [vmem:[#allocation10 + $0x98] sm:$0xff]
    %v1087 = vld [vmem:[#allocation10 + $0xa0] sm:$0xff]
    %v1088 = vld [vmem:[#allocation10 + $0xa8] sm:$0xff]
    %v1089 = vld [vmem:[#allocation10 + $0xb0] sm:$0xff]
    %v1090 = vld [vmem:[#allocation10 + $0xb8] sm:$0xff]
    %v1091 = vld [vmem:[#allocation10 + $0xc0] sm:$0xff]
    %v1092 = vld [vmem:[#allocation10 + $0xc8] sm:$0xff]
    %v1093 = vld [vmem:[#allocation10 + $0xd0] sm:$0xff]
    %v1094 = vld [vmem:[#allocation10 + $0xd8] sm:$0xff]
    %v1095 = vld [vmem:[#allocation10 + $0xe0] sm:$0xff]
    %v1096 = vld [vmem:[#allocation10 + $0xe8] sm:$0xff]
    %v1097 = vld [vmem:[#allocation10 + $0xf0] sm:$0xff]
    %v1098 = vld [vmem:[#allocation10 + $0xf8] sm:$0xff]
    %v1099 = vld [vmem:[#allocation10 + $0x100] sm:$0xff]
    %v1100 = vld [vmem:[#allocation10 + $0x108] sm:$0xff]
    %v1101 = vld [vmem:[#allocation10 + $0x110] sm:$0xff]
    %v1102 = vld [vmem:[#allocation10 + $0x118] sm:$0xff]
    %v1103 = vld [vmem:[#allocation10 + $0x120] sm:$0xff]
    %v1104 = vld [vmem:[#allocation10 + $0x128] sm:$0xff]
    %v1105 = vld [vmem:[#allocation10 + $0x130] sm:$0xff]
    %v1106 = vld [vmem:[#allocation10 + $0x138] sm:$0xff]
    %v1107 = vld [vmem:[#allocation10 + $0x140] sm:$0xff]
    %v1108 = vld [vmem:[#allocation10 + $0x148] sm:$0xff]
    %v1109 = vld [vmem:[#allocation10 + $0x150] sm:$0xff]
    %v1110 = vld [vmem:[#allocation10 + $0x158] sm:$0xff]
    %v1111 = vld [vmem:[#allocation10 + $0x160] sm:$0xff]
    %v1112 = vld [vmem:[#allocation10 + $0x168] sm:$0xff]
    %v1113 = vld [vmem:[#allocation10 + $0x170] sm:$0xff]
    %v1114 = vld [vmem:[#allocation10 + $0x178] sm:$0xff]
    %v1115 = vld [vmem:[#allocation10 + $0x180] sm:$0xff]
    %v1116 = vld [vmem:[#allocation10 + $0x188] sm:$0xff]
    %v1117 = vld [vmem:[#allocation10 + $0x190] sm:$0xff]
    %v1118 = vld [vmem:[#allocation10 + $0x198] sm:$0xff]
    %v1119 = vld [vmem:[#allocation10 + $0x1a0] sm:$0xff]
    %v1120 = vld [vmem:[#allocation10 + $0x1a8] sm:$0xff]
    %v1121 = vld [vmem:[#allocation10 + $0x1b0] sm:$0xff]
    %v1122 = vld [vmem:[#allocation10 + $0x1b8] sm:$0xff]
    %v1123 = vld [vmem:[#allocation10 + $0x1c0] sm:$0xff]
    %v1124 = vld [vmem:[#allocation10 + $0x1c8] sm:$0xff]
    %v1125 = vld [vmem:[#allocation10 + $0x1d0] sm:$0xff]
    %v1126 = vld [vmem:[#allocation10 + $0x1d8] sm:$0xff]
    %v1127 = vld [vmem:[#allocation10 + $0x1e0] sm:$0xff]
    %v1128 = vld [vmem:[#allocation10 + $0x1e8] sm:$0xff]
    %v1129 = vld [vmem:[#allocation10 + $0x1f0] sm:$0xff]
    %v1130 = vld [vmem:[#allocation10 + $0x1f8] sm:$0xff]
    %v1131 = vrot.slane %v1055, 4
    %1133 = vmatprep.subr.mxu0 %v1068
    %1134 = vmatpush1.msra.mxu0 %v1067
    %1135 = vmatprep.subr.mxu0 %v1072
    %1136 = vmatpush1.msra.mxu0 %v1071
    %1137 = vmatprep.subr.mxu0 %v1076
    %1138 = vmatpush1.msra.mxu0 %v1075
    %1139 = vmatprep.subr.mxu0 %v1080
    %1140 = vmatpush1.msra.mxu0 %v1079
    %1141 = vmatprep.subr.mxu0 %v1084
    %1142 = vmatpush1.msra.mxu0 %v1083
    %1143 = vmatprep.subr.mxu0 %v1088
    %1144 = vmatpush1.msra.mxu0 %v1087
    %1145 = vmatprep.subr.mxu0 %v1092
    %1146 = vmatpush1.msra.mxu0 %v1091
    %1147 = vmatprep.subr.mxu0 %v1096
    %1148 = vmatpush1.msra.mxu0 %v1095
    %1149 = vmatprep.subr.mxu0 %v1100
    %1150 = vmatpush1.msra.mxu0 %v1099
    %1151 = vmatprep.subr.mxu0 %v1104
    %1152 = vmatpush1.msra.mxu0 %v1103
    %1153 = vmatprep.subr.mxu0 %v1108
    %1154 = vmatpush1.msra.mxu0 %v1107
    %1155 = vmatprep.subr.mxu0 %v1112
    %1156 = vmatpush1.msra.mxu0 %v1111
    %1157 = vmatprep.subr.mxu0 %v1116
    %1158 = vmatpush1.msra.mxu0 %v1115
    %1159 = vmatprep.subr.mxu0 %v1120
    %1160 = vmatpush1.msra.mxu0 %v1119
    %1161 = vmatprep.subr.mxu0 %v1124
    %1162 = vmatpush1.msra.mxu0 %v1123
    %1163 = vmatprep.subr.mxu0 %v1128
    %1164 = vmatpush1.msra.mxu0 %v1127
    %1165 = vmatprep.subr.mxu0 0.0
    %1166 = vmatpush1.msra.mxu0 0.0
    %1167 = vmatprep.subr.mxu0 0.0
    %1168 = vmatpush1.msra.mxu0 0.0
    %1169 = vmatprep.subr.mxu0 0.0
    %1170 = vmatpush1.msra.mxu0 0.0
    %1171 = vmatprep.subr.mxu0 0.0
    %1172 = vmatpush1.msra.mxu0 0.0
    %1173 = vmatprep.subr.mxu0 0.0
    %1174 = vmatpush1.msra.mxu0 0.0
    %1175 = vmatprep.subr.mxu0 0.0
    %1176 = vmatpush1.msra.mxu0 0.0
    %1177 = vmatprep.subr.mxu0 0.0
    %1178 = vmatpush1.msra.mxu0 0.0
    %1179 = vmatprep.subr.mxu0 0.0
    %1180 = vmatpush1.msra.mxu0 0.0
    %1181 = vmatprep.subr.mxu0 0.0
    %1182 = vmatpush1.msra.mxu0 0.0
    %1183 = vmatprep.subr.mxu0 0.0
    %1184 = vmatpush1.msra.mxu0 0.0
    %1185 = vmatprep.subr.mxu0 0.0
    %1186 = vmatpush1.msra.mxu0 0.0
    %1187 = vmatprep.subr.mxu0 0.0
    %1188 = vmatpush1.msra.mxu0 0.0
    %1189 = vmatprep.subr.mxu0 0.0
    %1190 = vmatpush1.msra.mxu0 0.0
    %1191 = vmatprep.subr.mxu0 0.0
    %1192 = vmatpush1.msra.mxu0 0.0
    %1193 = vmatprep.subr.mxu0 0.0
    %1194 = vmatpush1.msra.mxu0 0.0
    %1195 = vmatprep.subr.mxu0 0.0
    %1196 = vmatpush1.msra.mxu0 0.0
    %1197 = vmatprep.mubr.f32.mxu0 0.0
    %1198 = vmatmul.mubr.f32.gmra.mrb[0].mxu0 %v1131
    %v1199 = vpop.f32.mrb[0].mxu0
    %v1200 = vadd.f32 0.0, %v1199
    %v1201 = vpop.f32.mrb[0].mxu0
    %v1202 = vadd.f32 0.0, %v1201
    %1203 = vdwg.mxu0
    %1204 = vmatprep.subr.mxu0 %v1070
    %1205 = vmatpush1.msra.mxu0 %v1069
    %1206 = vmatprep.subr.mxu0 %v1074
    %1207 = vmatpush1.msra.mxu0 %v1073
    %1208 = vmatprep.subr.mxu0 %v1078
    %1209 = vmatpush1.msra.mxu0 %v1077
    %1210 = vmatprep.subr.mxu0 %v1082
    %1211 = vmatpush1.msra.mxu0 %v1081
    %1212 = vmatprep.subr.mxu0 %v1086
    %1213 = vmatpush1.msra.mxu0 %v1085
    %1214 = vmatprep.subr.mxu0 %v1090
    %1215 = vmatpush1.msra.mxu0 %v1089
    %1216 = vmatprep.subr.mxu0 %v1094
    %1217 = vmatpush1.msra.mxu0 %v1093
    %1218 = vmatprep.subr.mxu0 %v1098
    %1219 = vmatpush1.msra.mxu0 %v1097
    %1220 = vmatprep.subr.mxu0 %v1102
    %1221 = vmatpush1.msra.mxu0 %v1101
    %1222 = vmatprep.subr.mxu0 %v1106
    %1223 = vmatpush1.msra.mxu0 %v1105
    %1224 = vmatprep.subr.mxu0 %v1110
    %1225 = vmatpush1.msra.mxu0 %v1109
    %1226 = vmatprep.subr.mxu0 %v1114
    %1227 = vmatpush1.msra.mxu0 %v1113
    %1228 = vmatprep.subr.mxu0 %v1118
    %1229 = vmatpush1.msra.mxu0 %v1117
    %1230 = vmatprep.subr.mxu0 %v1122
    %1231 = vmatpush1.msra.mxu0 %v1121
    %1232 = vmatprep.subr.mxu0 %v1126
    %1233 = vmatpush1.msra.mxu0 %v1125
    %1234 = vmatprep.subr.mxu0 %v1130
    %1235 = vmatpush1.msra.mxu0 %v1129
    %1236 = vmatprep.subr.mxu0 0.0
    %1237 = vmatpush1.msra.mxu0 0.0
    %1238 = vmatprep.subr.mxu0 0.0
    %1239 = vmatpush1.msra.mxu0 0.0
    %1240 = vmatprep.subr.mxu0 0.0
    %1241 = vmatpush1.msra.mxu0 0.0
    %1242 = vmatprep.subr.mxu0 0.0
    %1243 = vmatpush1.msra.mxu0 0.0
    %1244 = vmatprep.subr.mxu0 0.0
    %1245 = vmatpush1.msra.mxu0 0.0
    %1246 = vmatprep.subr.mxu0 0.0
    %1247 = vmatpush1.msra.mxu0 0.0
    %1248 = vmatprep.subr.mxu0 0.0
    %1249 = vmatpush1.msra.mxu0 0.0
    %1250 = vmatprep.subr.mxu0 0.0
    %1251 = vmatpush1.msra.mxu0 0.0
    %1252 = vmatprep.subr.mxu0 0.0
    %1253 = vmatpush1.msra.mxu0 0.0
    %1254 = vmatprep.subr.mxu0 0.0
    %1255 = vmatpush1.msra.mxu0 0.0
    %1256 = vmatprep.subr.mxu0 0.0
    %1257 = vmatpush1.msra.mxu0 0.0
    %1258 = vmatprep.subr.mxu0 0.0
    %1259 = vmatpush1.msra.mxu0 0.0
    %1260 = vmatprep.subr.mxu0 0.0
    %1261 = vmatpush1.msra.mxu0 0.0
    %1262 = vmatprep.subr.mxu0 0.0
    %1263 = vmatpush1.msra.mxu0 0.0
    %1264 = vmatprep.subr.mxu0 0.0
    %1265 = vmatpush1.msra.mxu0 0.0
    %1266 = vmatprep.subr.mxu0 0.0
    %1267 = vmatpush1.msra.mxu0 0.0
    %1268 = vmatprep.mubr.f32.mxu0 0.0
    %1269 = vmatmul.mubr.f32.gmra.mrb[0].mxu0 %v1131
    %v1270 = vpop.f32.mrb[0].mxu0
    %v1271 = vadd.f32 0.0, %v1270
    %v1272 = vpop.f32.mrb[0].mxu0
    %v1273 = vadd.f32 0.0, %v1272
    %1274 = vdwg.mxu0
    %v1279 = vrot.slane %v1200, 2
    %v1280 = vrot.slane %v1202, 2
    %v1281 = vrot.slane %v1271, 2
    %v1282 = vrot.slane %v1273, 2
    %v1287 = vadd.f32 %v1063, %v1279
    %v1288 = vadd.f32 %v1064, %v1280
    %v1289 = vadd.f32 %v1065, %v1281
    %v1290 = vadd.f32 %v1066, %v1282
    %v1291 = vxor.u32 %v1287, 2147483648
    %v1292 = vxor.u32 %v1288, 2147483648
    %v1293 = vxor.u32 %v1289, 2147483648
    %v1294 = vmul.f32 %v1291, 1.442695
    %v1295 = vpow.pop %v1294
    %v1296 = vmul.f32 %v1292, 1.442695
    %v1297 = vpow.pop %v1296
    %v1298 = vmul.f32 %v1293, 1.442695
    %v1299 = vpow.pop %v1298
    %v1300 = vadd.f32 %v1295, 1.0
    %v1301 = vadd.f32 %v1297, 1.0
    %v1302 = vadd.f32 %v1299, 1.0
    %v1303 = vrcp.pop %v1300
    %v1304 = vmul.f32 1.0, %v1303
    %v1305 = vrcp.pop %v1301
    %v1306 = vmul.f32 1.0, %v1305
    %v1307 = vrcp.pop %v1302
    %v1308 = vmul.f32 1.0, %v1307
    %v1309 = vtanh.pop %v1290
    %v1311 = vrot.slane %v1053, 6
    %v1313 = vmul.f32 %v1306, %v1311
    %v1314 = vmul.f32 %v1304, %v1309
    %v1315 = vadd.f32 %v1313, %v1314
    %v1316 = vtanh.pop %v1315
    %v1317 = vmul.f32 %v1308, %v1316
    %vm1318 = vcmask 523270
    %1319 = vst.msk [vmem:[#allocation3] sm:$0xc0] %vm1318, %v1317
    %1321 = vrot.lane.b32.xlu0 %v1317, 64
    %v1322 = vpop.permute.xlu0 %1321
    %1324 = vst.msk [vmem:[#allocation4 + $0x2] sm:$0xc0] %vm1318, %v1322
    %v1325 = vld [vmem:[#allocation2 + $0x20] sm:$0x3]
    %v1326 = vld [vmem:[#allocation2 + $0x28] sm:$0x3]
    %v1327 = vld [vmem:[#allocation2 + $0x30] sm:$0x3]
    %v1328 = vld [vmem:[#allocation2 + $0x38] sm:$0x3]
    %v1329 = vld [vmem:[#allocation10] sm:$0xff]
    %v1330 = vld [vmem:[#allocation10 + $0x8] sm:$0xff]
    %v1331 = vld [vmem:[#allocation10 + $0x10] sm:$0xff]
    %v1332 = vld [vmem:[#allocation10 + $0x18] sm:$0xff]
    %v1333 = vld [vmem:[#allocation10 + $0x20] sm:$0xff]
    %v1334 = vld [vmem:[#allocation10 + $0x28] sm:$0xff]
    %v1335 = vld [vmem:[#allocation10 + $0x30] sm:$0xff]
    %v1336 = vld [vmem:[#allocation10 + $0x38] sm:$0xff]
    %v1337 = vld [vmem:[#allocation10 + $0x40] sm:$0xff]
    %v1338 = vld [vmem:[#allocation10 + $0x48] sm:$0xff]
    %v1339 = vld [vmem:[#allocation10 + $0x50] sm:$0xff]
    %v1340 = vld [vmem:[#allocation10 + $0x58] sm:$0xff]
    %v1341 = vld [vmem:[#allocation10 + $0x60] sm:$0xff]
    %v1342 = vld [vmem:[#allocation10 + $0x68] sm:$0xff]
    %v1343 = vld [vmem:[#allocation10 + $0x70] sm:$0xff]
    %v1344 = vld [vmem:[#allocation10 + $0x78] sm:$0xff]
    %v1345 = vld [vmem:[#allocation10 + $0x80] sm:$0xff]
    %v1346 = vld [vmem:[#allocation10 + $0x88] sm:$0xff]
    %v1347 = vld [vmem:[#allocation10 + $0x90] sm:$0xff]
    %v1348 = vld [vmem:[#allocation10 + $0x98] sm:$0xff]
    %v1349 = vld [vmem:[#allocation10 + $0xa0] sm:$0xff]
    %v1350 = vld [vmem:[#allocation10 + $0xa8] sm:$0xff]
    %v1351 = vld [vmem:[#allocation10 + $0xb0] sm:$0xff]
    %v1352 = vld [vmem:[#allocation10 + $0xb8] sm:$0xff]
    %v1353 = vld [vmem:[#allocation10 + $0xc0] sm:$0xff]
    %v1354 = vld [vmem:[#allocation10 + $0xc8] sm:$0xff]
    %v1355 = vld [vmem:[#allocation10 + $0xd0] sm:$0xff]
    %v1356 = vld [vmem:[#allocation10 + $0xd8] sm:$0xff]
    %v1357 = vld [vmem:[#allocation10 + $0xe0] sm:$0xff]
    %v1358 = vld [vmem:[#allocation10 + $0xe8] sm:$0xff]
    %v1359 = vld [vmem:[#allocation10 + $0xf0] sm:$0xff]
    %v1360 = vld [vmem:[#allocation10 + $0xf8] sm:$0xff]
    %v1361 = vld [vmem:[#allocation10 + $0x100] sm:$0xff]
    %v1362 = vld [vmem:[#allocation10 + $0x108] sm:$0xff]
    %v1363 = vld [vmem:[#allocation10 + $0x110] sm:$0xff]
    %v1364 = vld [vmem:[#allocation10 + $0x118] sm:$0xff]
    %v1365 = vld [vmem:[#allocation10 + $0x120] sm:$0xff]
    %v1366 = vld [vmem:[#allocation10 + $0x128] sm:$0xff]
    %v1367 = vld [vmem:[#allocation10 + $0x130] sm:$0xff]
    %v1368 = vld [vmem:[#allocation10 + $0x138] sm:$0xff]
    %v1369 = vld [vmem:[#allocation10 + $0x140] sm:$0xff]
    %v1370 = vld [vmem:[#allocation10 + $0x148] sm:$0xff]
    %v1371 = vld [vmem:[#allocation10 + $0x150] sm:$0xff]
    %v1372 = vld [vmem:[#allocation10 + $0x158] sm:$0xff]
    %v1373 = vld [vmem:[#allocation10 + $0x160] sm:$0xff]
    %v1374 = vld [vmem:[#allocation10 + $0x168] sm:$0xff]
    %v1375 = vld [vmem:[#allocation10 + $0x170] sm:$0xff]
    %v1376 = vld [vmem:[#allocation10 + $0x178] sm:$0xff]
    %v1377 = vld [vmem:[#allocation10 + $0x180] sm:$0xff]
    %v1378 = vld [vmem:[#allocation10 + $0x188] sm:$0xff]
    %v1379 = vld [vmem:[#allocation10 + $0x190] sm:$0xff]
    %v1380 = vld [vmem:[#allocation10 + $0x198] sm:$0xff]
    %v1381 = vld [vmem:[#allocation10 + $0x1a0] sm:$0xff]
    %v1382 = vld [vmem:[#allocation10 + $0x1a8] sm:$0xff]
    %v1383 = vld [vmem:[#allocation10 + $0x1b0] sm:$0xff]
    %v1384 = vld [vmem:[#allocation10 + $0x1b8] sm:$0xff]
    %v1385 = vld [vmem:[#allocation10 + $0x1c0] sm:$0xff]
    %v1386 = vld [vmem:[#allocation10 + $0x1c8] sm:$0xff]
    %v1387 = vld [vmem:[#allocation10 + $0x1d0] sm:$0xff]
    %v1388 = vld [vmem:[#allocation10 + $0x1d8] sm:$0xff]
    %v1389 = vld [vmem:[#allocation10 + $0x1e0] sm:$0xff]
    %v1390 = vld [vmem:[#allocation10 + $0x1e8] sm:$0xff]
    %v1391 = vld [vmem:[#allocation10 + $0x1f0] sm:$0xff]
    %v1392 = vld [vmem:[#allocation10 + $0x1f8] sm:$0xff]
    %v1393 = vrot.slane %v1317, 6
    %1395 = vmatprep.subr.mxu0 %v1330
    %1396 = vmatpush1.msra.mxu0 %v1329
    %1397 = vmatprep.subr.mxu0 %v1334
    %1398 = vmatpush1.msra.mxu0 %v1333
    %1399 = vmatprep.subr.mxu0 %v1338
    %1400 = vmatpush1.msra.mxu0 %v1337
    %1401 = vmatprep.subr.mxu0 %v1342
    %1402 = vmatpush1.msra.mxu0 %v1341
    %1403 = vmatprep.subr.mxu0 %v1346
    %1404 = vmatpush1.msra.mxu0 %v1345
    %1405 = vmatprep.subr.mxu0 %v1350
    %1406 = vmatpush1.msra.mxu0 %v1349
    %1407 = vmatprep.subr.mxu0 %v1354
    %1408 = vmatpush1.msra.mxu0 %v1353
    %1409 = vmatprep.subr.mxu0 %v1358
    %1410 = vmatpush1.msra.mxu0 %v1357
    %1411 = vmatprep.subr.mxu0 %v1362
    %1412 = vmatpush1.msra.mxu0 %v1361
    %1413 = vmatprep.subr.mxu0 %v1366
    %1414 = vmatpush1.msra.mxu0 %v1365
    %1415 = vmatprep.subr.mxu0 %v1370
    %1416 = vmatpush1.msra.mxu0 %v1369
    %1417 = vmatprep.subr.mxu0 %v1374
    %1418 = vmatpush1.msra.mxu0 %v1373
    %1419 = vmatprep.subr.mxu0 %v1378
    %1420 = vmatpush1.msra.mxu0 %v1377
    %1421 = vmatprep.subr.mxu0 %v1382
    %1422 = vmatpush1.msra.mxu0 %v1381
    %1423 = vmatprep.subr.mxu0 %v1386
    %1424 = vmatpush1.msra.mxu0 %v1385
    %1425 = vmatprep.subr.mxu0 %v1390
    %1426 = vmatpush1.msra.mxu0 %v1389
    %1427 = vmatprep.subr.mxu0 0.0
    %1428 = vmatpush1.msra.mxu0 0.0
    %1429 = vmatprep.subr.mxu0 0.0
    %1430 = vmatpush1.msra.mxu0 0.0
    %1431 = vmatprep.subr.mxu0 0.0
    %1432 = vmatpush1.msra.mxu0 0.0
    %1433 = vmatprep.subr.mxu0 0.0
    %1434 = vmatpush1.msra.mxu0 0.0
    %1435 = vmatprep.subr.mxu0 0.0
    %1436 = vmatpush1.msra.mxu0 0.0
    %1437 = vmatprep.subr.mxu0 0.0
    %1438 = vmatpush1.msra.mxu0 0.0
    %1439 = vmatprep.subr.mxu0 0.0
    %1440 = vmatpush1.msra.mxu0 0.0
    %1441 = vmatprep.subr.mxu0 0.0
    %1442 = vmatpush1.msra.mxu0 0.0
    %1443 = vmatprep.subr.mxu0 0.0
    %1444 = vmatpush1.msra.mxu0 0.0
    %1445 = vmatprep.subr.mxu0 0.0
    %1446 = vmatpush1.msra.mxu0 0.0
    %1447 = vmatprep.subr.mxu0 0.0
    %1448 = vmatpush1.msra.mxu0 0.0
    %1449 = vmatprep.subr.mxu0 0.0
    %1450 = vmatpush1.msra.mxu0 0.0
    %1451 = vmatprep.subr.mxu0 0.0
    %1452 = vmatpush1.msra.mxu0 0.0
    %1453 = vmatprep.subr.mxu0 0.0
    %1454 = vmatpush1.msra.mxu0 0.0
    %1455 = vmatprep.subr.mxu0 0.0
    %1456 = vmatpush1.msra.mxu0 0.0
    %1457 = vmatprep.subr.mxu0 0.0
    %1458 = vmatpush1.msra.mxu0 0.0
    %1459 = vmatprep.mubr.f32.mxu0 0.0
    %1460 = vmatmul.mubr.f32.gmra.mrb[0].mxu0 %v1393
    %v1461 = vpop.f32.mrb[0].mxu0
    %v1462 = vadd.f32 0.0, %v1461
    %v1463 = vpop.f32.mrb[0].mxu0
    %v1464 = vadd.f32 0.0, %v1463
    %1465 = vdwg.mxu0
    %1466 = vmatprep.subr.mxu0 %v1332
    %1467 = vmatpush1.msra.mxu0 %v1331
    %1468 = vmatprep.subr.mxu0 %v1336
    %1469 = vmatpush1.msra.mxu0 %v1335
    %1470 = vmatprep.subr.mxu0 %v1340
    %1471 = vmatpush1.msra.mxu0 %v1339
    %1472 = vmatprep.subr.mxu0 %v1344
    %1473 = vmatpush1.msra.mxu0 %v1343
    %1474 = vmatprep.subr.mxu0 %v1348
    %1475 = vmatpush1.msra.mxu0 %v1347
    %1476 = vmatprep.subr.mxu0 %v1352
    %1477 = vmatpush1.msra.mxu0 %v1351
    %1478 = vmatprep.subr.mxu0 %v1356
    %1479 = vmatpush1.msra.mxu0 %v1355
    %1480 = vmatprep.subr.mxu0 %v1360
    %1481 = vmatpush1.msra.mxu0 %v1359
    %1482 = vmatprep.subr.mxu0 %v1364
    %1483 = vmatpush1.msra.mxu0 %v1363
    %1484 = vmatprep.subr.mxu0 %v1368
    %1485 = vmatpush1.msra.mxu0 %v1367
    %1486 = vmatprep.subr.mxu0 %v1372
    %1487 = vmatpush1.msra.mxu0 %v1371
    %1488 = vmatprep.subr.mxu0 %v1376
    %1489 = vmatpush1.msra.mxu0 %v1375
    %1490 = vmatprep.subr.mxu0 %v1380
    %1491 = vmatpush1.msra.mxu0 %v1379
    %1492 = vmatprep.subr.mxu0 %v1384
    %1493 = vmatpush1.msra.mxu0 %v1383
    %1494 = vmatprep.subr.mxu0 %v1388
    %1495 = vmatpush1.msra.mxu0 %v1387
    %1496 = vmatprep.subr.mxu0 %v1392
    %1497 = vmatpush1.msra.mxu0 %v1391
    %1498 = vmatprep.subr.mxu0 0.0
    %1499 = vmatpush1.msra.mxu0 0.0
    %1500 = vmatprep.subr.mxu0 0.0
    %1501 = vmatpush1.msra.mxu0 0.0
    %1502 = vmatprep.subr.mxu0 0.0
    %1503 = vmatpush1.msra.mxu0 0.0
    %1504 = vmatprep.subr.mxu0 0.0
    %1505 = vmatpush1.msra.mxu0 0.0
    %1506 = vmatprep.subr.mxu0 0.0
    %1507 = vmatpush1.msra.mxu0 0.0
    %1508 = vmatprep.subr.mxu0 0.0
    %1509 = vmatpush1.msra.mxu0 0.0
    %1510 = vmatprep.subr.mxu0 0.0
    %1511 = vmatpush1.msra.mxu0 0.0
    %1512 = vmatprep.subr.mxu0 0.0
    %1513 = vmatpush1.msra.mxu0 0.0
    %1514 = vmatprep.subr.mxu0 0.0
    %1515 = vmatpush1.msra.mxu0 0.0
    %1516 = vmatprep.subr.mxu0 0.0
    %1517 = vmatpush1.msra.mxu0 0.0
    %1518 = vmatprep.subr.mxu0 0.0
    %1519 = vmatpush1.msra.mxu0 0.0
    %1520 = vmatprep.subr.mxu0 0.0
    %1521 = vmatpush1.msra.mxu0 0.0
    %1522 = vmatprep.subr.mxu0 0.0
    %1523 = vmatpush1.msra.mxu0 0.0
    %1524 = vmatprep.subr.mxu0 0.0
    %1525 = vmatpush1.msra.mxu0 0.0
    %1526 = vmatprep.subr.mxu0 0.0
    %1527 = vmatpush1.msra.mxu0 0.0
    %1528 = vmatprep.subr.mxu0 0.0
    %1529 = vmatpush1.msra.mxu0 0.0
    %1530 = vmatprep.mubr.f32.mxu0 0.0
    %1531 = vmatmul.mubr.f32.gmra.mrb[0].mxu0 %v1393
    %v1532 = vpop.f32.mrb[0].mxu0
    %v1533 = vadd.f32 0.0, %v1532
    %v1534 = vpop.f32.mrb[0].mxu0
    %v1535 = vadd.f32 0.0, %v1534
    %1536 = vdwg.mxu0
    %v1537 = vadd.f32 %v1325, %v1462
    %v1538 = vadd.f32 %v1326, %v1464
    %v1539 = vadd.f32 %v1327, %v1533
    %v1540 = vadd.f32 %v1328, %v1535
    %v1541 = vxor.u32 %v1537, 2147483648
    %v1542 = vxor.u32 %v1538, 2147483648
    %v1543 = vxor.u32 %v1539, 2147483648
    %v1544 = vmul.f32 %v1541, 1.442695
    %v1545 = vpow.pop %v1544
    %v1546 = vmul.f32 %v1542, 1.442695
    %v1547 = vpow.pop %v1546
    %v1548 = vmul.f32 %v1543, 1.442695
    %v1549 = vpow.pop %v1548
    %v1550 = vadd.f32 %v1545, 1.0
    %v1551 = vadd.f32 %v1547, 1.0
    %v1552 = vadd.f32 %v1549, 1.0
    %v1553 = vrcp.pop %v1550
    %v1554 = vmul.f32 1.0, %v1553
    %v1555 = vrcp.pop %v1551
    %v1556 = vmul.f32 1.0, %v1555
    %v1557 = vrcp.pop %v1552
    %v1558 = vmul.f32 1.0, %v1557
    %v1559 = vtanh.pop %v1540
    %v1561 = vrot.slane %v1315, 6
    %v1563 = vmul.f32 %v1556, %v1561
    %v1564 = vmul.f32 %v1554, %v1559
    %v1565 = vadd.f32 %v1563, %v1564
    %v1566 = vtanh.pop %v1565
    %v1567 = vmul.f32 %v1558, %v1566
    %1568 = vst.msk [vmem:[#allocation3 + $0x8] sm:$0x3] %vm534, %v1567
    %1570 = vrot.lane.b32.xlu0 %v1567, 64
    %v1571 = vpop.permute.xlu0 %1570
    %1573 = vst.msk [vmem:[#allocation4 + $0x6] sm:$0x3] %vm534, %v1571
    %v1574 = vld [vmem:[#allocation2 + $0x20] sm:$0xc]
    %v1575 = vld [vmem:[#allocation2 + $0x28] sm:$0xc]
    %v1576 = vld [vmem:[#allocation2 + $0x30] sm:$0xc]
    %v1577 = vld [vmem:[#allocation2 + $0x38] sm:$0xc]
    %v1578 = vld [vmem:[#allocation10] sm:$0xff]
    %v1579 = vld [vmem:[#allocation10 + $0x8] sm:$0xff]
    %v1580 = vld [vmem:[#allocation10 + $0x10] sm:$0xff]
    %v1581 = vld [vmem:[#allocation10 + $0x18] sm:$0xff]
    %v1582 = vld [vmem:[#allocation10 + $0x20] sm:$0xff]
    %v1583 = vld [vmem:[#allocation10 + $0x28] sm:$0xff]
    %v1584 = vld [vmem:[#allocation10 + $0x30] sm:$0xff]
    %v1585 = vld [vmem:[#allocation10 + $0x38] sm:$0xff]
    %v1586 = vld [vmem:[#allocation10 + $0x40] sm:$0xff]
    %v1587 = vld [vmem:[#allocation10 + $0x48] sm:$0xff]
    %v1588 = vld [vmem:[#allocation10 + $0x50] sm:$0xff]
    %v1589 = vld [vmem:[#allocation10 + $0x58] sm:$0xff]
    %v1590 = vld [vmem:[#allocation10 + $0x60] sm:$0xff]
    %v1591 = vld [vmem:[#allocation10 + $0x68] sm:$0xff]
    %v1592 = vld [vmem:[#allocation10 + $0x70] sm:$0xff]
    %v1593 = vld [vmem:[#allocation10 + $0x78] sm:$0xff]
    %v1594 = vld [vmem:[#allocation10 + $0x80] sm:$0xff]
    %v1595 = vld [vmem:[#allocation10 + $0x88] sm:$0xff]
    %v1596 = vld [vmem:[#allocation10 + $0x90] sm:$0xff]
    %v1597 = vld [vmem:[#allocation10 + $0x98] sm:$0xff]
    %v1598 = vld [vmem:[#allocation10 + $0xa0] sm:$0xff]
    %v1599 = vld [vmem:[#allocation10 + $0xa8] sm:$0xff]
    %v1600 = vld [vmem:[#allocation10 + $0xb0] sm:$0xff]
    %v1601 = vld [vmem:[#allocation10 + $0xb8] sm:$0xff]
    %v1602 = vld [vmem:[#allocation10 + $0xc0] sm:$0xff]
    %v1603 = vld [vmem:[#allocation10 + $0xc8] sm:$0xff]
    %v1604 = vld [vmem:[#allocation10 + $0xd0] sm:$0xff]
    %v1605 = vld [vmem:[#allocation10 + $0xd8] sm:$0xff]
    %v1606 = vld [vmem:[#allocation10 + $0xe0] sm:$0xff]
    %v1607 = vld [vmem:[#allocation10 + $0xe8] sm:$0xff]
    %v1608 = vld [vmem:[#allocation10 + $0xf0] sm:$0xff]
    %v1609 = vld [vmem:[#allocation10 + $0xf8] sm:$0xff]
    %v1610 = vld [vmem:[#allocation10 + $0x100] sm:$0xff]
    %v1611 = vld [vmem:[#allocation10 + $0x108] sm:$0xff]
    %v1612 = vld [vmem:[#allocation10 + $0x110] sm:$0xff]
    %v1613 = vld [vmem:[#allocation10 + $0x118] sm:$0xff]
    %v1614 = vld [vmem:[#allocation10 + $0x120] sm:$0xff]
    %v1615 = vld [vmem:[#allocation10 + $0x128] sm:$0xff]
    %v1616 = vld [vmem:[#allocation10 + $0x130] sm:$0xff]
    %v1617 = vld [vmem:[#allocation10 + $0x138] sm:$0xff]
    %v1618 = vld [vmem:[#allocation10 + $0x140] sm:$0xff]
    %v1619 = vld [vmem:[#allocation10 + $0x148] sm:$0xff]
    %v1620 = vld [vmem:[#allocation10 + $0x150] sm:$0xff]
    %v1621 = vld [vmem:[#allocation10 + $0x158] sm:$0xff]
    %v1622 = vld [vmem:[#allocation10 + $0x160] sm:$0xff]
    %v1623 = vld [vmem:[#allocation10 + $0x168] sm:$0xff]
    %v1624 = vld [vmem:[#allocation10 + $0x170] sm:$0xff]
    %v1625 = vld [vmem:[#allocation10 + $0x178] sm:$0xff]
    %v1626 = vld [vmem:[#allocation10 + $0x180] sm:$0xff]
    %v1627 = vld [vmem:[#allocation10 + $0x188] sm:$0xff]
    %v1628 = vld [vmem:[#allocation10 + $0x190] sm:$0xff]
    %v1629 = vld [vmem:[#allocation10 + $0x198] sm:$0xff]
    %v1630 = vld [vmem:[#allocation10 + $0x1a0] sm:$0xff]
    %v1631 = vld [vmem:[#allocation10 + $0x1a8] sm:$0xff]
    %v1632 = vld [vmem:[#allocation10 + $0x1b0] sm:$0xff]
    %v1633 = vld [vmem:[#allocation10 + $0x1b8] sm:$0xff]
    %v1634 = vld [vmem:[#allocation10 + $0x1c0] sm:$0xff]
    %v1635 = vld [vmem:[#allocation10 + $0x1c8] sm:$0xff]
    %v1636 = vld [vmem:[#allocation10 + $0x1d0] sm:$0xff]
    %v1637 = vld [vmem:[#allocation10 + $0x1d8] sm:$0xff]
    %v1638 = vld [vmem:[#allocation10 + $0x1e0] sm:$0xff]
    %v1639 = vld [vmem:[#allocation10 + $0x1e8] sm:$0xff]
    %v1640 = vld [vmem:[#allocation10 + $0x1f0] sm:$0xff]
    %v1641 = vld [vmem:[#allocation10 + $0x1f8] sm:$0xff]
    %1642 = vmatprep.subr.mxu0 %v1579
    %1643 = vmatpush1.msra.mxu0 %v1578
    %1644 = vmatprep.subr.mxu0 %v1583
    %1645 = vmatpush1.msra.mxu0 %v1582
    %1646 = vmatprep.subr.mxu0 %v1587
    %1647 = vmatpush1.msra.mxu0 %v1586
    %1648 = vmatprep.subr.mxu0 %v1591
    %1649 = vmatpush1.msra.mxu0 %v1590
    %1650 = vmatprep.subr.mxu0 %v1595
    %1651 = vmatpush1.msra.mxu0 %v1594
    %1652 = vmatprep.subr.mxu0 %v1599
    %1653 = vmatpush1.msra.mxu0 %v1598
    %1654 = vmatprep.subr.mxu0 %v1603
    %1655 = vmatpush1.msra.mxu0 %v1602
    %1656 = vmatprep.subr.mxu0 %v1607
    %1657 = vmatpush1.msra.mxu0 %v1606
    %1658 = vmatprep.subr.mxu0 %v1611
    %1659 = vmatpush1.msra.mxu0 %v1610
    %1660 = vmatprep.subr.mxu0 %v1615
    %1661 = vmatpush1.msra.mxu0 %v1614
    %1662 = vmatprep.subr.mxu0 %v1619
    %1663 = vmatpush1.msra.mxu0 %v1618
    %1664 = vmatprep.subr.mxu0 %v1623
    %1665 = vmatpush1.msra.mxu0 %v1622
    %1666 = vmatprep.subr.mxu0 %v1627
    %1667 = vmatpush1.msra.mxu0 %v1626
    %1668 = vmatprep.subr.mxu0 %v1631
    %1669 = vmatpush1.msra.mxu0 %v1630
    %1670 = vmatprep.subr.mxu0 %v1635
    %1671 = vmatpush1.msra.mxu0 %v1634
    %1672 = vmatprep.subr.mxu0 %v1639
    %1673 = vmatpush1.msra.mxu0 %v1638
    %1674 = vmatprep.subr.mxu0 0.0
    %1675 = vmatpush1.msra.mxu0 0.0
    %1676 = vmatprep.subr.mxu0 0.0
    %1677 = vmatpush1.msra.mxu0 0.0
    %1678 = vmatprep.subr.mxu0 0.0
    %1679 = vmatpush1.msra.mxu0 0.0
    %1680 = vmatprep.subr.mxu0 0.0
    %1681 = vmatpush1.msra.mxu0 0.0
    %1682 = vmatprep.subr.mxu0 0.0
    %1683 = vmatpush1.msra.mxu0 0.0
    %1684 = vmatprep.subr.mxu0 0.0
    %1685 = vmatpush1.msra.mxu0 0.0
    %1686 = vmatprep.subr.mxu0 0.0
    %1687 = vmatpush1.msra.mxu0 0.0
    %1688 = vmatprep.subr.mxu0 0.0
    %1689 = vmatpush1.msra.mxu0 0.0
    %1690 = vmatprep.subr.mxu0 0.0
    %1691 = vmatpush1.msra.mxu0 0.0
    %1692 = vmatprep.subr.mxu0 0.0
    %1693 = vmatpush1.msra.mxu0 0.0
    %1694 = vmatprep.subr.mxu0 0.0
    %1695 = vmatpush1.msra.mxu0 0.0
    %1696 = vmatprep.subr.mxu0 0.0
    %1697 = vmatpush1.msra.mxu0 0.0
    %1698 = vmatprep.subr.mxu0 0.0
    %1699 = vmatpush1.msra.mxu0 0.0
    %1700 = vmatprep.subr.mxu0 0.0
    %1701 = vmatpush1.msra.mxu0 0.0
    %1702 = vmatprep.subr.mxu0 0.0
    %1703 = vmatpush1.msra.mxu0 0.0
    %1704 = vmatprep.subr.mxu0 0.0
    %1705 = vmatpush1.msra.mxu0 0.0
    %1706 = vmatprep.mubr.f32.mxu0 0.0
    %1707 = vmatmul.mubr.f32.gmra.mrb[0].mxu0 %v1567
    %v1708 = vpop.f32.mrb[0].mxu0
    %v1709 = vadd.f32 0.0, %v1708
    %v1710 = vpop.f32.mrb[0].mxu0
    %v1711 = vadd.f32 0.0, %v1710
    %1712 = vdwg.mxu0
    %1713 = vmatprep.subr.mxu0 %v1581
    %1714 = vmatpush1.msra.mxu0 %v1580
    %1715 = vmatprep.subr.mxu0 %v1585
    %1716 = vmatpush1.msra.mxu0 %v1584
    %1717 = vmatprep.subr.mxu0 %v1589
    %1718 = vmatpush1.msra.mxu0 %v1588
    %1719 = vmatprep.subr.mxu0 %v1593
    %1720 = vmatpush1.msra.mxu0 %v1592
    %1721 = vmatprep.subr.mxu0 %v1597
    %1722 = vmatpush1.msra.mxu0 %v1596
    %1723 = vmatprep.subr.mxu0 %v1601
    %1724 = vmatpush1.msra.mxu0 %v1600
    %1725 = vmatprep.subr.mxu0 %v1605
    %1726 = vmatpush1.msra.mxu0 %v1604
    %1727 = vmatprep.subr.mxu0 %v1609
    %1728 = vmatpush1.msra.mxu0 %v1608
    %1729 = vmatprep.subr.mxu0 %v1613
    %1730 = vmatpush1.msra.mxu0 %v1612
    %1731 = vmatprep.subr.mxu0 %v1617
    %1732 = vmatpush1.msra.mxu0 %v1616
    %1733 = vmatprep.subr.mxu0 %v1621
    %1734 = vmatpush1.msra.mxu0 %v1620
    %1735 = vmatprep.subr.mxu0 %v1625
    %1736 = vmatpush1.msra.mxu0 %v1624
    %1737 = vmatprep.subr.mxu0 %v1629
    %1738 = vmatpush1.msra.mxu0 %v1628
    %1739 = vmatprep.subr.mxu0 %v1633
    %1740 = vmatpush1.msra.mxu0 %v1632
    %1741 = vmatprep.subr.mxu0 %v1637
    %1742 = vmatpush1.msra.mxu0 %v1636
    %1743 = vmatprep.subr.mxu0 %v1641
    %1744 = vmatpush1.msra.mxu0 %v1640
    %1745 = vmatprep.subr.mxu0 0.0
    %1746 = vmatpush1.msra.mxu0 0.0
    %1747 = vmatprep.subr.mxu0 0.0
    %1748 = vmatpush1.msra.mxu0 0.0
    %1749 = vmatprep.subr.mxu0 0.0
    %1750 = vmatpush1.msra.mxu0 0.0
    %1751 = vmatprep.subr.mxu0 0.0
    %1752 = vmatpush1.msra.mxu0 0.0
    %1753 = vmatprep.subr.mxu0 0.0
    %1754 = vmatpush1.msra.mxu0 0.0
    %1755 = vmatprep.subr.mxu0 0.0
    %1756 = vmatpush1.msra.mxu0 0.0
    %1757 = vmatprep.subr.mxu0 0.0
    %1758 = vmatpush1.msra.mxu0 0.0
    %1759 = vmatprep.subr.mxu0 0.0
    %1760 = vmatpush1.msra.mxu0 0.0
    %1761 = vmatprep.subr.mxu0 0.0
    %1762 = vmatpush1.msra.mxu0 0.0
    %1763 = vmatprep.subr.mxu0 0.0
    %1764 = vmatpush1.msra.mxu0 0.0
    %1765 = vmatprep.subr.mxu0 0.0
    %1766 = vmatpush1.msra.mxu0 0.0
    %1767 = vmatprep.subr.mxu0 0.0
    %1768 = vmatpush1.msra.mxu0 0.0
    %1769 = vmatprep.subr.mxu0 0.0
    %1770 = vmatpush1.msra.mxu0 0.0
    %1771 = vmatprep.subr.mxu0 0.0
    %1772 = vmatpush1.msra.mxu0 0.0
    %1773 = vmatprep.subr.mxu0 0.0
    %1774 = vmatpush1.msra.mxu0 0.0
    %1775 = vmatprep.subr.mxu0 0.0
    %1776 = vmatpush1.msra.mxu0 0.0
    %1777 = vmatprep.mubr.f32.mxu0 0.0
    %1778 = vmatmul.mubr.f32.gmra.mrb[0].mxu0 %v1567
    %v1779 = vpop.f32.mrb[0].mxu0
    %v1780 = vadd.f32 0.0, %v1779
    %v1781 = vpop.f32.mrb[0].mxu0
    %v1782 = vadd.f32 0.0, %v1781
    %1783 = vdwg.mxu0
    %v1788 = vrot.slane %v1709, 6
    %v1789 = vrot.slane %v1711, 6
    %v1790 = vrot.slane %v1780, 6
    %v1791 = vrot.slane %v1782, 6
    %v1796 = vadd.f32 %v1574, %v1788
    %v1797 = vadd.f32 %v1575, %v1789
    %v1798 = vadd.f32 %v1576, %v1790
    %v1799 = vadd.f32 %v1577, %v1791
    %v1800 = vxor.u32 %v1796, 2147483648
    %v1801 = vxor.u32 %v1797, 2147483648
    %v1802 = vxor.u32 %v1798, 2147483648
    %v1803 = vmul.f32 %v1800, 1.442695
    %v1804 = vpow.pop %v1803
    %v1805 = vmul.f32 %v1801, 1.442695
    %v1806 = vpow.pop %v1805
    %v1807 = vmul.f32 %v1802, 1.442695
    %v1808 = vpow.pop %v1807
    %v1809 = vadd.f32 %v1804, 1.0
    %v1810 = vadd.f32 %v1806, 1.0
    %v1811 = vadd.f32 %v1808, 1.0
    %v1812 = vrcp.pop %v1809
    %v1813 = vmul.f32 1.0, %v1812
    %v1814 = vrcp.pop %v1810
    %v1815 = vmul.f32 1.0, %v1814
    %v1816 = vrcp.pop %v1811
    %v1817 = vmul.f32 1.0, %v1816
    %v1818 = vtanh.pop %v1799
    %v1820 = vrot.slane %v1565, 6
    %v1822 = vmul.f32 %v1815, %v1820
    %v1823 = vmul.f32 %v1813, %v1818
    %v1824 = vadd.f32 %v1822, %v1823
    %v1825 = vtanh.pop %v1824
    %v1826 = vmul.f32 %v1817, %v1825
    %1827 = vst.msk [vmem:[#allocation3 + $0x8] sm:$0xc] %vm794, %v1826
    %1829 = vrot.lane.b32.xlu0 %v1826, 64
    %v1830 = vpop.permute.xlu0 %1829
    %1832 = vst.msk [vmem:[#allocation4 + $0x2] sm:$0xc] %vm794, %v1830
    %v1833 = vld [vmem:[#allocation2 + $0x20] sm:$0x30]
    %v1834 = vld [vmem:[#allocation2 + $0x28] sm:$0x30]
    %v1835 = vld [vmem:[#allocation2 + $0x30] sm:$0x30]
    %v1836 = vld [vmem:[#allocation2 + $0x38] sm:$0x30]
    %v1837 = vld [vmem:[#allocation10] sm:$0xff]
    %v1838 = vld [vmem:[#allocation10 + $0x8] sm:$0xff]
    %v1839 = vld [vmem:[#allocation10 + $0x10] sm:$0xff]
    %v1840 = vld [vmem:[#allocation10 + $0x18] sm:$0xff]
    %v1841 = vld [vmem:[#allocation10 + $0x20] sm:$0xff]
    %v1842 = vld [vmem:[#allocation10 + $0x28] sm:$0xff]
    %v1843 = vld [vmem:[#allocation10 + $0x30] sm:$0xff]
    %v1844 = vld [vmem:[#allocation10 + $0x38] sm:$0xff]
    %v1845 = vld [vmem:[#allocation10 + $0x40] sm:$0xff]
    %v1846 = vld [vmem:[#allocation10 + $0x48] sm:$0xff]
    %v1847 = vld [vmem:[#allocation10 + $0x50] sm:$0xff]
    %v1848 = vld [vmem:[#allocation10 + $0x58] sm:$0xff]
    %v1849 = vld [vmem:[#allocation10 + $0x60] sm:$0xff]
    %v1850 = vld [vmem:[#allocation10 + $0x68] sm:$0xff]
    %v1851 = vld [vmem:[#allocation10 + $0x70] sm:$0xff]
    %v1852 = vld [vmem:[#allocation10 + $0x78] sm:$0xff]
    %v1853 = vld [vmem:[#allocation10 + $0x80] sm:$0xff]
    %v1854 = vld [vmem:[#allocation10 + $0x88] sm:$0xff]
    %v1855 = vld [vmem:[#allocation10 + $0x90] sm:$0xff]
    %v1856 = vld [vmem:[#allocation10 + $0x98] sm:$0xff]
    %v1857 = vld [vmem:[#allocation10 + $0xa0] sm:$0xff]
    %v1858 = vld [vmem:[#allocation10 + $0xa8] sm:$0xff]
    %v1859 = vld [vmem:[#allocation10 + $0xb0] sm:$0xff]
    %v1860 = vld [vmem:[#allocation10 + $0xb8] sm:$0xff]
    %v1861 = vld [vmem:[#allocation10 + $0xc0] sm:$0xff]
    %v1862 = vld [vmem:[#allocation10 + $0xc8] sm:$0xff]
    %v1863 = vld [vmem:[#allocation10 + $0xd0] sm:$0xff]
    %v1864 = vld [vmem:[#allocation10 + $0xd8] sm:$0xff]
    %v1865 = vld [vmem:[#allocation10 + $0xe0] sm:$0xff]
    %v1866 = vld [vmem:[#allocation10 + $0xe8] sm:$0xff]
    %v1867 = vld [vmem:[#allocation10 + $0xf0] sm:$0xff]
    %v1868 = vld [vmem:[#allocation10 + $0xf8] sm:$0xff]
    %v1869 = vld [vmem:[#allocation10 + $0x100] sm:$0xff]
    %v1870 = vld [vmem:[#allocation10 + $0x108] sm:$0xff]
    %v1871 = vld [vmem:[#allocation10 + $0x110] sm:$0xff]
    %v1872 = vld [vmem:[#allocation10 + $0x118] sm:$0xff]
    %v1873 = vld [vmem:[#allocation10 + $0x120] sm:$0xff]
    %v1874 = vld [vmem:[#allocation10 + $0x128] sm:$0xff]
    %v1875 = vld [vmem:[#allocation10 + $0x130] sm:$0xff]
    %v1876 = vld [vmem:[#allocation10 + $0x138] sm:$0xff]
    %v1877 = vld [vmem:[#allocation10 + $0x140] sm:$0xff]
    %v1878 = vld [vmem:[#allocation10 + $0x148] sm:$0xff]
    %v1879 = vld [vmem:[#allocation10 + $0x150] sm:$0xff]
    %v1880 = vld [vmem:[#allocation10 + $0x158] sm:$0xff]
    %v1881 = vld [vmem:[#allocation10 + $0x160] sm:$0xff]
    %v1882 = vld [vmem:[#allocation10 + $0x168] sm:$0xff]
    %v1883 = vld [vmem:[#allocation10 + $0x170] sm:$0xff]
    %v1884 = vld [vmem:[#allocation10 + $0x178] sm:$0xff]
    %v1885 = vld [vmem:[#allocation10 + $0x180] sm:$0xff]
    %v1886 = vld [vmem:[#allocation10 + $0x188] sm:$0xff]
    %v1887 = vld [vmem:[#allocation10 + $0x190] sm:$0xff]
    %v1888 = vld [vmem:[#allocation10 + $0x198] sm:$0xff]
    %v1889 = vld [vmem:[#allocation10 + $0x1a0] sm:$0xff]
    %v1890 = vld [vmem:[#allocation10 + $0x1a8] sm:$0xff]
    %v1891 = vld [vmem:[#allocation10 + $0x1b0] sm:$0xff]
    %v1892 = vld [vmem:[#allocation10 + $0x1b8] sm:$0xff]
    %v1893 = vld [vmem:[#allocation10 + $0x1c0] sm:$0xff]
    %v1894 = vld [vmem:[#allocation10 + $0x1c8] sm:$0xff]
    %v1895 = vld [vmem:[#allocation10 + $0x1d0] sm:$0xff]
    %v1896 = vld [vmem:[#allocation10 + $0x1d8] sm:$0xff]
    %v1897 = vld [vmem:[#allocation10 + $0x1e0] sm:$0xff]
    %v1898 = vld [vmem:[#allocation10 + $0x1e8] sm:$0xff]
    %v1899 = vld [vmem:[#allocation10 + $0x1f0] sm:$0xff]
    %v1900 = vld [vmem:[#allocation10 + $0x1f8] sm:$0xff]
    %v1901 = vrot.slane %v1826, 2
    %1903 = vmatprep.subr.mxu0 %v1838
    %1904 = vmatpush1.msra.mxu0 %v1837
    %1905 = vmatprep.subr.mxu0 %v1842
    %1906 = vmatpush1.msra.mxu0 %v1841
    %1907 = vmatprep.subr.mxu0 %v1846
    %1908 = vmatpush1.msra.mxu0 %v1845
    %1909 = vmatprep.subr.mxu0 %v1850
    %1910 = vmatpush1.msra.mxu0 %v1849
    %1911 = vmatprep.subr.mxu0 %v1854
    %1912 = vmatpush1.msra.mxu0 %v1853
    %1913 = vmatprep.subr.mxu0 %v1858
    %1914 = vmatpush1.msra.mxu0 %v1857
    %1915 = vmatprep.subr.mxu0 %v1862
    %1916 = vmatpush1.msra.mxu0 %v1861
    %1917 = vmatprep.subr.mxu0 %v1866
    %1918 = vmatpush1.msra.mxu0 %v1865
    %1919 = vmatprep.subr.mxu0 %v1870
    %1920 = vmatpush1.msra.mxu0 %v1869
    %1921 = vmatprep.subr.mxu0 %v1874
    %1922 = vmatpush1.msra.mxu0 %v1873
    %1923 = vmatprep.subr.mxu0 %v1878
    %1924 = vmatpush1.msra.mxu0 %v1877
    %1925 = vmatprep.subr.mxu0 %v1882
    %1926 = vmatpush1.msra.mxu0 %v1881
    %1927 = vmatprep.subr.mxu0 %v1886
    %1928 = vmatpush1.msra.mxu0 %v1885
    %1929 = vmatprep.subr.mxu0 %v1890
    %1930 = vmatpush1.msra.mxu0 %v1889
    %1931 = vmatprep.subr.mxu0 %v1894
    %1932 = vmatpush1.msra.mxu0 %v1893
    %1933 = vmatprep.subr.mxu0 %v1898
    %1934 = vmatpush1.msra.mxu0 %v1897
    %1935 = vmatprep.subr.mxu0 0.0
    %1936 = vmatpush1.msra.mxu0 0.0
    %1937 = vmatprep.subr.mxu0 0.0
    %1938 = vmatpush1.msra.mxu0 0.0
    %1939 = vmatprep.subr.mxu0 0.0
    %1940 = vmatpush1.msra.mxu0 0.0
    %1941 = vmatprep.subr.mxu0 0.0
    %1942 = vmatpush1.msra.mxu0 0.0
    %1943 = vmatprep.subr.mxu0 0.0
    %1944 = vmatpush1.msra.mxu0 0.0
    %1945 = vmatprep.subr.mxu0 0.0
    %1946 = vmatpush1.msra.mxu0 0.0
    %1947 = vmatprep.subr.mxu0 0.0
    %1948 = vmatpush1.msra.mxu0 0.0
    %1949 = vmatprep.subr.mxu0 0.0
    %1950 = vmatpush1.msra.mxu0 0.0
    %1951 = vmatprep.subr.mxu0 0.0
    %1952 = vmatpush1.msra.mxu0 0.0
    %1953 = vmatprep.subr.mxu0 0.0
    %1954 = vmatpush1.msra.mxu0 0.0
    %1955 = vmatprep.subr.mxu0 0.0
    %1956 = vmatpush1.msra.mxu0 0.0
    %1957 = vmatprep.subr.mxu0 0.0
    %1958 = vmatpush1.msra.mxu0 0.0
    %1959 = vmatprep.subr.mxu0 0.0
    %1960 = vmatpush1.msra.mxu0 0.0
    %1961 = vmatprep.subr.mxu0 0.0
    %1962 = vmatpush1.msra.mxu0 0.0
    %1963 = vmatprep.subr.mxu0 0.0
    %1964 = vmatpush1.msra.mxu0 0.0
    %1965 = vmatprep.subr.mxu0 0.0
    %1966 = vmatpush1.msra.mxu0 0.0
    %1967 = vmatprep.mubr.f32.mxu0 0.0
    %1968 = vmatmul.mubr.f32.gmra.mrb[0].mxu0 %v1901
    %v1969 = vpop.f32.mrb[0].mxu0
    %v1970 = vadd.f32 0.0, %v1969
    %v1971 = vpop.f32.mrb[0].mxu0
    %v1972 = vadd.f32 0.0, %v1971
    %1973 = vdwg.mxu0
    %1974 = vmatprep.subr.mxu0 %v1840
    %1975 = vmatpush1.msra.mxu0 %v1839
    %1976 = vmatprep.subr.mxu0 %v1844
    %1977 = vmatpush1.msra.mxu0 %v1843
    %1978 = vmatprep.subr.mxu0 %v1848
    %1979 = vmatpush1.msra.mxu0 %v1847
    %1980 = vmatprep.subr.mxu0 %v1852
    %1981 = vmatpush1.msra.mxu0 %v1851
    %1982 = vmatprep.subr.mxu0 %v1856
    %1983 = vmatpush1.msra.mxu0 %v1855
    %1984 = vmatprep.subr.mxu0 %v1860
    %1985 = vmatpush1.msra.mxu0 %v1859
    %1986 = vmatprep.subr.mxu0 %v1864
    %1987 = vmatpush1.msra.mxu0 %v1863
    %1988 = vmatprep.subr.mxu0 %v1868
    %1989 = vmatpush1.msra.mxu0 %v1867
    %1990 = vmatprep.subr.mxu0 %v1872
    %1991 = vmatpush1.msra.mxu0 %v1871
    %1992 = vmatprep.subr.mxu0 %v1876
    %1993 = vmatpush1.msra.mxu0 %v1875
    %1994 = vmatprep.subr.mxu0 %v1880
    %1995 = vmatpush1.msra.mxu0 %v1879
    %1996 = vmatprep.subr.mxu0 %v1884
    %1997 = vmatpush1.msra.mxu0 %v1883
    %1998 = vmatprep.subr.mxu0 %v1888
    %1999 = vmatpush1.msra.mxu0 %v1887
    %2000 = vmatprep.subr.mxu0 %v1892
    %2001 = vmatpush1.msra.mxu0 %v1891
    %2002 = vmatprep.subr.mxu0 %v1896
    %2003 = vmatpush1.msra.mxu0 %v1895
    %2004 = vmatprep.subr.mxu0 %v1900
    %2005 = vmatpush1.msra.mxu0 %v1899
    %2006 = vmatprep.subr.mxu0 0.0
    %2007 = vmatpush1.msra.mxu0 0.0
    %2008 = vmatprep.subr.mxu0 0.0
    %2009 = vmatpush1.msra.mxu0 0.0
    %2010 = vmatprep.subr.mxu0 0.0
    %2011 = vmatpush1.msra.mxu0 0.0
    %2012 = vmatprep.subr.mxu0 0.0
    %2013 = vmatpush1.msra.mxu0 0.0
    %2014 = vmatprep.subr.mxu0 0.0
    %2015 = vmatpush1.msra.mxu0 0.0
    %2016 = vmatprep.subr.mxu0 0.0
    %2017 = vmatpush1.msra.mxu0 0.0
    %2018 = vmatprep.subr.mxu0 0.0
    %2019 = vmatpush1.msra.mxu0 0.0
    %2020 = vmatprep.subr.mxu0 0.0
    %2021 = vmatpush1.msra.mxu0 0.0
    %2022 = vmatprep.subr.mxu0 0.0
    %2023 = vmatpush1.msra.mxu0 0.0
    %2024 = vmatprep.subr.mxu0 0.0
    %2025 = vmatpush1.msra.mxu0 0.0
    %2026 = vmatprep.subr.mxu0 0.0
    %2027 = vmatpush1.msra.mxu0 0.0
    %2028 = vmatprep.subr.mxu0 0.0
    %2029 = vmatpush1.msra.mxu0 0.0
    %2030 = vmatprep.subr.mxu0 0.0
    %2031 = vmatpush1.msra.mxu0 0.0
    %2032 = vmatprep.subr.mxu0 0.0
    %2033 = vmatpush1.msra.mxu0 0.0
    %2034 = vmatprep.subr.mxu0 0.0
    %2035 = vmatpush1.msra.mxu0 0.0
    %2036 = vmatprep.subr.mxu0 0.0
    %2037 = vmatpush1.msra.mxu0 0.0
    %2038 = vmatprep.mubr.f32.mxu0 0.0
    %2039 = vmatmul.mubr.f32.gmra.mrb[0].mxu0 %v1901
    %v2040 = vpop.f32.mrb[0].mxu0
    %v2041 = vadd.f32 0.0, %v2040
    %v2042 = vpop.f32.mrb[0].mxu0
    %v2043 = vadd.f32 0.0, %v2042
    %2044 = vdwg.mxu0
    %v2049 = vrot.slane %v1970, 4
    %v2050 = vrot.slane %v1972, 4
    %v2051 = vrot.slane %v2041, 4
    %v2052 = vrot.slane %v2043, 4
    %v2057 = vadd.f32 %v1833, %v2049
    %v2058 = vadd.f32 %v1834, %v2050
    %v2059 = vadd.f32 %v1835, %v2051
    %v2060 = vadd.f32 %v1836, %v2052
    %v2061 = vxor.u32 %v2057, 2147483648
    %v2062 = vxor.u32 %v2058, 2147483648
    %v2063 = vxor.u32 %v2059, 2147483648
    %v2064 = vmul.f32 %v2061, 1.442695
    %v2065 = vpow.pop %v2064
    %v2066 = vmul.f32 %v2062, 1.442695
    %v2067 = vpow.pop %v2066
    %v2068 = vmul.f32 %v2063, 1.442695
    %v2069 = vpow.pop %v2068
    %v2070 = vadd.f32 %v2065, 1.0
    %v2071 = vadd.f32 %v2067, 1.0
    %v2072 = vadd.f32 %v2069, 1.0
    %v2073 = vrcp.pop %v2070
    %v2074 = vmul.f32 1.0, %v2073
    %v2075 = vrcp.pop %v2071
    %v2076 = vmul.f32 1.0, %v2075
    %v2077 = vrcp.pop %v2072
    %v2078 = vmul.f32 1.0, %v2077
    %v2079 = vtanh.pop %v2060
    %v2081 = vrot.slane %v1824, 6
    %v2083 = vmul.f32 %v2076, %v2081
    %v2084 = vmul.f32 %v2074, %v2079
    %v2085 = vadd.f32 %v2083, %v2084
    %v2086 = vtanh.pop %v2085
    %v2087 = vmul.f32 %v2078, %v2086
    %2088 = vst.msk [vmem:[#allocation3 + $0x8] sm:$0x30] %vm1056, %v2087
    %2090 = vrot.lane.b32.xlu0 %v2087, 64
    %v2091 = vpop.permute.xlu0 %2090
    %2093 = vst.msk [vmem:[#allocation4 - $0x2] sm:$0x30] %vm1056, %v2091
    %v2094 = vld [vmem:[#allocation2 + $0x20] sm:$0xc0]
    %v2095 = vld [vmem:[#allocation2 + $0x28] sm:$0xc0]
    %v2096 = vld [vmem:[#allocation2 + $0x30] sm:$0xc0]
    %v2097 = vld [vmem:[#allocation2 + $0x38] sm:$0xc0]
    %v2098 = vld [vmem:[#allocation10] sm:$0xff]
    %v2099 = vld [vmem:[#allocation10 + $0x8] sm:$0xff]
    %v2100 = vld [vmem:[#allocation10 + $0x10] sm:$0xff]
    %v2101 = vld [vmem:[#allocation10 + $0x18] sm:$0xff]
    %v2102 = vld [vmem:[#allocation10 + $0x20] sm:$0xff]
    %v2103 = vld [vmem:[#allocation10 + $0x28] sm:$0xff]
    %v2104 = vld [vmem:[#allocation10 + $0x30] sm:$0xff]
    %v2105 = vld [vmem:[#allocation10 + $0x38] sm:$0xff]
    %v2106 = vld [vmem:[#allocation10 + $0x40] sm:$0xff]
    %v2107 = vld [vmem:[#allocation10 + $0x48] sm:$0xff]
    %v2108 = vld [vmem:[#allocation10 + $0x50] sm:$0xff]
    %v2109 = vld [vmem:[#allocation10 + $0x58] sm:$0xff]
    %v2110 = vld [vmem:[#allocation10 + $0x60] sm:$0xff]
    %v2111 = vld [vmem:[#allocation10 + $0x68] sm:$0xff]
    %v2112 = vld [vmem:[#allocation10 + $0x70] sm:$0xff]
    %v2113 = vld [vmem:[#allocation10 + $0x78] sm:$0xff]
    %v2114 = vld [vmem:[#allocation10 + $0x80] sm:$0xff]
    %v2115 = vld [vmem:[#allocation10 + $0x88] sm:$0xff]
    %v2116 = vld [vmem:[#allocation10 + $0x90] sm:$0xff]
    %v2117 = vld [vmem:[#allocation10 + $0x98] sm:$0xff]
    %v2118 = vld [vmem:[#allocation10 + $0xa0] sm:$0xff]
    %v2119 = vld [vmem:[#allocation10 + $0xa8] sm:$0xff]
    %v2120 = vld [vmem:[#allocation10 + $0xb0] sm:$0xff]
    %v2121 = vld [vmem:[#allocation10 + $0xb8] sm:$0xff]
    %v2122 = vld [vmem:[#allocation10 + $0xc0] sm:$0xff]
    %v2123 = vld [vmem:[#allocation10 + $0xc8] sm:$0xff]
    %v2124 = vld [vmem:[#allocation10 + $0xd0] sm:$0xff]
    %v2125 = vld [vmem:[#allocation10 + $0xd8] sm:$0xff]
    %v2126 = vld [vmem:[#allocation10 + $0xe0] sm:$0xff]
    %v2127 = vld [vmem:[#allocation10 + $0xe8] sm:$0xff]
    %v2128 = vld [vmem:[#allocation10 + $0xf0] sm:$0xff]
    %v2129 = vld [vmem:[#allocation10 + $0xf8] sm:$0xff]
    %v2130 = vld [vmem:[#allocation10 + $0x100] sm:$0xff]
    %v2131 = vld [vmem:[#allocation10 + $0x108] sm:$0xff]
    %v2132 = vld [vmem:[#allocation10 + $0x110] sm:$0xff]
    %v2133 = vld [vmem:[#allocation10 + $0x118] sm:$0xff]
    %v2134 = vld [vmem:[#allocation10 + $0x120] sm:$0xff]
    %v2135 = vld [vmem:[#allocation10 + $0x128] sm:$0xff]
    %v2136 = vld [vmem:[#allocation10 + $0x130] sm:$0xff]
    %v2137 = vld [vmem:[#allocation10 + $0x138] sm:$0xff]
    %v2138 = vld [vmem:[#allocation10 + $0x140] sm:$0xff]
    %v2139 = vld [vmem:[#allocation10 + $0x148] sm:$0xff]
    %v2140 = vld [vmem:[#allocation10 + $0x150] sm:$0xff]
    %v2141 = vld [vmem:[#allocation10 + $0x158] sm:$0xff]
    %v2142 = vld [vmem:[#allocation10 + $0x160] sm:$0xff]
    %v2143 = vld [vmem:[#allocation10 + $0x168] sm:$0xff]
    %v2144 = vld [vmem:[#allocation10 + $0x170] sm:$0xff]
    %v2145 = vld [vmem:[#allocation10 + $0x178] sm:$0xff]
    %v2146 = vld [vmem:[#allocation10 + $0x180] sm:$0xff]
    %v2147 = vld [vmem:[#allocation10 + $0x188] sm:$0xff]
    %v2148 = vld [vmem:[#allocation10 + $0x190] sm:$0xff]
    %v2149 = vld [vmem:[#allocation10 + $0x198] sm:$0xff]
    %v2150 = vld [vmem:[#allocation10 + $0x1a0] sm:$0xff]
    %v2151 = vld [vmem:[#allocation10 + $0x1a8] sm:$0xff]
    %v2152 = vld [vmem:[#allocation10 + $0x1b0] sm:$0xff]
    %v2153 = vld [vmem:[#allocation10 + $0x1b8] sm:$0xff]
    %v2154 = vld [vmem:[#allocation10 + $0x1c0] sm:$0xff]
    %v2155 = vld [vmem:[#allocation10 + $0x1c8] sm:$0xff]
    %v2156 = vld [vmem:[#allocation10 + $0x1d0] sm:$0xff]
    %v2157 = vld [vmem:[#allocation10 + $0x1d8] sm:$0xff]
    %v2158 = vld [vmem:[#allocation10 + $0x1e0] sm:$0xff]
    %v2159 = vld [vmem:[#allocation10 + $0x1e8] sm:$0xff]
    %v2160 = vld [vmem:[#allocation10 + $0x1f0] sm:$0xff]
    %v2161 = vld [vmem:[#allocation10 + $0x1f8] sm:$0xff]
    %v2162 = vrot.slane %v2087, 4
    %2164 = vmatprep.subr.mxu0 %v2099
    %2165 = vmatpush1.msra.mxu0 %v2098
    %2166 = vmatprep.subr.mxu0 %v2103
    %2167 = vmatpush1.msra.mxu0 %v2102
    %2168 = vmatprep.subr.mxu0 %v2107
    %2169 = vmatpush1.msra.mxu0 %v2106
    %2170 = vmatprep.subr.mxu0 %v2111
    %2171 = vmatpush1.msra.mxu0 %v2110
    %2172 = vmatprep.subr.mxu0 %v2115
    %2173 = vmatpush1.msra.mxu0 %v2114
    %2174 = vmatprep.subr.mxu0 %v2119
    %2175 = vmatpush1.msra.mxu0 %v2118
    %2176 = vmatprep.subr.mxu0 %v2123
    %2177 = vmatpush1.msra.mxu0 %v2122
    %2178 = vmatprep.subr.mxu0 %v2127
    %2179 = vmatpush1.msra.mxu0 %v2126
    %2180 = vmatprep.subr.mxu0 %v2131
    %2181 = vmatpush1.msra.mxu0 %v2130
    %2182 = vmatprep.subr.mxu0 %v2135
    %2183 = vmatpush1.msra.mxu0 %v2134
    %2184 = vmatprep.subr.mxu0 %v2139
    %2185 = vmatpush1.msra.mxu0 %v2138
    %2186 = vmatprep.subr.mxu0 %v2143
    %2187 = vmatpush1.msra.mxu0 %v2142
    %2188 = vmatprep.subr.mxu0 %v2147
    %2189 = vmatpush1.msra.mxu0 %v2146
    %2190 = vmatprep.subr.mxu0 %v2151
    %2191 = vmatpush1.msra.mxu0 %v2150
    %2192 = vmatprep.subr.mxu0 %v2155
    %2193 = vmatpush1.msra.mxu0 %v2154
    %2194 = vmatprep.subr.mxu0 %v2159
    %2195 = vmatpush1.msra.mxu0 %v2158
    %2196 = vmatprep.subr.mxu0 0.0
    %2197 = vmatpush1.msra.mxu0 0.0
    %2198 = vmatprep.subr.mxu0 0.0
    %2199 = vmatpush1.msra.mxu0 0.0
    %2200 = vmatprep.subr.mxu0 0.0
    %2201 = vmatpush1.msra.mxu0 0.0
    %2202 = vmatprep.subr.mxu0 0.0
    %2203 = vmatpush1.msra.mxu0 0.0
    %2204 = vmatprep.subr.mxu0 0.0
    %2205 = vmatpush1.msra.mxu0 0.0
    %2206 = vmatprep.subr.mxu0 0.0
    %2207 = vmatpush1.msra.mxu0 0.0
    %2208 = vmatprep.subr.mxu0 0.0
    %2209 = vmatpush1.msra.mxu0 0.0
    %2210 = vmatprep.subr.mxu0 0.0
    %2211 = vmatpush1.msra.mxu0 0.0
    %2212 = vmatprep.subr.mxu0 0.0
    %2213 = vmatpush1.msra.mxu0 0.0
    %2214 = vmatprep.subr.mxu0 0.0
    %2215 = vmatpush1.msra.mxu0 0.0
    %2216 = vmatprep.subr.mxu0 0.0
    %2217 = vmatpush1.msra.mxu0 0.0
    %2218 = vmatprep.subr.mxu0 0.0
    %2219 = vmatpush1.msra.mxu0 0.0
    %2220 = vmatprep.subr.mxu0 0.0
    %2221 = vmatpush1.msra.mxu0 0.0
    %2222 = vmatprep.subr.mxu0 0.0
    %2223 = vmatpush1.msra.mxu0 0.0
    %2224 = vmatprep.subr.mxu0 0.0
    %2225 = vmatpush1.msra.mxu0 0.0
    %2226 = vmatprep.subr.mxu0 0.0
    %2227 = vmatpush1.msra.mxu0 0.0
    %2228 = vmatprep.mubr.f32.mxu0 0.0
    %2229 = vmatmul.mubr.f32.gmra.mrb[0].mxu0 %v2162
    %v2230 = vpop.f32.mrb[0].mxu0
    %v2231 = vadd.f32 0.0, %v2230
    %v2232 = vpop.f32.mrb[0].mxu0
    %v2233 = vadd.f32 0.0, %v2232
    %2234 = vdwg.mxu0
    %2235 = vmatprep.subr.mxu0 %v2101
    %2236 = vmatpush1.msra.mxu0 %v2100
    %2237 = vmatprep.subr.mxu0 %v2105
    %2238 = vmatpush1.msra.mxu0 %v2104
    %2239 = vmatprep.subr.mxu0 %v2109
    %2240 = vmatpush1.msra.mxu0 %v2108
    %2241 = vmatprep.subr.mxu0 %v2113
    %2242 = vmatpush1.msra.mxu0 %v2112
    %2243 = vmatprep.subr.mxu0 %v2117
    %2244 = vmatpush1.msra.mxu0 %v2116
    %2245 = vmatprep.subr.mxu0 %v2121
    %2246 = vmatpush1.msra.mxu0 %v2120
    %2247 = vmatprep.subr.mxu0 %v2125
    %2248 = vmatpush1.msra.mxu0 %v2124
    %2249 = vmatprep.subr.mxu0 %v2129
    %2250 = vmatpush1.msra.mxu0 %v2128
    %2251 = vmatprep.subr.mxu0 %v2133
    %2252 = vmatpush1.msra.mxu0 %v2132
    %2253 = vmatprep.subr.mxu0 %v2137
    %2254 = vmatpush1.msra.mxu0 %v2136
    %2255 = vmatprep.subr.mxu0 %v2141
    %2256 = vmatpush1.msra.mxu0 %v2140
    %2257 = vmatprep.subr.mxu0 %v2145
    %2258 = vmatpush1.msra.mxu0 %v2144
    %2259 = vmatprep.subr.mxu0 %v2149
    %2260 = vmatpush1.msra.mxu0 %v2148
    %2261 = vmatprep.subr.mxu0 %v2153
    %2262 = vmatpush1.msra.mxu0 %v2152
    %2263 = vmatprep.subr.mxu0 %v2157
    %2264 = vmatpush1.msra.mxu0 %v2156
    %2265 = vmatprep.subr.mxu0 %v2161
    %2266 = vmatpush1.msra.mxu0 %v2160
    %2267 = vmatprep.subr.mxu0 0.0
    %2268 = vmatpush1.msra.mxu0 0.0
    %2269 = vmatprep.subr.mxu0 0.0
    %2270 = vmatpush1.msra.mxu0 0.0
    %2271 = vmatprep.subr.mxu0 0.0
    %2272 = vmatpush1.msra.mxu0 0.0
    %2273 = vmatprep.subr.mxu0 0.0
    %2274 = vmatpush1.msra.mxu0 0.0
    %2275 = vmatprep.subr.mxu0 0.0
    %2276 = vmatpush1.msra.mxu0 0.0
    %2277 = vmatprep.subr.mxu0 0.0
    %2278 = vmatpush1.msra.mxu0 0.0
    %2279 = vmatprep.subr.mxu0 0.0
    %2280 = vmatpush1.msra.mxu0 0.0
    %2281 = vmatprep.subr.mxu0 0.0
    %2282 = vmatpush1.msra.mxu0 0.0
    %2283 = vmatprep.subr.mxu0 0.0
    %2284 = vmatpush1.msra.mxu0 0.0
    %2285 = vmatprep.subr.mxu0 0.0
    %2286 = vmatpush1.msra.mxu0 0.0
    %2287 = vmatprep.subr.mxu0 0.0
    %2288 = vmatpush1.msra.mxu0 0.0
    %2289 = vmatprep.subr.mxu0 0.0
    %2290 = vmatpush1.msra.mxu0 0.0
    %2291 = vmatprep.subr.mxu0 0.0
    %2292 = vmatpush1.msra.mxu0 0.0
    %2293 = vmatprep.subr.mxu0 0.0
    %2294 = vmatpush1.msra.mxu0 0.0
    %2295 = vmatprep.subr.mxu0 0.0
    %2296 = vmatpush1.msra.mxu0 0.0
    %2297 = vmatprep.subr.mxu0 0.0
    %2298 = vmatpush1.msra.mxu0 0.0
    %2299 = vmatprep.mubr.f32.mxu0 0.0
    %2300 = vmatmul.mubr.f32.gmra.mrb[0].mxu0 %v2162
    %v2301 = vpop.f32.mrb[0].mxu0
    %v2302 = vadd.f32 0.0, %v2301
    %v2303 = vpop.f32.mrb[0].mxu0
    %v2304 = vadd.f32 0.0, %v2303
    %2305 = vdwg.mxu0
    %v2310 = vrot.slane %v2231, 2
    %v2311 = vrot.slane %v2233, 2
    %v2312 = vrot.slane %v2302, 2
    %v2313 = vrot.slane %v2304, 2
    %v2318 = vadd.f32 %v2094, %v2310
    %v2319 = vadd.f32 %v2095, %v2311
    %v2320 = vadd.f32 %v2096, %v2312
    %v2321 = vadd.f32 %v2097, %v2313
    %v2322 = vxor.u32 %v2318, 2147483648
    %v2323 = vxor.u32 %v2319, 2147483648
    %v2324 = vxor.u32 %v2320, 2147483648
    %v2325 = vmul.f32 %v2322, 1.442695
    %v2326 = vpow.pop %v2325
    %v2327 = vmul.f32 %v2323, 1.442695
    %v2328 = vpow.pop %v2327
    %v2329 = vmul.f32 %v2324, 1.442695
    %v2330 = vpow.pop %v2329
    %v2331 = vadd.f32 %v2326, 1.0
    %v2332 = vadd.f32 %v2328, 1.0
    %v2333 = vadd.f32 %v2330, 1.0
    %v2334 = vrcp.pop %v2331
    %v2335 = vmul.f32 1.0, %v2334
    %v2336 = vrcp.pop %v2332
    %v2337 = vmul.f32 1.0, %v2336
    %v2338 = vrcp.pop %v2333
    %v2339 = vmul.f32 1.0, %v2338
    %v2340 = vtanh.pop %v2321
    %v2342 = vrot.slane %v2085, 6
    %v2344 = vmul.f32 %v2337, %v2342
    %v2345 = vmul.f32 %v2335, %v2340
    %v2346 = vadd.f32 %v2344, %v2345
    %v2347 = vtanh.pop %v2346
    %v2348 = vmul.f32 %v2339, %v2347
    %2349 = vst.msk [vmem:[#allocation3 + $0x8] sm:$0xc0] %vm1318, %v2348
    %2351 = vrot.lane.b32.xlu0 %v2348, 64
    %v2352 = vpop.permute.xlu0 %2351
    %2354 = vst.msk [vmem:[#allocation4 - $0x6] sm:$0xc0] %vm1318, %v2352
    %v2355 = vld [vmem:[#allocation3] sm:$0xff]
    %v2356 = vld [vmem:[#allocation3 + $0x8] sm:$0xff]
    %v2357 = vld [vmem:[%s4] sm:$0xff]
    %v2358 = vld [vmem:[%s4 + $0x8] sm:$0xff]
    %v2359 = vld [vmem:[%s4 + $0x10] sm:$0xff]
    %v2360 = vld [vmem:[%s4 + $0x18] sm:$0xff]
    %v2361 = vld [vmem:[%s4 + $0x20] sm:$0xff]
    %v2362 = vld [vmem:[%s4 + $0x28] sm:$0xff]
    %v2363 = vld [vmem:[%s4 + $0x30] sm:$0xff]
    %v2364 = vld [vmem:[%s4 + $0x38] sm:$0xff]
    %v2365 = vld [vmem:[#allocation4] sm:$0xff]
    %v2366 = vld [vmem:[#allocation4 + $0x8] sm:$0xff]
    %v2367 = vld [vmem:[%s5] sm:$0xff]
    %v2368 = vld [vmem:[%s5 + $0x8] sm:$0xff]
    %v2369 = vld [vmem:[%s5 + $0x10] sm:$0xff]
    %v2370 = vld [vmem:[%s5 + $0x18] sm:$0xff]
    %v2371 = vld [vmem:[%s5 + $0x20] sm:$0xff]
    %v2372 = vld [vmem:[%s5 + $0x28] sm:$0xff]
    %v2373 = vld [vmem:[%s5 + $0x30] sm:$0xff]
    %v2374 = vld [vmem:[%s5 + $0x38] sm:$0xff]
    %v2376 = vsel %vm127, %v2365, 0
    %v2379 = vsel %vm127, %v2366, 0
    %2381 = vmatprep.subr.mxu0 0.0
    %2382 = vmatpush1.msra.mxu0 %v2367
    %2383 = vmatprep.subr.mxu0 0.0
    %2384 = vmatpush1.msra.mxu0 %v2368
    %2385 = vmatprep.subr.mxu0 0.0
    %2386 = vmatpush1.msra.mxu0 %v2369
    %2387 = vmatprep.subr.mxu0 0.0
    %2388 = vmatpush1.msra.mxu0 %v2370
    %2389 = vmatprep.subr.mxu0 0.0
    %2390 = vmatpush1.msra.mxu0 %v2371
    %2391 = vmatprep.subr.mxu0 0.0
    %2392 = vmatpush1.msra.mxu0 %v2372
    %2393 = vmatprep.subr.mxu0 0.0
    %2394 = vmatpush1.msra.mxu0 %v2373
    %2395 = vmatprep.subr.mxu0 0.0
    %2396 = vmatpush1.msra.mxu0 %v2374
    %2397 = vmatprep.subr.mxu0 0.0
    %2398 = vmatpush1.msra.mxu0 0.0
    %2399 = vmatprep.subr.mxu0 0.0
    %2400 = vmatpush1.msra.mxu0 0.0
    %2401 = vmatprep.subr.mxu0 0.0
    %2402 = vmatpush1.msra.mxu0 0.0
    %2403 = vmatprep.subr.mxu0 0.0
    %2404 = vmatpush1.msra.mxu0 0.0
    %2405 = vmatprep.subr.mxu0 0.0
    %2406 = vmatpush1.msra.mxu0 0.0
    %2407 = vmatprep.subr.mxu0 0.0
    %2408 = vmatpush1.msra.mxu0 0.0
    %2409 = vmatprep.subr.mxu0 0.0
    %2410 = vmatpush1.msra.mxu0 0.0
    %2411 = vmatprep.subr.mxu0 0.0
    %2412 = vmatpush1.msra.mxu0 0.0
    %2413 = vmatprep.subr.mxu0 0.0
    %2414 = vmatpush1.msra.mxu0 0.0
    %2415 = vmatprep.subr.mxu0 0.0
    %2416 = vmatpush1.msra.mxu0 0.0
    %2417 = vmatprep.subr.mxu0 0.0
    %2418 = vmatpush1.msra.mxu0 0.0
    %2419 = vmatprep.subr.mxu0 0.0
    %2420 = vmatpush1.msra.mxu0 0.0
    %2421 = vmatprep.subr.mxu0 0.0
    %2422 = vmatpush1.msra.mxu0 0.0
    %2423 = vmatprep.subr.mxu0 0.0
    %2424 = vmatpush1.msra.mxu0 0.0
    %2425 = vmatprep.subr.mxu0 0.0
    %2426 = vmatpush1.msra.mxu0 0.0
    %2427 = vmatprep.subr.mxu0 0.0
    %2428 = vmatpush1.msra.mxu0 0.0
    %2429 = vmatprep.subr.mxu0 0.0
    %2430 = vmatpush1.msra.mxu0 0.0
    %2431 = vmatprep.subr.mxu0 0.0
    %2432 = vmatpush1.msra.mxu0 0.0
    %2433 = vmatprep.subr.mxu0 0.0
    %2434 = vmatpush1.msra.mxu0 0.0
    %2435 = vmatprep.subr.mxu0 0.0
    %2436 = vmatpush1.msra.mxu0 0.0
    %2437 = vmatprep.subr.mxu0 0.0
    %2438 = vmatpush1.msra.mxu0 0.0
    %2439 = vmatprep.subr.mxu0 0.0
    %2440 = vmatpush1.msra.mxu0 0.0
    %2441 = vmatprep.subr.mxu0 0.0
    %2442 = vmatpush1.msra.mxu0 0.0
    %2443 = vmatprep.subr.mxu0 0.0
    %2444 = vmatpush1.msra.mxu0 0.0
    %2445 = vmatprep.mubr.f32.mxu0 0.0
    %2446 = vmatmul.mubr.f32.gmra.mrb[0].mxu0 %v2376
    %v2447 = vpop.f32.mrb[0].mxu0
    %v2448 = vadd.f32 0.0, %v2447
    %v2449 = vpop.f32.mrb[0].mxu0
    %2450 = vmatprep.mubr.f32.mxu0 0.0
    %2451 = vmatmul.mubr.f32.gmra.mrb[0].mxu0 %v2379
    %v2452 = vpop.f32.mrb[0].mxu0
    %v2453 = vadd.f32 0.0, %v2452
    %v2454 = vpop.f32.mrb[0].mxu0
    %2455 = vdwg.mxu0
    %v2457 = vsel %vm127, %v2355, 0
    %v2460 = vsel %vm127, %v2356, 0
    %2462 = vmatprep.subr.mxu0 0.0
    %2463 = vmatpush1.msra.mxu0 %v2357
    %2464 = vmatprep.subr.mxu0 0.0
    %2465 = vmatpush1.msra.mxu0 %v2358
    %2466 = vmatprep.subr.mxu0 0.0
    %2467 = vmatpush1.msra.mxu0 %v2359
    %2468 = vmatprep.subr.mxu0 0.0
    %2469 = vmatpush1.msra.mxu0 %v2360
    %2470 = vmatprep.subr.mxu0 0.0
    %2471 = vmatpush1.msra.mxu0 %v2361
    %2472 = vmatprep.subr.mxu0 0.0
    %2473 = vmatpush1.msra.mxu0 %v2362
    %2474 = vmatprep.subr.mxu0 0.0
    %2475 = vmatpush1.msra.mxu0 %v2363
    %2476 = vmatprep.subr.mxu0 0.0
    %2477 = vmatpush1.msra.mxu0 %v2364
    %2478 = vmatprep.subr.mxu0 0.0
    %2479 = vmatpush1.msra.mxu0 0.0
    %2480 = vmatprep.subr.mxu0 0.0
    %2481 = vmatpush1.msra.mxu0 0.0
    %2482 = vmatprep.subr.mxu0 0.0
    %2483 = vmatpush1.msra.mxu0 0.0
    %2484 = vmatprep.subr.mxu0 0.0
    %2485 = vmatpush1.msra.mxu0 0.0
    %2486 = vmatprep.subr.mxu0 0.0
    %2487 = vmatpush1.msra.mxu0 0.0
    %2488 = vmatprep.subr.mxu0 0.0
    %2489 = vmatpush1.msra.mxu0 0.0
    %2490 = vmatprep.subr.mxu0 0.0
    %2491 = vmatpush1.msra.mxu0 0.0
    %2492 = vmatprep.subr.mxu0 0.0
    %2493 = vmatpush1.msra.mxu0 0.0
    %2494 = vmatprep.subr.mxu0 0.0
    %2495 = vmatpush1.msra.mxu0 0.0
    %2496 = vmatprep.subr.mxu0 0.0
    %2497 = vmatpush1.msra.mxu0 0.0
    %2498 = vmatprep.subr.mxu0 0.0
    %2499 = vmatpush1.msra.mxu0 0.0
    %2500 = vmatprep.subr.mxu0 0.0
    %2501 = vmatpush1.msra.mxu0 0.0
    %2502 = vmatprep.subr.mxu0 0.0
    %2503 = vmatpush1.msra.mxu0 0.0
    %2504 = vmatprep.subr.mxu0 0.0
    %2505 = vmatpush1.msra.mxu0 0.0
    %2506 = vmatprep.subr.mxu0 0.0
    %2507 = vmatpush1.msra.mxu0 0.0
    %2508 = vmatprep.subr.mxu0 0.0
    %2509 = vmatpush1.msra.mxu0 0.0
    %2510 = vmatprep.subr.mxu0 0.0
    %2511 = vmatpush1.msra.mxu0 0.0
    %2512 = vmatprep.subr.mxu0 0.0
    %2513 = vmatpush1.msra.mxu0 0.0
    %2514 = vmatprep.subr.mxu0 0.0
    %2515 = vmatpush1.msra.mxu0 0.0
    %2516 = vmatprep.subr.mxu0 0.0
    %2517 = vmatpush1.msra.mxu0 0.0
    %2518 = vmatprep.subr.mxu0 0.0
    %2519 = vmatpush1.msra.mxu0 0.0
    %2520 = vmatprep.subr.mxu0 0.0
    %2521 = vmatpush1.msra.mxu0 0.0
    %2522 = vmatprep.subr.mxu0 0.0
    %2523 = vmatpush1.msra.mxu0 0.0
    %2524 = vmatprep.subr.mxu0 0.0
    %2525 = vmatpush1.msra.mxu0 0.0
    %2526 = vmatprep.mubr.f32.mxu0 0.0
    %2527 = vmatmul.mubr.f32.gmra.mrb[0].mxu0 %v2457
    %v2528 = vpop.f32.mrb[0].mxu0
    %v2529 = vadd.f32 %v2448, %v2528
    %v2530 = vpop.f32.mrb[0].mxu0
    %2531 = vmatprep.mubr.f32.mxu0 0.0
    %2532 = vmatmul.mubr.f32.gmra.mrb[0].mxu0 %v2460
    %v2533 = vpop.f32.mrb[0].mxu0
    %v2534 = vadd.f32 %v2453, %v2533
    %v2535 = vpop.f32.mrb[0].mxu0
    %2536 = vdwg.mxu0
    %v2537 = vrot.slane %v2348, 6
    %2539 = vmatprep.subr.mxu0 0.0
    %2540 = vmatpush1.xpose.msra.mxu0 %v2529
    %2541 = vmatprep.subr.mxu0 0.0
    %2542 = vmatpush1.xpose.msra.mxu0 %v2534
    %2543 = vmatprep.subr.mxu0 0.0
    %2544 = vmatpush1.xpose.msra.mxu0 0.0
    %2545 = vmatprep.subr.mxu0 0.0
    %2546 = vmatpush1.xpose.msra.mxu0 0.0
    %2547 = vmatprep.subr.mxu0 0.0
    %2548 = vmatpush1.xpose.msra.mxu0 0.0
    %2549 = vmatprep.subr.mxu0 0.0
    %2550 = vmatpush1.xpose.msra.mxu0 0.0
    %2551 = vmatprep.subr.mxu0 0.0
    %2552 = vmatpush1.xpose.msra.mxu0 0.0
    %2553 = vmatprep.subr.mxu0 0.0
    %2554 = vmatpush1.xpose.msra.mxu0 0.0
    %2555 = vmatprep.subr.mxu0 0.0
    %2556 = vmatpush1.xpose.msra.mxu0 0.0
    %2557 = vmatprep.subr.mxu0 0.0
    %2558 = vmatpush1.xpose.msra.mxu0 0.0
    %2559 = vmatprep.subr.mxu0 0.0
    %2560 = vmatpush1.xpose.msra.mxu0 0.0
    %2561 = vmatprep.subr.mxu0 0.0
    %2562 = vmatpush1.xpose.msra.mxu0 0.0
    %2563 = vmatprep.subr.mxu0 0.0
    %2564 = vmatpush1.xpose.msra.mxu0 0.0
    %2565 = vmatprep.subr.mxu0 0.0
    %2566 = vmatpush1.xpose.msra.mxu0 0.0
    %2567 = vmatprep.subr.mxu0 0.0
    %2568 = vmatpush1.xpose.msra.mxu0 0.0
    %2569 = vmatprep.subr.mxu0 0.0
    %2570 = vmatpush1.xpose.msra.mxu0 0.0
    %2571 = vmatprep.subr.mxu0 0.0
    %2572 = vmatpush1.xpose.msra.mxu0 0.0
    %2573 = vmatprep.subr.mxu0 0.0
    %2574 = vmatpush1.xpose.msra.mxu0 0.0
    %2575 = vmatprep.subr.mxu0 0.0
    %2576 = vmatpush1.xpose.msra.mxu0 0.0
    %2577 = vmatprep.subr.mxu0 0.0
    %2578 = vmatpush1.xpose.msra.mxu0 0.0
    %2579 = vmatprep.subr.mxu0 0.0
    %2580 = vmatpush1.xpose.msra.mxu0 0.0
    %2581 = vmatprep.subr.mxu0 0.0
    %2582 = vmatpush1.xpose.msra.mxu0 0.0
    %2583 = vmatprep.subr.mxu0 0.0
    %2584 = vmatpush1.xpose.msra.mxu0 0.0
    %2585 = vmatprep.subr.mxu0 0.0
    %2586 = vmatpush1.xpose.msra.mxu0 0.0
    %2587 = vmatprep.subr.mxu0 0.0
    %2588 = vmatpush1.xpose.msra.mxu0 0.0
    %2589 = vmatprep.subr.mxu0 0.0
    %2590 = vmatpush1.xpose.msra.mxu0 0.0
    %2591 = vmatprep.subr.mxu0 0.0
    %2592 = vmatpush1.xpose.msra.mxu0 0.0
    %2593 = vmatprep.subr.mxu0 0.0
    %2594 = vmatpush1.xpose.msra.mxu0 0.0
    %2595 = vmatprep.subr.mxu0 0.0
    %2596 = vmatpush1.xpose.msra.mxu0 0.0
    %2597 = vmatprep.subr.mxu0 0.0
    %2598 = vmatpush1.xpose.msra.mxu0 0.0
    %2599 = vmatprep.subr.mxu0 0.0
    %2600 = vmatpush1.xpose.msra.mxu0 0.0
    %2601 = vmatprep.subr.mxu0 0.0
    %2602 = vmatpush1.xpose.msra.mxu0 0.0
    %2603 = vmatprep.mubr.f32.mxu0 0.0
    %2604 = vmatmul.mubr.f32.gmra.mrb[0].mxu0 %v2537
    %v2605 = vpop.f32.mrb[0].mxu0
    %v2606 = vadd.f32 0.0, %v2605
    %v2607 = vpop.f32.mrb[0].mxu0
    %2608 = vdwg.mxu0
    %v2609 = vlaneseq
    %v2610 = vshrl.u32 %v2609, 7
    %v2611 = vlaneseq
    %v2612 = vand.u32 %v2611, 127
    %v2613 = vand.u32 %v2612, 1
    %vm2614 = vcmp.eq.s32.totalorder %v2613, %v2610
    %v2615 = vsel %vm2614, %v2606, -1e+30
    %vm2616 = vcmask 123904
    %v2617 = vsel %vm2616, %v2615, -inf
    %2618 = vmax.xlane.f32.xlu0 %v2617
    %v2619 = vpop.xlane.xlu0 %2618
    %v2620 = vsub.f32 %v2615, %v2619
    %v2621 = vmul.f32 %v2620, 1.442695
    %v2622 = vpow.pop %v2621
    %v2623 = vsel %vm2616, %v2622, 0.0
    %2624 = vadd.xlane.f32.xlu0 %v2623
    %v2625 = vpop.xlane.xlu0 %2624
    %v2626 = vrcp.pop %v2625
    %v2627 = vmul.f32 %v2622, %v2626
    %vm2628 = vcmask 130048
    %v2630 = vsel %vm2628, %v2627, 0
    %2632 = vmatprep.subr.mxu0 0.0
    %2633 = vmatpush1.msra.mxu0 %v2529
    %2634 = vmatprep.subr.mxu0 0.0
    %2635 = vmatpush1.msra.mxu0 %v2534
    %2636 = vmatprep.subr.mxu0 0.0
    %2637 = vmatpush1.msra.mxu0 0.0
    %2638 = vmatprep.subr.mxu0 0.0
    %2639 = vmatpush1.msra.mxu0 0.0
    %2640 = vmatprep.subr.mxu0 0.0
    %2641 = vmatpush1.msra.mxu0 0.0
    %2642 = vmatprep.subr.mxu0 0.0
    %2643 = vmatpush1.msra.mxu0 0.0
    %2644 = vmatprep.subr.mxu0 0.0
    %2645 = vmatpush1.msra.mxu0 0.0
    %2646 = vmatprep.subr.mxu0 0.0
    %2647 = vmatpush1.msra.mxu0 0.0
    %2648 = vmatprep.subr.mxu0 0.0
    %2649 = vmatpush1.msra.mxu0 0.0
    %2650 = vmatprep.subr.mxu0 0.0
    %2651 = vmatpush1.msra.mxu0 0.0
    %2652 = vmatprep.subr.mxu0 0.0
    %2653 = vmatpush1.msra.mxu0 0.0
    %2654 = vmatprep.subr.mxu0 0.0
    %2655 = vmatpush1.msra.mxu0 0.0
    %2656 = vmatprep.subr.mxu0 0.0
    %2657 = vmatpush1.msra.mxu0 0.0
    %2658 = vmatprep.subr.mxu0 0.0
    %2659 = vmatpush1.msra.mxu0 0.0
    %2660 = vmatprep.subr.mxu0 0.0
    %2661 = vmatpush1.msra.mxu0 0.0
    %2662 = vmatprep.subr.mxu0 0.0
    %2663 = vmatpush1.msra.mxu0 0.0
    %2664 = vmatprep.subr.mxu0 0.0
    %2665 = vmatpush1.msra.mxu0 0.0
    %2666 = vmatprep.subr.mxu0 0.0
    %2667 = vmatpush1.msra.mxu0 0.0
    %2668 = vmatprep.subr.mxu0 0.0
    %2669 = vmatpush1.msra.mxu0 0.0
    %2670 = vmatprep.subr.mxu0 0.0
    %2671 = vmatpush1.msra.mxu0 0.0
    %2672 = vmatprep.subr.mxu0 0.0
    %2673 = vmatpush1.msra.mxu0 0.0
    %2674 = vmatprep.subr.mxu0 0.0
    %2675 = vmatpush1.msra.mxu0 0.0
    %2676 = vmatprep.subr.mxu0 0.0
    %2677 = vmatpush1.msra.mxu0 0.0
    %2678 = vmatprep.subr.mxu0 0.0
    %2679 = vmatpush1.msra.mxu0 0.0
    %2680 = vmatprep.subr.mxu0 0.0
    %2681 = vmatpush1.msra.mxu0 0.0
    %2682 = vmatprep.subr.mxu0 0.0
    %2683 = vmatpush1.msra.mxu0 0.0
    %2684 = vmatprep.subr.mxu0 0.0
    %2685 = vmatpush1.msra.mxu0 0.0
    %2686 = vmatprep.subr.mxu0 0.0
    %2687 = vmatpush1.msra.mxu0 0.0
    %2688 = vmatprep.subr.mxu0 0.0
    %2689 = vmatpush1.msra.mxu0 0.0
    %2690 = vmatprep.subr.mxu0 0.0
    %2691 = vmatpush1.msra.mxu0 0.0
    %2692 = vmatprep.subr.mxu0 0.0
    %2693 = vmatpush1.msra.mxu0 0.0
    %2694 = vmatprep.subr.mxu0 0.0
    %2695 = vmatpush1.msra.mxu0 0.0
    %2696 = vmatprep.mubr.f32.mxu0 0.0
    %2697 = vmatmul.mubr.f32.gmra.mrb[0].mxu0 %v2630
    %v2698 = vpop.f32.mrb[0].mxu0
    %v2699 = vadd.f32 0.0, %v2698
    %v2700 = vpop.f32.mrb[0].mxu0
    %2701 = vdwg.mxu0
    %v2702 = vld [vmem:[%s6] sm:$0xff]
    %v2703 = vld [vmem:[%s6 + $0x8] sm:$0xff]
    %v2704 = vld [vmem:[%s6 + $0x10] sm:$0xff]
    %v2705 = vld [vmem:[%s6 + $0x18] sm:$0xff]
    %v2706 = vld [vmem:[%s6 + $0x20] sm:$0xff]
    %v2707 = vld [vmem:[%s6 + $0x28] sm:$0xff]
    %v2708 = vld [vmem:[%s6 + $0x30] sm:$0xff]
    %v2709 = vld [vmem:[%s6 + $0x38] sm:$0xff]
    %v2710 = vld [vmem:[%s6 + $0x40] sm:$0xff]
    %v2711 = vld [vmem:[%s6 + $0x48] sm:$0xff]
    %v2712 = vld [vmem:[%s6 + $0x50] sm:$0xff]
    %v2713 = vld [vmem:[%s6 + $0x58] sm:$0xff]
    %v2714 = vld [vmem:[%s6 + $0x60] sm:$0xff]
    %v2715 = vld [vmem:[%s6 + $0x68] sm:$0xff]
    %v2716 = vld [vmem:[%s6 + $0x70] sm:$0xff]
    %v2717 = vld [vmem:[%s6 + $0x78] sm:$0xff]
    %v2718 = vld [vmem:[%s7] sm:$0x1]
    %v2720 = vlaneseq
    %v2721 = vshrl.u32 %v2720, 7
    %v2722 = vsub.s32 0, %v2721
    %v2723 = vrot.slane %v2718, %v2722
    %2725 = vmatprep.subr.mxu0 0.0
    %2726 = vmatpush1.msra.mxu0 %v2702
    %2727 = vmatprep.subr.mxu0 0.0
    %2728 = vmatpush1.msra.mxu0 %v2703
    %2729 = vmatprep.subr.mxu0 0.0
    %2730 = vmatpush1.msra.mxu0 %v2704
    %2731 = vmatprep.subr.mxu0 0.0
    %2732 = vmatpush1.msra.mxu0 %v2705
    %2733 = vmatprep.subr.mxu0 0.0
    %2734 = vmatpush1.msra.mxu0 %v2706
    %2735 = vmatprep.subr.mxu0 0.0
    %2736 = vmatpush1.msra.mxu0 %v2707
    %2737 = vmatprep.subr.mxu0 0.0
    %2738 = vmatpush1.msra.mxu0 %v2708
    %2739 = vmatprep.subr.mxu0 0.0
    %2740 = vmatpush1.msra.mxu0 %v2709
    %2741 = vmatprep.subr.mxu0 0.0
    %2742 = vmatpush1.msra.mxu0 %v2710
    %2743 = vmatprep.subr.mxu0 0.0
    %2744 = vmatpush1.msra.mxu0 %v2711
    %2745 = vmatprep.subr.mxu0 0.0
    %2746 = vmatpush1.msra.mxu0 %v2712
    %2747 = vmatprep.subr.mxu0 0.0
    %2748 = vmatpush1.msra.mxu0 %v2713
    %2749 = vmatprep.subr.mxu0 0.0
    %2750 = vmatpush1.msra.mxu0 %v2714
    %2751 = vmatprep.subr.mxu0 0.0
    %2752 = vmatpush1.msra.mxu0 %v2715
    %2753 = vmatprep.subr.mxu0 0.0
    %2754 = vmatpush1.msra.mxu0 %v2716
    %2755 = vmatprep.subr.mxu0 0.0
    %2756 = vmatpush1.msra.mxu0 %v2717
    %2757 = vmatprep.subr.mxu0 0.0
    %2758 = vmatpush1.msra.mxu0 0.0
    %2759 = vmatprep.subr.mxu0 0.0
    %2760 = vmatpush1.msra.mxu0 0.0
    %2761 = vmatprep.subr.mxu0 0.0
    %2762 = vmatpush1.msra.mxu0 0.0
    %2763 = vmatprep.subr.mxu0 0.0
    %2764 = vmatpush1.msra.mxu0 0.0
    %2765 = vmatprep.subr.mxu0 0.0
    %2766 = vmatpush1.msra.mxu0 0.0
    %2767 = vmatprep.subr.mxu0 0.0
    %2768 = vmatpush1.msra.mxu0 0.0
    %2769 = vmatprep.subr.mxu0 0.0
    %2770 = vmatpush1.msra.mxu0 0.0
    %2771 = vmatprep.subr.mxu0 0.0
    %2772 = vmatpush1.msra.mxu0 0.0
    %2773 = vmatprep.subr.mxu0 0.0
    %2774 = vmatpush1.msra.mxu0 0.0
    %2775 = vmatprep.subr.mxu0 0.0
    %2776 = vmatpush1.msra.mxu0 0.0
    %2777 = vmatprep.subr.mxu0 0.0
    %2778 = vmatpush1.msra.mxu0 0.0
    %2779 = vmatprep.subr.mxu0 0.0
    %2780 = vmatpush1.msra.mxu0 0.0
    %2781 = vmatprep.subr.mxu0 0.0
    %2782 = vmatpush1.msra.mxu0 0.0
    %2783 = vmatprep.subr.mxu0 0.0
    %2784 = vmatpush1.msra.mxu0 0.0
    %2785 = vmatprep.subr.mxu0 0.0
    %2786 = vmatpush1.msra.mxu0 0.0
    %2787 = vmatprep.subr.mxu0 0.0
    %2788 = vmatpush1.msra.mxu0 0.0
    %2789 = vmatprep.mubr.f32.mxu0 0.0
    %2790 = vmatmul.mubr.f32.gmra.mrb[0].mxu0 %v2699
    %v2791 = vpop.f32.mrb[0].mxu0
    %v2792 = vadd.f32 %v2723, %v2791
    %v2793 = vpop.f32.mrb[0].mxu0
    %2794 = vdwg.mxu0
    %vm2795 = vcmask 25600
    %2796 = vst.msk [vmem:[#allocation11] sm:$0x3] %vm2795, %v2792
    // Predicated region
    $region46: #{tpu_custom_call.1} parent=1 // pred_check
      _
    $region47: #{tpu_custom_call.1} parent=1 // pred_check_branch
      %2798 = sbr.rel (0) target = $region49
    $region48: #{tpu_custom_call.1} parent=1 // pred_region
      %s2800 = ssub.s32 32, 32
      %2801 = vsyncadd [#allocation7], %s2800
      %s2803 = sshll.u32 [#allocation11], 4
      %s2804 = int_to_ptr.vmem [resolvable:$true] %s2803
      %2806 = dma.vmem_to_hbm [thread:$0]  %s2804, 32, %s8, [#allocation7]
    $region49: #{tpu_custom_call.1} parent=1 // pred_fallthru
      _
    // Predicated region
    $region50: #{tpu_custom_call.1} parent=1 // pred_check
      _
    $region51: #{tpu_custom_call.1} parent=1 // pred_check_branch
      %2808 = sbr.rel (0) target = $region53
    $region52: #{tpu_custom_call.1} parent=1 // pred_region
      %2809 = dma.done [#allocation7], 32
    $region53: #{tpu_custom_call.1} parent=1 // pred_fallthru
      _
    %2810 = vsyncpa [#allocation6], 1
    %2811 = vsyncpa [#allocation9], 1
    %2812 = vsyncpa [#allocation7], 1

</llo_original>
